<compile_context>
chip_gen: v7x
topology: tpu7x:2x2x1
jax: 0.10.0
libtpu: 0.0.40
codegen_flags: <defaults>
</compile_context>

<pallas_src>
import functools
import math

import numpy as np
import jax
import jax.numpy as jnp
from jax.experimental import pallas as pl
from jax.experimental.pallas import tpu as pltpu

NEG_INF = -1e30  # finite stand-in for -inf used by key_padding_mask masking

_WEIGHT_NAMES = (
    'sa_wq', 'sa_bq', 'sa_wk', 'sa_bk', 'sa_wv', 'sa_bv', 'sa_wo', 'sa_bo',
    'ca_wq', 'ca_bq', 'ca_wk', 'ca_bk', 'ca_wv', 'ca_bv', 'ca_wo', 'ca_bo',
    'l1_w', 'l1_b', 'l2_w', 'l2_b',
    'n1_g', 'n1_b', 'n2_g', 'n2_b', 'n3_g', 'n3_b',
)


def encoder_layer_kernel(q_ref, kv_ref, bias_ref,
                         sa_wq, sa_bq, sa_wk, sa_bk, sa_wv, sa_bv, sa_wo, sa_bo,
                         ca_wq, ca_bq, ca_wk, ca_bk, ca_wv, ca_bv, ca_wo, ca_bo,
                         l1_w, l1_b, l2_w, l2_b,
                         n1_g, n1_b, n2_g, n2_b, n3_g, n3_b,
                         out_ref, x_res, *, nhead):
    """One encoder layer per grid step; grid = (batch_blocks, n_layers)."""
    l = pl.program_id(1)
    n_layers = pl.num_programs(1)
    bblk, pq, d = q_ref.shape
    pk = kv_ref.shape[1]
    hd = d // nhead
    G = bblk * nhead            # head-batched batch dim for the attention einsums
    Tq = bblk * pq
    Tk = bblk * pk

    # Layer 0: initialize the f32 residual stream from the (bf16) query block.
    @pl.when(l == 0)
    def _():
        x_res[...] = q_ref[...].reshape(Tq, d).astype(jnp.float32)

    x = x_res[...]                              # (Tq, d) f32 residual stream
    kv16 = kv_ref[...].reshape(Tk, d)           # (Tk, d) bf16 (matmul operand only)

    # Additive key-padding bias for self-attention, broadcast over heads ONCE
    # per step (g = h*bblk + b, matching split_heads ordering).
    bias = bias_ref[...]                                              # (bblk, 1, pq)
    bias_g = jnp.broadcast_to(bias[None], (nhead, bblk, 1, pq)).reshape(G, 1, pq)

    def split_heads(z16, length):
        # (bblk*length, d) bf16 -> (G, length, hd), head-major leading batch dim.
        parts = [z16[:, h * hd:(h + 1) * hd].reshape(1, bblk, length, hd)
                 for h in range(nhead)]
        return jnp.concatenate(parts, axis=0).reshape(G, length, hd)

    def merge_heads(a16, length):
        # (G, length, hd) bf16 -> (bblk*length, d), head-major columns (torch order).
        a4 = a16.reshape(nhead, bblk, length, hd)
        return jnp.concatenate(
            [a4[h].reshape(bblk * length, hd) for h in range(nhead)], axis=-1)

    def layer_norm(y, g_ref, b_ref):
        # single-pass moments: E[y^2] - mu^2 (halves XLU reduction traffic)
        mu = jnp.mean(y, axis=-1, keepdims=True)
        ms = jnp.mean(y * y, axis=-1, keepdims=True)
        return (y - mu) * jax.lax.rsqrt(ms - mu * mu + 1e-5) * g_ref[...] + b_ref[...]

    def mha(xq16, xkv16, lq, lk, wq, bq, wk, bk, wv, bv, wo, bo, attn_bias):
        # wq has 1/sqrt(hd) folded in (and bq likewise); all weights (K, N) bf16.
        q = jnp.dot(xq16, wq[...], preferred_element_type=jnp.float32) + bq[...]
        k = jnp.dot(xkv16, wk[...], preferred_element_type=jnp.float32) + bk[...]
        v = jnp.dot(xkv16, wv[...], preferred_element_type=jnp.float32) + bv[...]
        qh = split_heads(q.astype(jnp.bfloat16), lq)       # (G, lq, hd)
        kh = split_heads(k.astype(jnp.bfloat16), lk)       # (G, lk, hd)
        vh = split_heads(v.astype(jnp.bfloat16), lk)       # (G, lk, hd)

        s = jnp.einsum('gqc,gkc->gqk', qh, kh,
                       preferred_element_type=jnp.float32)  # (G, lq, lk)
        if attn_bias is not None:
            s = s + attn_bias
        m = jnp.max(s, axis=-1, keepdims=True)
        e = jnp.exp(s - m)
        p = e * pl.reciprocal(jnp.sum(e, axis=-1, keepdims=True), approx=True)
        a = jnp.einsum('gqk,gkc->gqc', p.astype(jnp.bfloat16), vh,
                       preferred_element_type=jnp.float32)  # (G, lq, hd)
        a16 = merge_heads(a.astype(jnp.bfloat16), lq)       # (Tq, d)
        return jnp.dot(a16, wo[...], preferred_element_type=jnp.float32) + bo[...]

    # --- self-attention + residual + LN1 ---
    xb = x.astype(jnp.bfloat16)
    sa = mha(xb, xb, pq, pq,
             sa_wq, sa_bq, sa_wk, sa_bk, sa_wv, sa_bv, sa_wo, sa_bo, bias_g)
    x = layer_norm(x + sa, n1_g, n1_b)

    # --- cross-attention (keys/values = point features) + residual + LN2 ---
    ca = mha(x.astype(jnp.bfloat16), kv16, pq, pk,
             ca_wq, ca_bq, ca_wk, ca_bk, ca_wv, ca_bv, ca_wo, ca_bo, None)
    x = layer_norm(x + ca, n2_g, n2_b)

    # --- FFN (linear1 -> relu -> linear2) + residual + LN3 ---
    h1 = jnp.maximum(
        jnp.dot(x.astype(jnp.bfloat16), l1_w[...],
                preferred_element_type=jnp.float32) + l1_b[...], 0.0)
    ff = jnp.dot(h1.astype(jnp.bfloat16), l2_w[...],
                 preferred_element_type=jnp.float32) + l2_b[...]
    x = layer_norm(x + ff, n3_g, n3_b)

    # Carry the residual across the layer axis; emit only at the last layer.
    x_res[...] = x

    @pl.when(l == n_layers - 1)
    def _():
        out_ref[...] = x.reshape(bblk, pq, d).astype(out_ref.dtype)


# ------------------------- host-side param repacking -------------------------
def _prep_layer_params(p, nhead):
    """Repack one layer (torch layout) into kernel layout: separate Wq/Wk/Wv in
    (K, N) order, softmax scale folded into Wq/bq, bf16 matmul weights, f32
    biases / LN params."""
    d = p['sa_out_w'].shape[0]
    scale = 1.0 / math.sqrt(d // nhead)

    def split_in(in_w, in_b):      # in_w: (3d, d) rows [Wq; Wk; Wv], in_b: (1, 3d)
        wq = (in_w[0:d].T * scale).astype(jnp.bfloat16)
        bq = (in_b[:, 0:d] * scale).astype(jnp.float32)
        wk = in_w[d:2 * d].T.astype(jnp.bfloat16)
        bk = in_b[:, d:2 * d].astype(jnp.float32)
        wv = in_w[2 * d:3 * d].T.astype(jnp.bfloat16)
        bv = in_b[:, 2 * d:3 * d].astype(jnp.float32)
        return wq, bq, wk, bk, wv, bv

    out = {}
    for prefix, (in_w, in_b, o_w, o_b) in (
            ('sa', (p['sa_in_w'], p['sa_in_b'], p['sa_out_w'], p['sa_out_b'])),
            ('ca', (p['ca_in_w'], p['ca_in_b'], p['ca_out_w'], p['ca_out_b']))):
        wq, bq, wk, bk, wv, bv = split_in(in_w, in_b)
        out[f'{prefix}_wq'], out[f'{prefix}_bq'] = wq, bq
        out[f'{prefix}_wk'], out[f'{prefix}_bk'] = wk, bk
        out[f'{prefix}_wv'], out[f'{prefix}_bv'] = wv, bv
        out[f'{prefix}_wo'] = o_w.T.astype(jnp.bfloat16)
        out[f'{prefix}_bo'] = o_b.astype(jnp.float32)
    out['l1_w'] = p['l1_w'].T.astype(jnp.bfloat16)
    out['l1_b'] = p['l1_b'].astype(jnp.float32)
    out['l2_w'] = p['l2_w'].T.astype(jnp.bfloat16)
    out['l2_b'] = p['l2_b'].astype(jnp.float32)
    for n in ('n1_g', 'n1_b', 'n2_g', 'n2_b', 'n3_g', 'n3_b'):
        out[n] = p[n].astype(jnp.float32)
    return out


def _stack_layer_params(layer_params, nhead):
    prepped = [_prep_layer_params(p, nhead) for p in layer_params]
    return {n: jnp.stack([pp[n] for pp in prepped], axis=0) for n in _WEIGHT_NAMES}


def _vmem_limit_bytes(weights, bblk, pq, pk, d, dim_ff, nhead):
    """Rough per-step footprint: 2x one layer's weights (double-buffered), io
    blocks, score tensor and f32 activation temporaries.  Clamped to a sane range."""
    per_layer_w = sum(int(np.prod(w.shape[1:])) * w.dtype.itemsize for w in weights)
    io = bblk * pq * d * (2 + 4 + 4) + bblk * pk * d * 2 + bblk * pq * 4
    G = bblk * nhead
    act = 4 * G * pq * max(pq, pk) * 4 + 8 * bblk * max(pq, pk) * max(d, dim_ff) * 4
    est = 2 * per_layer_w + 2 * io + act
    return int(min(max(2 * est, 32 * 2**20), 100 * 2**20))


def transformer_encoder(obj_x, point_x, obj_pos, point_pos, mask, layer_params, nhead,
                        *, batch_block=1):
    """TransformerEncoder.forward.  obj_pos / point_pos unused (posembed modules are None)."""
    del obj_pos, point_pos
    B, Pq, d = obj_x.shape
    Pk = point_x.shape[1]
    n_layers = len(layer_params)
    dim_ff = layer_params[0]['l1_w'].shape[0]
    assert B % batch_block == 0, "batch must be divisible by batch_block"
    assert d % nhead == 0, "d_model must be divisible by nhead"

    # key_padding_mask (True == padded) -> additive bias, computed once on the host.
    bias = jnp.where(mask, NEG_INF, 0.0).astype(jnp.float32)[:, None, :]   # (B, 1, Pq)
    obj16 = obj_x.astype(jnp.bfloat16)       # bf16 at the boundary halves input DMA
    point16 = point_x.astype(jnp.bfloat16)

    stacked = _stack_layer_params(layer_params, nhead)
    weights = [stacked[n] for n in _WEIGHT_NAMES]

    # Per-layer weight blocks, pipelined along the layer grid axis: index (b,l)->(l,..)
    # so layer l+1's weights prefetch while layer l computes; only ~2 layers resident.
    w_specs = [pl.BlockSpec((None,) + tuple(w.shape[1:]), lambda b, l: (l, 0, 0))
               for w in weights]

    grid_spec = pltpu.PrefetchScalarGridSpec(
        num_scalar_prefetch=0,
        grid=(B // batch_block, n_layers),
        in_specs=[pl.BlockSpec((batch_block, Pq, d), lambda b, l: (b, 0, 0)),
                  pl.BlockSpec((batch_block, Pk, d), lambda b, l: (b, 0, 0)),
                  pl.BlockSpec((batch_block, 1, Pq), lambda b, l: (b, 0, 0))] + w_specs,
        out_specs=pl.BlockSpec((batch_block, Pq, d), lambda b, l: (b, 0, 0)),
        # f32 residual stream, persistent across the layer axis.
        scratch_shapes=[pltpu.VMEM((batch_block * Pq, d), jnp.float32)],
    )

    kernel = functools.partial(encoder_layer_kernel, nhead=nhead)
    return pl.pallas_call(
        kernel,
        out_shape=jax.ShapeDtypeStruct((B, Pq, d), jnp.float32),
        grid_spec=grid_spec,
        compiler_params=pltpu.CompilerParams(
            # batch blocks independent -> "parallel" (v7x megacore); layers sequential.
            dimension_semantics=("parallel", "arbitrary"),
            vmem_limit_bytes=_vmem_limit_bytes(weights, batch_block, Pq, Pk, d,
                                               dim_ff, nhead)),
    )(obj16, point16, bias, *weights)


def init_layer_params(key, d_model, dim_ff):
    ks = jax.random.split(key, 10)
    s = 0.05
    nrm = lambda k, shape: jax.random.normal(k, shape, jnp.float32) * s
    return dict(
        sa_in_w=nrm(ks[0], (3 * d_model, d_model)), sa_in_b=nrm(ks[1], (1, 3 * d_model)),
        sa_out_w=nrm(ks[2], (d_model, d_model)),    sa_out_b=nrm(ks[3], (1, d_model)),
        ca_in_w=nrm(ks[4], (3 * d_model, d_model)), ca_in_b=nrm(ks[5], (1, 3 * d_model)),
        ca_out_w=nrm(ks[6], (d_model, d_model)),    ca_out_b=nrm(ks[7], (1, d_model)),
        l1_w=nrm(ks[8], (dim_ff, d_model)),         l1_b=jnp.zeros((1, dim_ff), jnp.float32),
        l2_w=nrm(ks[9], (d_model, dim_ff)),         l2_b=jnp.zeros((1, d_model), jnp.float32),
        n1_g=jnp.ones((1, d_model), jnp.float32),   n1_b=jnp.zeros((1, d_model), jnp.float32),
        n2_g=jnp.ones((1, d_model), jnp.float32),   n2_b=jnp.zeros((1, d_model), jnp.float32),
        n3_g=jnp.ones((1, d_model), jnp.float32),   n3_b=jnp.zeros((1, d_model), jnp.float32),
    )


# ------------------ pure-JAX reference (torch-faithful, f32) ------------------
def _ref_mha(q_in, kv_in, in_w, in_b, out_w, out_b, key_mask, nhead):
    d = q_in.shape[-1]
    hd = d // nhead
    q = q_in @ in_w[0:d].T + in_b[0, 0:d]
    k = kv_in @ in_w[d:2 * d].T + in_b[0, d:2 * d]
    v = kv_in @ in_w[2 * d:3 * d].T + in_b[0, 2 * d:3 * d]
    Lq, Lk = q.shape[0], k.shape[0]
    q = q.reshape(Lq, nhead, hd).transpose(1, 0, 2) * (hd ** -0.5)
    k = k.reshape(Lk, nhead, hd).transpose(1, 0, 2)
    v = v.reshape(Lk, nhead, hd).transpose(1, 0, 2)
    s = jnp.einsum('hqd,hkd->hqk', q, k)
    if key_mask is not None:
        s = jnp.where(key_mask[None, None, :], NEG_INF, s)
    p = jax.nn.softmax(s, axis=-1)
    a = jnp.einsum('hqk,hkd->hqd', p, v).transpose(1, 0, 2).reshape(Lq, d)
    return a @ out_w.T + out_b[0]


def _ref_layer(x, kv, mask_b, p, nhead):
    def ln(y, g, b):
        mu = y.mean(-1, keepdims=True)
        var = ((y - mu) ** 2).mean(-1, keepdims=True)
        return (y - mu) / jnp.sqrt(var + 1e-5) * g[0] + b[0]
    sa = _ref_mha(x, x, p['sa_in_w'], p['sa_in_b'], p['sa_out_w'], p['sa_out_b'], mask_b, nhead)
    x = ln(x + sa, p['n1_g'], p['n1_b'])
    ca = _ref_mha(x, kv, p['ca_in_w'], p['ca_in_b'], p['ca_out_w'], p['ca_out_b'], None, nhead)
    x = ln(x + ca, p['n2_g'], p['n2_b'])
    h1 = jnp.maximum(x @ p['l1_w'].T + p['l1_b'][0], 0.0)
    ff = h1 @ p['l2_w'].T + p['l2_b'][0]
    return ln(x + ff, p['n3_g'], p['n3_b'])


def ref_forward(obj_x, point_x, mask, layer_params, nhead):
    q = obj_x
    for p in layer_params:
        q = jax.vmap(lambda x, kv, m, p=p: _ref_layer(x, kv, m, p, nhead))(q, point_x, mask)
    return q
# -------------------------------------------------------------------------------


if __name__ == "__main__":
    B, Pq, Pk = 2, 8, 16
    d_model, nhead, dim_ff, N = 32, 4, 64, 2

    root = jax.random.PRNGKey(0)
    k1, k2, k3, k4, kp = jax.random.split(root, 5)
    obj_x = jax.random.normal(k1, (B, Pq, d_model), jnp.float32)       # query features
    point_x = jax.random.normal(k2, (B, Pk, d_model), jnp.float32)     # key/value features
    obj_pos = jax.random.normal(k3, (B, Pq, 3), jnp.float32)           # unused (posembed None)
    point_pos = jax.random.normal(k4, (B, Pk, 3), jnp.float32)         # unused (posembed None)
    # key_padding_mask over the Pq self-attention keys (True == padded)
    mask = jnp.zeros((B, Pq), dtype=bool).at[1, Pq - 2:].set(True)

    layer_params = [init_layer_params(jax.random.fold_in(kp, i), d_model, dim_ff)
                    for i in range(N)]

    out = transformer_encoder(obj_x, point_x, obj_pos, point_pos, mask, layer_params, nhead,
                              batch_block=B)
    out = jax.block_until_ready(out)

    ref = ref_forward(obj_x, point_x, mask, layer_params, nhead)
    # bf16 inputs + bf16 matmuls + approx reciprocal vs an f32 reference.
    np.testing.assert_allclose(np.asarray(out), np.asarray(ref), rtol=4e-2, atol=4e-2)

    print("KERNEL_OK")
</pallas_src>

<mosaic_0001>
module attributes {stable_mosaic.version = 11 : i64} {
  func.func @encoder_layer_kernel(%arg0: i32, %arg1: i32, %arg2: memref<2x8x32xbf16, #tpu.memory_space<vmem>>, %arg3: memref<2x16x32xbf16, #tpu.memory_space<vmem>>, %arg4: memref<2x1x8xf32, #tpu.memory_space<vmem>>, %arg5: memref<1x32x32xbf16, #tpu.memory_space<vmem>>, %arg6: memref<1x1x32xf32, #tpu.memory_space<vmem>>, %arg7: memref<1x32x32xbf16, #tpu.memory_space<vmem>>, %arg8: memref<1x1x32xf32, #tpu.memory_space<vmem>>, %arg9: memref<1x32x32xbf16, #tpu.memory_space<vmem>>, %arg10: memref<1x1x32xf32, #tpu.memory_space<vmem>>, %arg11: memref<1x32x32xbf16, #tpu.memory_space<vmem>>, %arg12: memref<1x1x32xf32, #tpu.memory_space<vmem>>, %arg13: memref<1x32x32xbf16, #tpu.memory_space<vmem>>, %arg14: memref<1x1x32xf32, #tpu.memory_space<vmem>>, %arg15: memref<1x32x32xbf16, #tpu.memory_space<vmem>>, %arg16: memref<1x1x32xf32, #tpu.memory_space<vmem>>, %arg17: memref<1x32x32xbf16, #tpu.memory_space<vmem>>, %arg18: memref<1x1x32xf32, #tpu.memory_space<vmem>>, %arg19: memref<1x32x32xbf16, #tpu.memory_space<vmem>>, %arg20: memref<1x1x32xf32, #tpu.memory_space<vmem>>, %arg21: memref<1x32x64xbf16, #tpu.memory_space<vmem>>, %arg22: memref<1x1x64xf32, #tpu.memory_space<vmem>>, %arg23: memref<1x64x32xbf16, #tpu.memory_space<vmem>>, %arg24: memref<1x1x32xf32, #tpu.memory_space<vmem>>, %arg25: memref<1x1x32xf32, #tpu.memory_space<vmem>>, %arg26: memref<1x1x32xf32, #tpu.memory_space<vmem>>, %arg27: memref<1x1x32xf32, #tpu.memory_space<vmem>>, %arg28: memref<1x1x32xf32, #tpu.memory_space<vmem>>, %arg29: memref<1x1x32xf32, #tpu.memory_space<vmem>>, %arg30: memref<1x1x32xf32, #tpu.memory_space<vmem>>, %arg31: memref<2x8x32xf32, #tpu.memory_space<vmem>>, %arg32: memref<16x32xf32, #tpu.memory_space<vmem>>) attributes {dimension_semantics = [#tpu.dimension_semantics<parallel>, #tpu.dimension_semantics<arbitrary>], iteration_bounds = array<i64: 1, 2>, scalar_prefetch = 0 : i64, scratch_operands = 1 : i64, tpu.core_type = #tpu.core_type<tc>, window_params = [{transform_indices = @transform_0, window_bounds = array<i64: 2, 8, 32>}, {transform_indices = @transform_1, window_bounds = array<i64: 2, 16, 32>}, {transform_indices = @transform_2, window_bounds = array<i64: 2, 1, 8>}, {transform_indices = @transform_3, window_bounds = array<i64: 1, 32, 32>}, {transform_indices = @transform_4, window_bounds = array<i64: 1, 1, 32>}, {transform_indices = @transform_5, window_bounds = array<i64: 1, 32, 32>}, {transform_indices = @transform_6, window_bounds = array<i64: 1, 1, 32>}, {transform_indices = @transform_7, window_bounds = array<i64: 1, 32, 32>}, {transform_indices = @transform_8, window_bounds = array<i64: 1, 1, 32>}, {transform_indices = @transform_9, window_bounds = array<i64: 1, 32, 32>}, {transform_indices = @transform_10, window_bounds = array<i64: 1, 1, 32>}, {transform_indices = @transform_11, window_bounds = array<i64: 1, 32, 32>}, {transform_indices = @transform_12, window_bounds = array<i64: 1, 1, 32>}, {transform_indices = @transform_13, window_bounds = array<i64: 1, 32, 32>}, {transform_indices = @transform_14, window_bounds = array<i64: 1, 1, 32>}, {transform_indices = @transform_15, window_bounds = array<i64: 1, 32, 32>}, {transform_indices = @transform_16, window_bounds = array<i64: 1, 1, 32>}, {transform_indices = @transform_17, window_bounds = array<i64: 1, 32, 32>}, {transform_indices = @transform_18, window_bounds = array<i64: 1, 1, 32>}, {transform_indices = @transform_19, window_bounds = array<i64: 1, 32, 64>}, {transform_indices = @transform_20, window_bounds = array<i64: 1, 1, 64>}, {transform_indices = @transform_21, window_bounds = array<i64: 1, 64, 32>}, {transform_indices = @transform_22, window_bounds = array<i64: 1, 1, 32>}, {transform_indices = @transform_23, window_bounds = array<i64: 1, 1, 32>}, {transform_indices = @transform_24, window_bounds = array<i64: 1, 1, 32>}, {transform_indices = @transform_25, window_bounds = array<i64: 1, 1, 32>}, {transform_indices = @transform_26, window_bounds = array<i64: 1, 1, 32>}, {transform_indices = @transform_27, window_bounds = array<i64: 1, 1, 32>}, {transform_indices = @transform_28, window_bounds = array<i64: 1, 1, 32>}, {transform_indices = @transform_29, window_bounds = array<i64: 2, 8, 32>}]} {
    %c0_i32 = arith.constant 0 : i32
    %0 = arith.cmpi eq, %arg1, %c0_i32 : i32
    %1 = arith.extui %0 : i1 to i32
    %c0_i32_0 = arith.constant 0 : i32
    %2 = arith.cmpi ne, %1, %c0_i32_0 : i32
    scf.if %2 {
      %c0_122 = arith.constant 0 : index
      %c0_123 = arith.constant 0 : index
      %c0_124 = arith.constant 0 : index
      %296 = vector.load %arg2[%c0_122, %c0_123, %c0_124] : memref<2x8x32xbf16, #tpu.memory_space<vmem>>, vector<2x8x32xbf16>
      %297 = vector.shape_cast %296 : vector<2x8x32xbf16> to vector<16x32xbf16>
      %298 = arith.extf %297 : vector<16x32xbf16> to vector<16x32xf32>
      %c0_125 = arith.constant 0 : index
      %c0_126 = arith.constant 0 : index
      %299 = vector.load %arg32[%c0_125, %c0_126] : memref<16x32xf32, #tpu.memory_space<vmem>>, vector<16x32xf32>
      tpu.vector_store %arg32[%c0_125, %c0_126], %298 {strides = array<i32>} : memref<16x32xf32, #tpu.memory_space<vmem>>, vector<16x32xf32>,
    } else {
    }
    %c0 = arith.constant 0 : index
    %c0_1 = arith.constant 0 : index
    %3 = vector.load %arg32[%c0, %c0_1] : memref<16x32xf32, #tpu.memory_space<vmem>>, vector<16x32xf32>
    %c0_2 = arith.constant 0 : index
    %c0_3 = arith.constant 0 : index
    %c0_4 = arith.constant 0 : index
    %4 = vector.load %arg3[%c0_2, %c0_3, %c0_4] : memref<2x16x32xbf16, #tpu.memory_space<vmem>>, vector<2x16x32xbf16>
    %5 = vector.shape_cast %4 : vector<2x16x32xbf16> to vector<32x32xbf16>
    %c0_5 = arith.constant 0 : index
    %c0_6 = arith.constant 0 : index
    %c0_7 = arith.constant 0 : index
    %6 = vector.load %arg4[%c0_5, %c0_6, %c0_7] : memref<2x1x8xf32, #tpu.memory_space<vmem>>, vector<2x1x8xf32>
    %7 = vector.shape_cast %6 : vector<2x1x8xf32> to vector<1x2x1x8xf32>
    %8 = vector.shape_cast %7 : vector<1x2x1x8xf32> to vector<1x2x1x8xf32>
    %9 = vector.broadcast %8 : vector<1x2x1x8xf32> to vector<4x2x1x8xf32>
    %10 = vector.shape_cast %9 : vector<4x2x1x8xf32> to vector<8x1x8xf32>
    %11 = arith.truncf %3 : vector<16x32xf32> to vector<16x32xbf16>
    %c0_8 = arith.constant 0 : index
    %c0_9 = arith.constant 0 : index
    %c0_10 = arith.constant 0 : index
    %12 = vector.load %arg5[%c0_8, %c0_9, %c0_10] : memref<1x32x32xbf16, #tpu.memory_space<vmem>>, vector<1x32x32xbf16>
    %13 = vector.shape_cast %12 : vector<1x32x32xbf16> to vector<32x32xbf16>
    %cst = arith.constant dense<0.000000e+00> : vector<16x32xf32>
    %14 = tpu.matmul %11, %13, %cst {dimension_numbers = #tpu.dot_dimension_numbers<[1], [0], [0], [1], [0, 0, 1, 1], [], []>} : vector<16x32xbf16>, vector<32x32xbf16>, vector<16x32xf32> -> vector<16x32xf32>
    %c0_11 = arith.constant 0 : index
    %c0_12 = arith.constant 0 : index
    %c0_13 = arith.constant 0 : index
    %15 = vector.load %arg6[%c0_11, %c0_12, %c0_13] : memref<1x1x32xf32, #tpu.memory_space<vmem>>, vector<1x1x32xf32>
    %16 = vector.shape_cast %15 : vector<1x1x32xf32> to vector<1x32xf32>
    %17 = vector.broadcast %16 : vector<1x32xf32> to vector<16x32xf32>
    %18 = arith.addf %14, %17 : vector<16x32xf32>
    %c0_14 = arith.constant 0 : index
    %c0_15 = arith.constant 0 : index
    %c0_16 = arith.constant 0 : index
    %19 = vector.load %arg7[%c0_14, %c0_15, %c0_16] : memref<1x32x32xbf16, #tpu.memory_space<vmem>>, vector<1x32x32xbf16>
    %20 = vector.shape_cast %19 : vector<1x32x32xbf16> to vector<32x32xbf16>
    %cst_17 = arith.constant dense<0.000000e+00> : vector<16x32xf32>
    %21 = tpu.matmul %11, %20, %cst_17 {dimension_numbers = #tpu.dot_dimension_numbers<[1], [0], [0], [1], [0, 0, 1, 1], [], []>} : vector<16x32xbf16>, vector<32x32xbf16>, vector<16x32xf32> -> vector<16x32xf32>
    %c0_18 = arith.constant 0 : index
    %c0_19 = arith.constant 0 : index
    %c0_20 = arith.constant 0 : index
    %22 = vector.load %arg8[%c0_18, %c0_19, %c0_20] : memref<1x1x32xf32, #tpu.memory_space<vmem>>, vector<1x1x32xf32>
    %23 = vector.shape_cast %22 : vector<1x1x32xf32> to vector<1x32xf32>
    %24 = vector.broadcast %23 : vector<1x32xf32> to vector<16x32xf32>
    %25 = arith.addf %21, %24 : vector<16x32xf32>
    %c0_21 = arith.constant 0 : index
    %c0_22 = arith.constant 0 : index
    %c0_23 = arith.constant 0 : index
    %26 = vector.load %arg9[%c0_21, %c0_22, %c0_23] : memref<1x32x32xbf16, #tpu.memory_space<vmem>>, vector<1x32x32xbf16>
    %27 = vector.shape_cast %26 : vector<1x32x32xbf16> to vector<32x32xbf16>
    %cst_24 = arith.constant dense<0.000000e+00> : vector<16x32xf32>
    %28 = tpu.matmul %11, %27, %cst_24 {dimension_numbers = #tpu.dot_dimension_numbers<[1], [0], [0], [1], [0, 0, 1, 1], [], []>} : vector<16x32xbf16>, vector<32x32xbf16>, vector<16x32xf32> -> vector<16x32xf32>
    %c0_25 = arith.constant 0 : index
    %c0_26 = arith.constant 0 : index
    %c0_27 = arith.constant 0 : index
    %29 = vector.load %arg10[%c0_25, %c0_26, %c0_27] : memref<1x1x32xf32, #tpu.memory_space<vmem>>, vector<1x1x32xf32>
    %30 = vector.shape_cast %29 : vector<1x1x32xf32> to vector<1x32xf32>
    %31 = vector.broadcast %30 : vector<1x32xf32> to vector<16x32xf32>
    %32 = arith.addf %28, %31 : vector<16x32xf32>
    %33 = arith.truncf %18 : vector<16x32xf32> to vector<16x32xbf16>
    %34 = vector.extract_strided_slice %33 {offsets = [0, 0], sizes = [16, 8], strides = [1, 1]} : vector<16x32xbf16> to vector<16x8xbf16>
    %35 = vector.shape_cast %34 : vector<16x8xbf16> to vector<1x2x8x8xbf16>
    %36 = vector.extract_strided_slice %33 {offsets = [0, 8], sizes = [16, 8], strides = [1, 1]} : vector<16x32xbf16> to vector<16x8xbf16>
    %37 = vector.shape_cast %36 : vector<16x8xbf16> to vector<1x2x8x8xbf16>
    %38 = vector.extract_strided_slice %33 {offsets = [0, 16], sizes = [16, 8], strides = [1, 1]} : vector<16x32xbf16> to vector<16x8xbf16>
    %39 = vector.shape_cast %38 : vector<16x8xbf16> to vector<1x2x8x8xbf16>
    %40 = vector.extract_strided_slice %33 {offsets = [0, 24], sizes = [16, 8], strides = [1, 1]} : vector<16x32xbf16> to vector<16x8xbf16>
    %41 = vector.shape_cast %40 : vector<16x8xbf16> to vector<1x2x8x8xbf16>
    %42 = tpu.concatenate %35, %37, %39, %41 in 0 : vector<1x2x8x8xbf16>, vector<1x2x8x8xbf16>, vector<1x2x8x8xbf16>, vector<1x2x8x8xbf16> -> vector<4x2x8x8xbf16>
    %43 = vector.shape_cast %42 : vector<4x2x8x8xbf16> to vector<8x8x8xbf16>
    %44 = arith.truncf %25 : vector<16x32xf32> to vector<16x32xbf16>
    %45 = vector.extract_strided_slice %44 {offsets = [0, 0], sizes = [16, 8], strides = [1, 1]} : vector<16x32xbf16> to vector<16x8xbf16>
    %46 = vector.shape_cast %45 : vector<16x8xbf16> to vector<1x2x8x8xbf16>
    %47 = vector.extract_strided_slice %44 {offsets = [0, 8], sizes = [16, 8], strides = [1, 1]} : vector<16x32xbf16> to vector<16x8xbf16>
    %48 = vector.shape_cast %47 : vector<16x8xbf16> to vector<1x2x8x8xbf16>
    %49 = vector.extract_strided_slice %44 {offsets = [0, 16], sizes = [16, 8], strides = [1, 1]} : vector<16x32xbf16> to vector<16x8xbf16>
    %50 = vector.shape_cast %49 : vector<16x8xbf16> to vector<1x2x8x8xbf16>
    %51 = vector.extract_strided_slice %44 {offsets = [0, 24], sizes = [16, 8], strides = [1, 1]} : vector<16x32xbf16> to vector<16x8xbf16>
    %52 = vector.shape_cast %51 : vector<16x8xbf16> to vector<1x2x8x8xbf16>
    %53 = tpu.concatenate %46, %48, %50, %52 in 0 : vector<1x2x8x8xbf16>, vector<1x2x8x8xbf16>, vector<1x2x8x8xbf16>, vector<1x2x8x8xbf16> -> vector<4x2x8x8xbf16>
    %54 = vector.shape_cast %53 : vector<4x2x8x8xbf16> to vector<8x8x8xbf16>
    %55 = arith.truncf %32 : vector<16x32xf32> to vector<16x32xbf16>
    %56 = vector.extract_strided_slice %55 {offsets = [0, 0], sizes = [16, 8], strides = [1, 1]} : vector<16x32xbf16> to vector<16x8xbf16>
    %57 = vector.shape_cast %56 : vector<16x8xbf16> to vector<1x2x8x8xbf16>
    %58 = vector.extract_strided_slice %55 {offsets = [0, 8], sizes = [16, 8], strides = [1, 1]} : vector<16x32xbf16> to vector<16x8xbf16>
    %59 = vector.shape_cast %58 : vector<16x8xbf16> to vector<1x2x8x8xbf16>
    %60 = vector.extract_strided_slice %55 {offsets = [0, 16], sizes = [16, 8], strides = [1, 1]} : vector<16x32xbf16> to vector<16x8xbf16>
    %61 = vector.shape_cast %60 : vector<16x8xbf16> to vector<1x2x8x8xbf16>
    %62 = vector.extract_strided_slice %55 {offsets = [0, 24], sizes = [16, 8], strides = [1, 1]} : vector<16x32xbf16> to vector<16x8xbf16>
    %63 = vector.shape_cast %62 : vector<16x8xbf16> to vector<1x2x8x8xbf16>
    %64 = tpu.concatenate %57, %59, %61, %63 in 0 : vector<1x2x8x8xbf16>, vector<1x2x8x8xbf16>, vector<1x2x8x8xbf16>, vector<1x2x8x8xbf16> -> vector<4x2x8x8xbf16>
    %65 = vector.shape_cast %64 : vector<4x2x8x8xbf16> to vector<8x8x8xbf16>
    "tpu.trace_start"() <{level = 10 : i32, message = "gqc,gkc->gqk"}> : () -> ()
    %cst_28 = arith.constant dense<0.000000e+00> : vector<8x8x8xf32>
    %66 = tpu.matmul %43, %54, %cst_28 {dimension_numbers = #tpu.dot_dimension_numbers<[2], [2], [1], [1], [0, 0, 0, 1, 1, 1], [0], [0]>} : vector<8x8x8xbf16>, vector<8x8x8xbf16>, vector<8x8x8xf32> -> vector<8x8x8xf32>
    "tpu.trace_stop"() : () -> ()
    %67 = vector.broadcast %10 : vector<8x1x8xf32> to vector<8x8x8xf32>
    %68 = arith.addf %66, %67 : vector<8x8x8xf32>
    %cst_29 = arith.constant dense<0xFF800000> : vector<8x8xf32>
    %69 = vector.multi_reduction <maximumf>, %68, %cst_29 [2] : vector<8x8x8xf32> to vector<8x8xf32>
    %70 = vector.shape_cast %69 : vector<8x8xf32> to vector<8x8x1xf32>
    %71 = vector.broadcast %70 : vector<8x8x1xf32> to vector<8x8x8xf32>
    %72 = arith.subf %68, %71 : vector<8x8x8xf32>
    %73 = math.exp %72 : vector<8x8x8xf32>
    %cst_30 = arith.constant dense<0.000000e+00> : vector<8x8xf32>
    %74 = vector.multi_reduction <add>, %73, %cst_30 [2] : vector<8x8x8xf32> to vector<8x8xf32>
    %75 = vector.shape_cast %74 : vector<8x8xf32> to vector<8x8x1xf32>
    %76 = tpu.reciprocal %75 {approx = true} : vector<8x8x1xf32> -> vector<8x8x1xf32>
    %77 = vector.broadcast %76 : vector<8x8x1xf32> to vector<8x8x8xf32>
    %78 = arith.mulf %73, %77 : vector<8x8x8xf32>
    %79 = arith.truncf %78 : vector<8x8x8xf32> to vector<8x8x8xbf16>
    "tpu.trace_start"() <{level = 10 : i32, message = "gqk,gkc->gqc"}> : () -> ()
    %cst_31 = arith.constant dense<0.000000e+00> : vector<8x8x8xf32>
    %80 = tpu.matmul %79, %65, %cst_31 {dimension_numbers = #tpu.dot_dimension_numbers<[2], [1], [1], [2], [0, 0, 0, 1, 1, 2], [0], [0]>} : vector<8x8x8xbf16>, vector<8x8x8xbf16>, vector<8x8x8xf32> -> vector<8x8x8xf32>
    "tpu.trace_stop"() : () -> ()
    %81 = arith.truncf %80 : vector<8x8x8xf32> to vector<8x8x8xbf16>
    %82 = vector.shape_cast %81 : vector<8x8x8xbf16> to vector<4x2x8x8xbf16>
    %83 = vector.extract_strided_slice %82 {offsets = [0, 0, 0, 0], sizes = [1, 2, 8, 8], strides = [1, 1, 1, 1]} : vector<4x2x8x8xbf16> to vector<1x2x8x8xbf16>
    %84 = vector.shape_cast %83 : vector<1x2x8x8xbf16> to vector<2x8x8xbf16>
    %85 = vector.shape_cast %84 : vector<2x8x8xbf16> to vector<16x8xbf16>
    %86 = vector.extract_strided_slice %82 {offsets = [1, 0, 0, 0], sizes = [1, 2, 8, 8], strides = [1, 1, 1, 1]} : vector<4x2x8x8xbf16> to vector<1x2x8x8xbf16>
    %87 = vector.shape_cast %86 : vector<1x2x8x8xbf16> to vector<2x8x8xbf16>
    %88 = vector.shape_cast %87 : vector<2x8x8xbf16> to vector<16x8xbf16>
    %89 = vector.extract_strided_slice %82 {offsets = [2, 0, 0, 0], sizes = [1, 2, 8, 8], strides = [1, 1, 1, 1]} : vector<4x2x8x8xbf16> to vector<1x2x8x8xbf16>
    %90 = vector.shape_cast %89 : vector<1x2x8x8xbf16> to vector<2x8x8xbf16>
    %91 = vector.shape_cast %90 : vector<2x8x8xbf16> to vector<16x8xbf16>
    %92 = vector.extract_strided_slice %82 {offsets = [3, 0, 0, 0], sizes = [1, 2, 8, 8], strides = [1, 1, 1, 1]} : vector<4x2x8x8xbf16> to vector<1x2x8x8xbf16>
    %93 = vector.shape_cast %92 : vector<1x2x8x8xbf16> to vector<2x8x8xbf16>
    %94 = vector.shape_cast %93 : vector<2x8x8xbf16> to vector<16x8xbf16>
    %95 = tpu.concatenate %85, %88, %91, %94 in 1 : vector<16x8xbf16>, vector<16x8xbf16>, vector<16x8xbf16>, vector<16x8xbf16> -> vector<16x32xbf16>
    %c0_32 = arith.constant 0 : index
    %c0_33 = arith.constant 0 : index
    %c0_34 = arith.constant 0 : index
    %96 = vector.load %arg11[%c0_32, %c0_33, %c0_34] : memref<1x32x32xbf16, #tpu.memory_space<vmem>>, vector<1x32x32xbf16>
    %97 = vector.shape_cast %96 : vector<1x32x32xbf16> to vector<32x32xbf16>
    %cst_35 = arith.constant dense<0.000000e+00> : vector<16x32xf32>
    %98 = tpu.matmul %95, %97, %cst_35 {dimension_numbers = #tpu.dot_dimension_numbers<[1], [0], [0], [1], [0, 0, 1, 1], [], []>} : vector<16x32xbf16>, vector<32x32xbf16>, vector<16x32xf32> -> vector<16x32xf32>
    %c0_36 = arith.constant 0 : index
    %c0_37 = arith.constant 0 : index
    %c0_38 = arith.constant 0 : index
    %99 = vector.load %arg12[%c0_36, %c0_37, %c0_38] : memref<1x1x32xf32, #tpu.memory_space<vmem>>, vector<1x1x32xf32>
    %100 = vector.shape_cast %99 : vector<1x1x32xf32> to vector<1x32xf32>
    %101 = vector.broadcast %100 : vector<1x32xf32> to vector<16x32xf32>
    %102 = arith.addf %98, %101 : vector<16x32xf32>
    %103 = arith.addf %3, %102 : vector<16x32xf32>
    %cst_39 = arith.constant dense<0.000000e+00> : vector<16xf32>
    %104 = vector.multi_reduction <add>, %103, %cst_39 [1] : vector<16x32xf32> to vector<16xf32>
    %105 = vector.shape_cast %104 : vector<16xf32> to vector<16x1xf32>
    %cst_40 = arith.constant 3.200000e+01 : f32
    %106 = vector.broadcast %cst_40 : f32 to vector<16x1xf32>
    %107 = arith.divf %105, %106 : vector<16x1xf32>
    %108 = arith.mulf %103, %103 : vector<16x32xf32>
    %cst_41 = arith.constant dense<0.000000e+00> : vector<16xf32>
    %109 = vector.multi_reduction <add>, %108, %cst_41 [1] : vector<16x32xf32> to vector<16xf32>
    %110 = vector.shape_cast %109 : vector<16xf32> to vector<16x1xf32>
    %cst_42 = arith.constant 3.200000e+01 : f32
    %111 = vector.broadcast %cst_42 : f32 to vector<16x1xf32>
    %112 = arith.divf %110, %111 : vector<16x1xf32>
    %113 = vector.broadcast %107 : vector<16x1xf32> to vector<16x32xf32>
    %114 = arith.subf %103, %113 : vector<16x32xf32>
    %115 = arith.mulf %107, %107 : vector<16x1xf32>
    %116 = arith.subf %112, %115 : vector<16x1xf32>
    %cst_43 = arith.constant 9.99999974E-6 : f32
    %117 = vector.broadcast %cst_43 : f32 to vector<16x1xf32>
    %118 = arith.addf %116, %117 : vector<16x1xf32>
    %119 = math.rsqrt %118 : vector<16x1xf32>
    %120 = vector.broadcast %119 : vector<16x1xf32> to vector<16x32xf32>
    %121 = arith.mulf %114, %120 : vector<16x32xf32>
    %c0_44 = arith.constant 0 : index
    %c0_45 = arith.constant 0 : index
    %c0_46 = arith.constant 0 : index
    %122 = vector.load %arg25[%c0_44, %c0_45, %c0_46] : memref<1x1x32xf32, #tpu.memory_space<vmem>>, vector<1x1x32xf32>
    %123 = vector.shape_cast %122 : vector<1x1x32xf32> to vector<1x32xf32>
    %124 = vector.broadcast %123 : vector<1x32xf32> to vector<16x32xf32>
    %125 = arith.mulf %121, %124 : vector<16x32xf32>
    %c0_47 = arith.constant 0 : index
    %c0_48 = arith.constant 0 : index
    %c0_49 = arith.constant 0 : index
    %126 = vector.load %arg26[%c0_47, %c0_48, %c0_49] : memref<1x1x32xf32, #tpu.memory_space<vmem>>, vector<1x1x32xf32>
    %127 = vector.shape_cast %126 : vector<1x1x32xf32> to vector<1x32xf32>
    %128 = vector.broadcast %127 : vector<1x32xf32> to vector<16x32xf32>
    %129 = arith.addf %125, %128 : vector<16x32xf32>
    %130 = arith.truncf %129 : vector<16x32xf32> to vector<16x32xbf16>
    %c0_50 = arith.constant 0 : index
    %c0_51 = arith.constant 0 : index
    %c0_52 = arith.constant 0 : index
    %131 = vector.load %arg13[%c0_50, %c0_51, %c0_52] : memref<1x32x32xbf16, #tpu.memory_space<vmem>>, vector<1x32x32xbf16>
    %132 = vector.shape_cast %131 : vector<1x32x32xbf16> to vector<32x32xbf16>
    %cst_53 = arith.constant dense<0.000000e+00> : vector<16x32xf32>
    %133 = tpu.matmul %130, %132, %cst_53 {dimension_numbers = #tpu.dot_dimension_numbers<[1], [0], [0], [1], [0, 0, 1, 1], [], []>} : vector<16x32xbf16>, vector<32x32xbf16>, vector<16x32xf32> -> vector<16x32xf32>
    %c0_54 = arith.constant 0 : index
    %c0_55 = arith.constant 0 : index
    %c0_56 = arith.constant 0 : index
    %134 = vector.load %arg14[%c0_54, %c0_55, %c0_56] : memref<1x1x32xf32, #tpu.memory_space<vmem>>, vector<1x1x32xf32>
    %135 = vector.shape_cast %134 : vector<1x1x32xf32> to vector<1x32xf32>
    %136 = vector.broadcast %135 : vector<1x32xf32> to vector<16x32xf32>
    %137 = arith.addf %133, %136 : vector<16x32xf32>
    %c0_57 = arith.constant 0 : index
    %c0_58 = arith.constant 0 : index
    %c0_59 = arith.constant 0 : index
    %138 = vector.load %arg15[%c0_57, %c0_58, %c0_59] : memref<1x32x32xbf16, #tpu.memory_space<vmem>>, vector<1x32x32xbf16>
    %139 = vector.shape_cast %138 : vector<1x32x32xbf16> to vector<32x32xbf16>
    %cst_60 = arith.constant dense<0.000000e+00> : vector<32x32xf32>
    %140 = tpu.matmul %5, %139, %cst_60 {dimension_numbers = #tpu.dot_dimension_numbers<[1], [0], [0], [1], [0, 0, 1, 1], [], []>} : vector<32x32xbf16>, vector<32x32xbf16>, vector<32x32xf32> -> vector<32x32xf32>
    %c0_61 = arith.constant 0 : index
    %c0_62 = arith.constant 0 : index
    %c0_63 = arith.constant 0 : index
    %141 = vector.load %arg16[%c0_61, %c0_62, %c0_63] : memref<1x1x32xf32, #tpu.memory_space<vmem>>, vector<1x1x32xf32>
    %142 = vector.shape_cast %141 : vector<1x1x32xf32> to vector<1x32xf32>
    %143 = vector.broadcast %142 : vector<1x32xf32> to vector<32x32xf32>
    %144 = arith.addf %140, %143 : vector<32x32xf32>
    %c0_64 = arith.constant 0 : index
    %c0_65 = arith.constant 0 : index
    %c0_66 = arith.constant 0 : index
    %145 = vector.load %arg17[%c0_64, %c0_65, %c0_66] : memref<1x32x32xbf16, #tpu.memory_space<vmem>>, vector<1x32x32xbf16>
    %146 = vector.shape_cast %145 : vector<1x32x32xbf16> to vector<32x32xbf16>
    %cst_67 = arith.constant dense<0.000000e+00> : vector<32x32xf32>
    %147 = tpu.matmul %5, %146, %cst_67 {dimension_numbers = #tpu.dot_dimension_numbers<[1], [0], [0], [1], [0, 0, 1, 1], [], []>} : vector<32x32xbf16>, vector<32x32xbf16>, vector<32x32xf32> -> vector<32x32xf32>
    %c0_68 = arith.constant 0 : index
    %c0_69 = arith.constant 0 : index
    %c0_70 = arith.constant 0 : index
    %148 = vector.load %arg18[%c0_68, %c0_69, %c0_70] : memref<1x1x32xf32, #tpu.memory_space<vmem>>, vector<1x1x32xf32>
    %149 = vector.shape_cast %148 : vector<1x1x32xf32> to vector<1x32xf32>
    %150 = vector.broadcast %149 : vector<1x32xf32> to vector<32x32xf32>
    %151 = arith.addf %147, %150 : vector<32x32xf32>
    %152 = arith.truncf %137 : vector<16x32xf32> to vector<16x32xbf16>
    %153 = vector.extract_strided_slice %152 {offsets = [0, 0], sizes = [16, 8], strides = [1, 1]} : vector<16x32xbf16> to vector<16x8xbf16>
    %154 = vector.shape_cast %153 : vector<16x8xbf16> to vector<1x2x8x8xbf16>
    %155 = vector.extract_strided_slice %152 {offsets = [0, 8], sizes = [16, 8], strides = [1, 1]} : vector<16x32xbf16> to vector<16x8xbf16>
    %156 = vector.shape_cast %155 : vector<16x8xbf16> to vector<1x2x8x8xbf16>
    %157 = vector.extract_strided_slice %152 {offsets = [0, 16], sizes = [16, 8], strides = [1, 1]} : vector<16x32xbf16> to vector<16x8xbf16>
    %158 = vector.shape_cast %157 : vector<16x8xbf16> to vector<1x2x8x8xbf16>
    %159 = vector.extract_strided_slice %152 {offsets = [0, 24], sizes = [16, 8], strides = [1, 1]} : vector<16x32xbf16> to vector<16x8xbf16>
    %160 = vector.shape_cast %159 : vector<16x8xbf16> to vector<1x2x8x8xbf16>
    %161 = tpu.concatenate %154, %156, %158, %160 in 0 : vector<1x2x8x8xbf16>, vector<1x2x8x8xbf16>, vector<1x2x8x8xbf16>, vector<1x2x8x8xbf16> -> vector<4x2x8x8xbf16>
    %162 = vector.shape_cast %161 : vector<4x2x8x8xbf16> to vector<8x8x8xbf16>
    %163 = arith.truncf %144 : vector<32x32xf32> to vector<32x32xbf16>
    %164 = vector.extract_strided_slice %163 {offsets = [0, 0], sizes = [32, 8], strides = [1, 1]} : vector<32x32xbf16> to vector<32x8xbf16>
    %165 = vector.shape_cast %164 : vector<32x8xbf16> to vector<1x2x16x8xbf16>
    %166 = vector.extract_strided_slice %163 {offsets = [0, 8], sizes = [32, 8], strides = [1, 1]} : vector<32x32xbf16> to vector<32x8xbf16>
    %167 = vector.shape_cast %166 : vector<32x8xbf16> to vector<1x2x16x8xbf16>
    %168 = vector.extract_strided_slice %163 {offsets = [0, 16], sizes = [32, 8], strides = [1, 1]} : vector<32x32xbf16> to vector<32x8xbf16>
    %169 = vector.shape_cast %168 : vector<32x8xbf16> to vector<1x2x16x8xbf16>
    %170 = vector.extract_strided_slice %163 {offsets = [0, 24], sizes = [32, 8], strides = [1, 1]} : vector<32x32xbf16> to vector<32x8xbf16>
    %171 = vector.shape_cast %170 : vector<32x8xbf16> to vector<1x2x16x8xbf16>
    %172 = tpu.concatenate %165, %167, %169, %171 in 0 : vector<1x2x16x8xbf16>, vector<1x2x16x8xbf16>, vector<1x2x16x8xbf16>, vector<1x2x16x8xbf16> -> vector<4x2x16x8xbf16>
    %173 = vector.shape_cast %172 : vector<4x2x16x8xbf16> to vector<8x16x8xbf16>
    %174 = arith.truncf %151 : vector<32x32xf32> to vector<32x32xbf16>
    %175 = vector.extract_strided_slice %174 {offsets = [0, 0], sizes = [32, 8], strides = [1, 1]} : vector<32x32xbf16> to vector<32x8xbf16>
    %176 = vector.shape_cast %175 : vector<32x8xbf16> to vector<1x2x16x8xbf16>
    %177 = vector.extract_strided_slice %174 {offsets = [0, 8], sizes = [32, 8], strides = [1, 1]} : vector<32x32xbf16> to vector<32x8xbf16>
    %178 = vector.shape_cast %177 : vector<32x8xbf16> to vector<1x2x16x8xbf16>
    %179 = vector.extract_strided_slice %174 {offsets = [0, 16], sizes = [32, 8], strides = [1, 1]} : vector<32x32xbf16> to vector<32x8xbf16>
    %180 = vector.shape_cast %179 : vector<32x8xbf16> to vector<1x2x16x8xbf16>
    %181 = vector.extract_strided_slice %174 {offsets = [0, 24], sizes = [32, 8], strides = [1, 1]} : vector<32x32xbf16> to vector<32x8xbf16>
    %182 = vector.shape_cast %181 : vector<32x8xbf16> to vector<1x2x16x8xbf16>
    %183 = tpu.concatenate %176, %178, %180, %182 in 0 : vector<1x2x16x8xbf16>, vector<1x2x16x8xbf16>, vector<1x2x16x8xbf16>, vector<1x2x16x8xbf16> -> vector<4x2x16x8xbf16>
    %184 = vector.shape_cast %183 : vector<4x2x16x8xbf16> to vector<8x16x8xbf16>
    "tpu.trace_start"() <{level = 10 : i32, message = "gqc,gkc->gqk"}> : () -> ()
    %cst_71 = arith.constant dense<0.000000e+00> : vector<8x8x16xf32>
    %185 = tpu.matmul %162, %173, %cst_71 {dimension_numbers = #tpu.dot_dimension_numbers<[2], [2], [1], [1], [0, 0, 0, 1, 1, 1], [0], [0]>} : vector<8x8x8xbf16>, vector<8x16x8xbf16>, vector<8x8x16xf32> -> vector<8x8x16xf32>
    "tpu.trace_stop"() : () -> ()
    %cst_72 = arith.constant dense<0xFF800000> : vector<8x8xf32>
    %186 = vector.multi_reduction <maximumf>, %185, %cst_72 [2] : vector<8x8x16xf32> to vector<8x8xf32>
    %187 = vector.shape_cast %186 : vector<8x8xf32> to vector<8x8x1xf32>
    %188 = vector.broadcast %187 : vector<8x8x1xf32> to vector<8x8x16xf32>
    %189 = arith.subf %185, %188 : vector<8x8x16xf32>
    %190 = math.exp %189 : vector<8x8x16xf32>
    %cst_73 = arith.constant dense<0.000000e+00> : vector<8x8xf32>
    %191 = vector.multi_reduction <add>, %190, %cst_73 [2] : vector<8x8x16xf32> to vector<8x8xf32>
    %192 = vector.shape_cast %191 : vector<8x8xf32> to vector<8x8x1xf32>
    %193 = tpu.reciprocal %192 {approx = true} : vector<8x8x1xf32> -> vector<8x8x1xf32>
    %194 = vector.broadcast %193 : vector<8x8x1xf32> to vector<8x8x16xf32>
    %195 = arith.mulf %190, %194 : vector<8x8x16xf32>
    %196 = arith.truncf %195 : vector<8x8x16xf32> to vector<8x8x16xbf16>
    "tpu.trace_start"() <{level = 10 : i32, message = "gqk,gkc->gqc"}> : () -> ()
    %cst_74 = arith.constant dense<0.000000e+00> : vector<8x8x8xf32>
    %197 = tpu.matmul %196, %184, %cst_74 {dimension_numbers = #tpu.dot_dimension_numbers<[2], [1], [1], [2], [0, 0, 0, 1, 1, 2], [0], [0]>} : vector<8x8x16xbf16>, vector<8x16x8xbf16>, vector<8x8x8xf32> -> vector<8x8x8xf32>
    "tpu.trace_stop"() : () -> ()
    %198 = arith.truncf %197 : vector<8x8x8xf32> to vector<8x8x8xbf16>
    %199 = vector.shape_cast %198 : vector<8x8x8xbf16> to vector<4x2x8x8xbf16>
    %200 = vector.extract_strided_slice %199 {offsets = [0, 0, 0, 0], sizes = [1, 2, 8, 8], strides = [1, 1, 1, 1]} : vector<4x2x8x8xbf16> to vector<1x2x8x8xbf16>
    %201 = vector.shape_cast %200 : vector<1x2x8x8xbf16> to vector<2x8x8xbf16>
    %202 = vector.shape_cast %201 : vector<2x8x8xbf16> to vector<16x8xbf16>
    %203 = vector.extract_strided_slice %199 {offsets = [1, 0, 0, 0], sizes = [1, 2, 8, 8], strides = [1, 1, 1, 1]} : vector<4x2x8x8xbf16> to vector<1x2x8x8xbf16>
    %204 = vector.shape_cast %203 : vector<1x2x8x8xbf16> to vector<2x8x8xbf16>
    %205 = vector.shape_cast %204 : vector<2x8x8xbf16> to vector<16x8xbf16>
    %206 = vector.extract_strided_slice %199 {offsets = [2, 0, 0, 0], sizes = [1, 2, 8, 8], strides = [1, 1, 1, 1]} : vector<4x2x8x8xbf16> to vector<1x2x8x8xbf16>
    %207 = vector.shape_cast %206 : vector<1x2x8x8xbf16> to vector<2x8x8xbf16>
    %208 = vector.shape_cast %207 : vector<2x8x8xbf16> to vector<16x8xbf16>
    %209 = vector.extract_strided_slice %199 {offsets = [3, 0, 0, 0], sizes = [1, 2, 8, 8], strides = [1, 1, 1, 1]} : vector<4x2x8x8xbf16> to vector<1x2x8x8xbf16>
    %210 = vector.shape_cast %209 : vector<1x2x8x8xbf16> to vector<2x8x8xbf16>
    %211 = vector.shape_cast %210 : vector<2x8x8xbf16> to vector<16x8xbf16>
    %212 = tpu.concatenate %202, %205, %208, %211 in 1 : vector<16x8xbf16>, vector<16x8xbf16>, vector<16x8xbf16>, vector<16x8xbf16> -> vector<16x32xbf16>
    %c0_75 = arith.constant 0 : index
    %c0_76 = arith.constant 0 : index
    %c0_77 = arith.constant 0 : index
    %213 = vector.load %arg19[%c0_75, %c0_76, %c0_77] : memref<1x32x32xbf16, #tpu.memory_space<vmem>>, vector<1x32x32xbf16>
    %214 = vector.shape_cast %213 : vector<1x32x32xbf16> to vector<32x32xbf16>
    %cst_78 = arith.constant dense<0.000000e+00> : vector<16x32xf32>
    %215 = tpu.matmul %212, %214, %cst_78 {dimension_numbers = #tpu.dot_dimension_numbers<[1], [0], [0], [1], [0, 0, 1, 1], [], []>} : vector<16x32xbf16>, vector<32x32xbf16>, vector<16x32xf32> -> vector<16x32xf32>
    %c0_79 = arith.constant 0 : index
    %c0_80 = arith.constant 0 : index
    %c0_81 = arith.constant 0 : index
    %216 = vector.load %arg20[%c0_79, %c0_80, %c0_81] : memref<1x1x32xf32, #tpu.memory_space<vmem>>, vector<1x1x32xf32>
    %217 = vector.shape_cast %216 : vector<1x1x32xf32> to vector<1x32xf32>
    %218 = vector.broadcast %217 : vector<1x32xf32> to vector<16x32xf32>
    %219 = arith.addf %215, %218 : vector<16x32xf32>
    %220 = arith.addf %129, %219 : vector<16x32xf32>
    %cst_82 = arith.constant dense<0.000000e+00> : vector<16xf32>
    %221 = vector.multi_reduction <add>, %220, %cst_82 [1] : vector<16x32xf32> to vector<16xf32>
    %222 = vector.shape_cast %221 : vector<16xf32> to vector<16x1xf32>
    %cst_83 = arith.constant 3.200000e+01 : f32
    %223 = vector.broadcast %cst_83 : f32 to vector<16x1xf32>
    %224 = arith.divf %222, %223 : vector<16x1xf32>
    %225 = arith.mulf %220, %220 : vector<16x32xf32>
    %cst_84 = arith.constant dense<0.000000e+00> : vector<16xf32>
    %226 = vector.multi_reduction <add>, %225, %cst_84 [1] : vector<16x32xf32> to vector<16xf32>
    %227 = vector.shape_cast %226 : vector<16xf32> to vector<16x1xf32>
    %cst_85 = arith.constant 3.200000e+01 : f32
    %228 = vector.broadcast %cst_85 : f32 to vector<16x1xf32>
    %229 = arith.divf %227, %228 : vector<16x1xf32>
    %230 = vector.broadcast %224 : vector<16x1xf32> to vector<16x32xf32>
    %231 = arith.subf %220, %230 : vector<16x32xf32>
    %232 = arith.mulf %224, %224 : vector<16x1xf32>
    %233 = arith.subf %229, %232 : vector<16x1xf32>
    %cst_86 = arith.constant 9.99999974E-6 : f32
    %234 = vector.broadcast %cst_86 : f32 to vector<16x1xf32>
    %235 = arith.addf %233, %234 : vector<16x1xf32>
    %236 = math.rsqrt %235 : vector<16x1xf32>
    %237 = vector.broadcast %236 : vector<16x1xf32> to vector<16x32xf32>
    %238 = arith.mulf %231, %237 : vector<16x32xf32>
    %c0_87 = arith.constant 0 : index
    %c0_88 = arith.constant 0 : index
    %c0_89 = arith.constant 0 : index
    %239 = vector.load %arg27[%c0_87, %c0_88, %c0_89] : memref<1x1x32xf32, #tpu.memory_space<vmem>>, vector<1x1x32xf32>
    %240 = vector.shape_cast %239 : vector<1x1x32xf32> to vector<1x32xf32>
    %241 = vector.broadcast %240 : vector<1x32xf32> to vector<16x32xf32>
    %242 = arith.mulf %238, %241 : vector<16x32xf32>
    %c0_90 = arith.constant 0 : index
    %c0_91 = arith.constant 0 : index
    %c0_92 = arith.constant 0 : index
    %243 = vector.load %arg28[%c0_90, %c0_91, %c0_92] : memref<1x1x32xf32, #tpu.memory_space<vmem>>, vector<1x1x32xf32>
    %244 = vector.shape_cast %243 : vector<1x1x32xf32> to vector<1x32xf32>
    %245 = vector.broadcast %244 : vector<1x32xf32> to vector<16x32xf32>
    %246 = arith.addf %242, %245 : vector<16x32xf32>
    %247 = arith.truncf %246 : vector<16x32xf32> to vector<16x32xbf16>
    %c0_93 = arith.constant 0 : index
    %c0_94 = arith.constant 0 : index
    %c0_95 = arith.constant 0 : index
    %248 = vector.load %arg21[%c0_93, %c0_94, %c0_95] : memref<1x32x64xbf16, #tpu.memory_space<vmem>>, vector<1x32x64xbf16>
    %249 = vector.shape_cast %248 : vector<1x32x64xbf16> to vector<32x64xbf16>
    %cst_96 = arith.constant dense<0.000000e+00> : vector<16x64xf32>
    %250 = tpu.matmul %247, %249, %cst_96 {dimension_numbers = #tpu.dot_dimension_numbers<[1], [0], [0], [1], [0, 0, 1, 1], [], []>} : vector<16x32xbf16>, vector<32x64xbf16>, vector<16x64xf32> -> vector<16x64xf32>
    %c0_97 = arith.constant 0 : index
    %c0_98 = arith.constant 0 : index
    %c0_99 = arith.constant 0 : index
    %251 = vector.load %arg22[%c0_97, %c0_98, %c0_99] : memref<1x1x64xf32, #tpu.memory_space<vmem>>, vector<1x1x64xf32>
    %252 = vector.shape_cast %251 : vector<1x1x64xf32> to vector<1x64xf32>
    %253 = vector.broadcast %252 : vector<1x64xf32> to vector<16x64xf32>
    %254 = arith.addf %250, %253 : vector<16x64xf32>
    %cst_100 = arith.constant 0.000000e+00 : f32
    %255 = vector.broadcast %cst_100 : f32 to vector<16x64xf32>
    %256 = arith.maximumf %254, %255 : vector<16x64xf32>
    %257 = arith.truncf %256 : vector<16x64xf32> to vector<16x64xbf16>
    %c0_101 = arith.constant 0 : index
    %c0_102 = arith.constant 0 : index
    %c0_103 = arith.constant 0 : index
    %258 = vector.load %arg23[%c0_101, %c0_102, %c0_103] : memref<1x64x32xbf16, #tpu.memory_space<vmem>>, vector<1x64x32xbf16>
    %259 = vector.shape_cast %258 : vector<1x64x32xbf16> to vector<64x32xbf16>
    %cst_104 = arith.constant dense<0.000000e+00> : vector<16x32xf32>
    %260 = tpu.matmul %257, %259, %cst_104 {dimension_numbers = #tpu.dot_dimension_numbers<[1], [0], [0], [1], [0, 0, 1, 1], [], []>} : vector<16x64xbf16>, vector<64x32xbf16>, vector<16x32xf32> -> vector<16x32xf32>
    %c0_105 = arith.constant 0 : index
    %c0_106 = arith.constant 0 : index
    %c0_107 = arith.constant 0 : index
    %261 = vector.load %arg24[%c0_105, %c0_106, %c0_107] : memref<1x1x32xf32, #tpu.memory_space<vmem>>, vector<1x1x32xf32>
    %262 = vector.shape_cast %261 : vector<1x1x32xf32> to vector<1x32xf32>
    %263 = vector.broadcast %262 : vector<1x32xf32> to vector<16x32xf32>
    %264 = arith.addf %260, %263 : vector<16x32xf32>
    %265 = arith.addf %246, %264 : vector<16x32xf32>
    %cst_108 = arith.constant dense<0.000000e+00> : vector<16xf32>
    %266 = vector.multi_reduction <add>, %265, %cst_108 [1] : vector<16x32xf32> to vector<16xf32>
    %267 = vector.shape_cast %266 : vector<16xf32> to vector<16x1xf32>
    %cst_109 = arith.constant 3.200000e+01 : f32
    %268 = vector.broadcast %cst_109 : f32 to vector<16x1xf32>
    %269 = arith.divf %267, %268 : vector<16x1xf32>
    %270 = arith.mulf %265, %265 : vector<16x32xf32>
    %cst_110 = arith.constant dense<0.000000e+00> : vector<16xf32>
    %271 = vector.multi_reduction <add>, %270, %cst_110 [1] : vector<16x32xf32> to vector<16xf32>
    %272 = vector.shape_cast %271 : vector<16xf32> to vector<16x1xf32>
    %cst_111 = arith.constant 3.200000e+01 : f32
    %273 = vector.broadcast %cst_111 : f32 to vector<16x1xf32>
    %274 = arith.divf %272, %273 : vector<16x1xf32>
    %275 = vector.broadcast %269 : vector<16x1xf32> to vector<16x32xf32>
    %276 = arith.subf %265, %275 : vector<16x32xf32>
    %277 = arith.mulf %269, %269 : vector<16x1xf32>
    %278 = arith.subf %274, %277 : vector<16x1xf32>
    %cst_112 = arith.constant 9.99999974E-6 : f32
    %279 = vector.broadcast %cst_112 : f32 to vector<16x1xf32>
    %280 = arith.addf %278, %279 : vector<16x1xf32>
    %281 = math.rsqrt %280 : vector<16x1xf32>
    %282 = vector.broadcast %281 : vector<16x1xf32> to vector<16x32xf32>
    %283 = arith.mulf %276, %282 : vector<16x32xf32>
    %c0_113 = arith.constant 0 : index
    %c0_114 = arith.constant 0 : index
    %c0_115 = arith.constant 0 : index
    %284 = vector.load %arg29[%c0_113, %c0_114, %c0_115] : memref<1x1x32xf32, #tpu.memory_space<vmem>>, vector<1x1x32xf32>
    %285 = vector.shape_cast %284 : vector<1x1x32xf32> to vector<1x32xf32>
    %286 = vector.broadcast %285 : vector<1x32xf32> to vector<16x32xf32>
    %287 = arith.mulf %283, %286 : vector<16x32xf32>
    %c0_116 = arith.constant 0 : index
    %c0_117 = arith.constant 0 : index
    %c0_118 = arith.constant 0 : index
    %288 = vector.load %arg30[%c0_116, %c0_117, %c0_118] : memref<1x1x32xf32, #tpu.memory_space<vmem>>, vector<1x1x32xf32>
    %289 = vector.shape_cast %288 : vector<1x1x32xf32> to vector<1x32xf32>
    %290 = vector.broadcast %289 : vector<1x32xf32> to vector<16x32xf32>
    %291 = arith.addf %287, %290 : vector<16x32xf32>
    %c0_119 = arith.constant 0 : index
    %c0_120 = arith.constant 0 : index
    %292 = vector.load %arg32[%c0_119, %c0_120] : memref<16x32xf32, #tpu.memory_space<vmem>>, vector<16x32xf32>
    tpu.vector_store %arg32[%c0_119, %c0_120], %291 {strides = array<i32>} : memref<16x32xf32, #tpu.memory_space<vmem>>, vector<16x32xf32>,
    %c1_i32 = arith.constant 1 : i32
    %293 = arith.cmpi eq, %arg1, %c1_i32 : i32
    %294 = arith.extui %293 : i1 to i32
    %c0_i32_121 = arith.constant 0 : i32
    %295 = arith.cmpi ne, %294, %c0_i32_121 : i32
    scf.if %295 {
      %296 = vector.shape_cast %291 : vector<16x32xf32> to vector<2x8x32xf32>
      %c0_122 = arith.constant 0 : index
      %c0_123 = arith.constant 0 : index
      %c0_124 = arith.constant 0 : index
      %297 = vector.load %arg31[%c0_122, %c0_123, %c0_124] : memref<2x8x32xf32, #tpu.memory_space<vmem>>, vector<2x8x32xf32>
      tpu.vector_store %arg31[%c0_122, %c0_123, %c0_124], %296 {strides = array<i32>} : memref<2x8x32xf32, #tpu.memory_space<vmem>>, vector<2x8x32xf32>,
    } else {
    }
    return
  }
  func.func @transform_0(%arg0: i32, %arg1: i32) -> (i32, i32, i32) {
    %c0_i32 = arith.constant 0 : i32
    %c0_i32_0 = arith.constant 0 : i32
    %c0_i32_1 = arith.constant 0 : i32
    return %arg0, %c0_i32, %c0_i32_0 : i32, i32, i32
  }
  func.func @transform_1(%arg0: i32, %arg1: i32) -> (i32, i32, i32) {
    %c0_i32 = arith.constant 0 : i32
    %c0_i32_0 = arith.constant 0 : i32
    %c0_i32_1 = arith.constant 0 : i32
    return %arg0, %c0_i32, %c0_i32_0 : i32, i32, i32
  }
  func.func @transform_2(%arg0: i32, %arg1: i32) -> (i32, i32, i32) {
    %c0_i32 = arith.constant 0 : i32
    %c0_i32_0 = arith.constant 0 : i32
    %c0_i32_1 = arith.constant 0 : i32
    return %arg0, %c0_i32, %c0_i32_0 : i32, i32, i32
  }
  func.func @transform_3(%arg0: i32, %arg1: i32) -> (i32, i32, i32) {
    %c0_i32 = arith.constant 0 : i32
    %c0_i32_0 = arith.constant 0 : i32
    %c0_i32_1 = arith.constant 0 : i32
    return %arg1, %c0_i32, %c0_i32_0 : i32, i32, i32
  }
  func.func @transform_4(%arg0: i32, %arg1: i32) -> (i32, i32, i32) {
    %c0_i32 = arith.constant 0 : i32
    %c0_i32_0 = arith.constant 0 : i32
    %c0_i32_1 = arith.constant 0 : i32
    return %arg1, %c0_i32, %c0_i32_0 : i32, i32, i32
  }
  func.func @transform_5(%arg0: i32, %arg1: i32) -> (i32, i32, i32) {
    %c0_i32 = arith.constant 0 : i32
    %c0_i32_0 = arith.constant 0 : i32
    %c0_i32_1 = arith.constant 0 : i32
    return %arg1, %c0_i32, %c0_i32_0 : i32, i32, i32
  }
  func.func @transform_6(%arg0: i32, %arg1: i32) -> (i32, i32, i32) {
    %c0_i32 = arith.constant 0 : i32
    %c0_i32_0 = arith.constant 0 : i32
    %c0_i32_1 = arith.constant 0 : i32
    return %arg1, %c0_i32, %c0_i32_0 : i32, i32, i32
  }
  func.func @transform_7(%arg0: i32, %arg1: i32) -> (i32, i32, i32) {
    %c0_i32 = arith.constant 0 : i32
    %c0_i32_0 = arith.constant 0 : i32
    %c0_i32_1 = arith.constant 0 : i32
    return %arg1, %c0_i32, %c0_i32_0 : i32, i32, i32
  }
  func.func @transform_8(%arg0: i32, %arg1: i32) -> (i32, i32, i32) {
    %c0_i32 = arith.constant 0 : i32
    %c0_i32_0 = arith.constant 0 : i32
    %c0_i32_1 = arith.constant 0 : i32
    return %arg1, %c0_i32, %c0_i32_0 : i32, i32, i32
  }
  func.func @transform_9(%arg0: i32, %arg1: i32) -> (i32, i32, i32) {
    %c0_i32 = arith.constant 0 : i32
    %c0_i32_0 = arith.constant 0 : i32
    %c0_i32_1 = arith.constant 0 : i32
    return %arg1, %c0_i32, %c0_i32_0 : i32, i32, i32
  }
  func.func @transform_10(%arg0: i32, %arg1: i32) -> (i32, i32, i32) {
    %c0_i32 = arith.constant 0 : i32
    %c0_i32_0 = arith.constant 0 : i32
    %c0_i32_1 = arith.constant 0 : i32
    return %arg1, %c0_i32, %c0_i32_0 : i32, i32, i32
  }
  func.func @transform_11(%arg0: i32, %arg1: i32) -> (i32, i32, i32) {
    %c0_i32 = arith.constant 0 : i32
    %c0_i32_0 = arith.constant 0 : i32
    %c0_i32_1 = arith.constant 0 : i32
    return %arg1, %c0_i32, %c0_i32_0 : i32, i32, i32
  }
  func.func @transform_12(%arg0: i32, %arg1: i32) -> (i32, i32, i32) {
    %c0_i32 = arith.constant 0 : i32
    %c0_i32_0 = arith.constant 0 : i32
    %c0_i32_1 = arith.constant 0 : i32
    return %arg1, %c0_i32, %c0_i32_0 : i32, i32, i32
  }
  func.func @transform_13(%arg0: i32, %arg1: i32) -> (i32, i32, i32) {
    %c0_i32 = arith.constant 0 : i32
    %c0_i32_0 = arith.constant 0 : i32
    %c0_i32_1 = arith.constant 0 : i32
    return %arg1, %c0_i32, %c0_i32_0 : i32, i32, i32
  }
  func.func @transform_14(%arg0: i32, %arg1: i32) -> (i32, i32, i32) {
    %c0_i32 = arith.constant 0 : i32
    %c0_i32_0 = arith.constant 0 : i32
    %c0_i32_1 = arith.constant 0 : i32
    return %arg1, %c0_i32, %c0_i32_0 : i32, i32, i32
  }
  func.func @transform_15(%arg0: i32, %arg1: i32) -> (i32, i32, i32) {
    %c0_i32 = arith.constant 0 : i32
    %c0_i32_0 = arith.constant 0 : i32
    %c0_i32_1 = arith.constant 0 : i32
    return %arg1, %c0_i32, %c0_i32_0 : i32, i32, i32
  }
  func.func @transform_16(%arg0: i32, %arg1: i32) -> (i32, i32, i32) {
    %c0_i32 = arith.constant 0 : i32
    %c0_i32_0 = arith.constant 0 : i32
    %c0_i32_1 = arith.constant 0 : i32
    return %arg1, %c0_i32, %c0_i32_0 : i32, i32, i32
  }
  func.func @transform_17(%arg0: i32, %arg1: i32) -> (i32, i32, i32) {
    %c0_i32 = arith.constant 0 : i32
    %c0_i32_0 = arith.constant 0 : i32
    %c0_i32_1 = arith.constant 0 : i32
    return %arg1, %c0_i32, %c0_i32_0 : i32, i32, i32
  }
  func.func @transform_18(%arg0: i32, %arg1: i32) -> (i32, i32, i32) {
    %c0_i32 = arith.constant 0 : i32
    %c0_i32_0 = arith.constant 0 : i32
    %c0_i32_1 = arith.constant 0 : i32
    return %arg1, %c0_i32, %c0_i32_0 : i32, i32, i32
  }
  func.func @transform_19(%arg0: i32, %arg1: i32) -> (i32, i32, i32) {
    %c0_i32 = arith.constant 0 : i32
    %c0_i32_0 = arith.constant 0 : i32
    %c0_i32_1 = arith.constant 0 : i32
    return %arg1, %c0_i32, %c0_i32_0 : i32, i32, i32
  }
  func.func @transform_20(%arg0: i32, %arg1: i32) -> (i32, i32, i32) {
    %c0_i32 = arith.constant 0 : i32
    %c0_i32_0 = arith.constant 0 : i32
    %c0_i32_1 = arith.constant 0 : i32
    return %arg1, %c0_i32, %c0_i32_0 : i32, i32, i32
  }
  func.func @transform_21(%arg0: i32, %arg1: i32) -> (i32, i32, i32) {
    %c0_i32 = arith.constant 0 : i32
    %c0_i32_0 = arith.constant 0 : i32
    %c0_i32_1 = arith.constant 0 : i32
    return %arg1, %c0_i32, %c0_i32_0 : i32, i32, i32
  }
  func.func @transform_22(%arg0: i32, %arg1: i32) -> (i32, i32, i32) {
    %c0_i32 = arith.constant 0 : i32
    %c0_i32_0 = arith.constant 0 : i32
    %c0_i32_1 = arith.constant 0 : i32
    return %arg1, %c0_i32, %c0_i32_0 : i32, i32, i32
  }
  func.func @transform_23(%arg0: i32, %arg1: i32) -> (i32, i32, i32) {
    %c0_i32 = arith.constant 0 : i32
    %c0_i32_0 = arith.constant 0 : i32
    %c0_i32_1 = arith.constant 0 : i32
    return %arg1, %c0_i32, %c0_i32_0 : i32, i32, i32
  }
  func.func @transform_24(%arg0: i32, %arg1: i32) -> (i32, i32, i32) {
    %c0_i32 = arith.constant 0 : i32
    %c0_i32_0 = arith.constant 0 : i32
    %c0_i32_1 = arith.constant 0 : i32
    return %arg1, %c0_i32, %c0_i32_0 : i32, i32, i32
  }
  func.func @transform_25(%arg0: i32, %arg1: i32) -> (i32, i32, i32) {
    %c0_i32 = arith.constant 0 : i32
    %c0_i32_0 = arith.constant 0 : i32
    %c0_i32_1 = arith.constant 0 : i32
    return %arg1, %c0_i32, %c0_i32_0 : i32, i32, i32
  }
  func.func @transform_26(%arg0: i32, %arg1: i32) -> (i32, i32, i32) {
    %c0_i32 = arith.constant 0 : i32
    %c0_i32_0 = arith.constant 0 : i32
    %c0_i32_1 = arith.constant 0 : i32
    return %arg1, %c0_i32, %c0_i32_0 : i32, i32, i32
  }
  func.func @transform_27(%arg0: i32, %arg1: i32) -> (i32, i32, i32) {
    %c0_i32 = arith.constant 0 : i32
    %c0_i32_0 = arith.constant 0 : i32
    %c0_i32_1 = arith.constant 0 : i32
    return %arg1, %c0_i32, %c0_i32_0 : i32, i32, i32
  }
  func.func @transform_28(%arg0: i32, %arg1: i32) -> (i32, i32, i32) {
    %c0_i32 = arith.constant 0 : i32
    %c0_i32_0 = arith.constant 0 : i32
    %c0_i32_1 = arith.constant 0 : i32
    return %arg1, %c0_i32, %c0_i32_0 : i32, i32, i32
  }
  func.func @transform_29(%arg0: i32, %arg1: i32) -> (i32, i32, i32) {
    %c0_i32 = arith.constant 0 : i32
    %c0_i32_0 = arith.constant 0 : i32
    %c0_i32_1 = arith.constant 0 : i32
    return %arg0, %c0_i32, %c0_i32_0 : i32, i32, i32
  }
}

</mosaic_0001>

<llo_original>
// kernel: tpu_custom_call.1
$region0: #{tpu_custom_call.1}
  #allocation0 [shape = 'u32[]', space=smem, size = 0x4, offset = 0x4, fixed_abs, tag = 'smem constant byte address 0x4 - core index']
  #allocation1 [shape = 'u32[144,128]{1,0:T(1,128)}', space=vmem, size = 0x12000, scoped, tag = 'internal scratch']
  #allocation2 [shape = 'f32[16,32]{1,0:T(8,128)}', space=vmem, size = 0x2000, scoped, tag = 'scratch operand']
  %s0 = inlined_call_operand.smem [shape: u32[30], index: -1, kind: input, shape index: {}]
  %s1 = sld [smem:[%s0]]
  %s2 = scalar_lea.smem %s0, 1
  %s3 = sld [smem:[%s2]]
  %s4 = scalar_lea.smem %s0, 2
  %s5 = sld [smem:[%s4]]
  %s6 = scalar_lea.smem %s0, 3
  %s7 = sld [smem:[%s6]]
  %s8 = scalar_lea.smem %s0, 4
  %s9 = sld [smem:[%s8]]
  %s10 = scalar_lea.smem %s0, 5
  %s11 = sld [smem:[%s10]]
  %s12 = scalar_lea.smem %s0, 6
  %s13 = sld [smem:[%s12]]
  %s14 = scalar_lea.smem %s0, 7
  %s15 = sld [smem:[%s14]]
  %s16 = scalar_lea.smem %s0, 8
  %s17 = sld [smem:[%s16]]
  %s18 = scalar_lea.smem %s0, 9
  %s19 = sld [smem:[%s18]]
  %s20 = scalar_lea.smem %s0, 10
  %s21 = sld [smem:[%s20]]
  %s22 = scalar_lea.smem %s0, 11
  %s23 = sld [smem:[%s22]]
  %s24 = scalar_lea.smem %s0, 12
  %s25 = sld [smem:[%s24]]
  %s26 = scalar_lea.smem %s0, 13
  %s27 = sld [smem:[%s26]]
  %s28 = scalar_lea.smem %s0, 14
  %s29 = sld [smem:[%s28]]
  %s30 = scalar_lea.smem %s0, 15
  %s31 = sld [smem:[%s30]]
  %s32 = scalar_lea.smem %s0, 16
  %s33 = sld [smem:[%s32]]
  %s34 = scalar_lea.smem %s0, 17
  %s35 = sld [smem:[%s34]]
  %s36 = scalar_lea.smem %s0, 18
  %s37 = sld [smem:[%s36]]
  %s38 = scalar_lea.smem %s0, 19
  %s39 = sld [smem:[%s38]]
  %s40 = scalar_lea.smem %s0, 20
  %s41 = sld [smem:[%s40]]
  %s42 = scalar_lea.smem %s0, 21
  %s43 = sld [smem:[%s42]]
  %s44 = scalar_lea.smem %s0, 22
  %s45 = sld [smem:[%s44]]
  %s46 = scalar_lea.smem %s0, 23
  %s47 = sld [smem:[%s46]]
  %s48 = scalar_lea.smem %s0, 24
  %s49 = sld [smem:[%s48]]
  %s50 = scalar_lea.smem %s0, 25
  %s51 = sld [smem:[%s50]]
  %s52 = scalar_lea.smem %s0, 26
  %s53 = sld [smem:[%s52]]
  %s54 = scalar_lea.smem %s0, 27
  %s55 = sld [smem:[%s54]]
  %s56 = scalar_lea.smem %s0, 28
  %s57 = sld [smem:[%s56]]
  %s58 = scalar_lea.smem %s0, 29
  %s59 = sld [smem:[%s58]]
  %s60 = sld [smem:[#allocation0]]
  $region217: #{tpu_custom_call.1} parent=0
    _
  %s62 = ssub.s32 1, %s60
  %s63 = scalar_select 0, %s62, %s60
  $region1: #{tpu_custom_call.1} parent=0
    #allocation3 [shape = 'u8[4096]{0}', space=vmem, size = 0x1000, scoped, tag = 'input window, operand 0, single buffered']
    #allocation4 [shape = 's32[2]{0}', space=sflag, size = 0x8, scoped, tag = 'scoped memory for tpu_custom_call.1']
    #allocation5 [shape = 's32[2]{0}', space=sflag, size = 0x8, scoped, tag = 'scoped memory for tpu_custom_call.1']
    #allocation6 [shape = 'u8[8192]{0}', space=vmem, size = 0x2000, scoped, tag = 'input window, operand 1, single buffered']
    #allocation7 [shape = 's32[1]{0}', space=sflag, size = 0x4, scoped, tag = 'scoped memory for tpu_custom_call.1']
    #allocation8 [shape = 'u8[1024]{0}', space=vmem, size = 0x400, scoped, tag = 'input window, operand 2, single buffered']
    #allocation9 [shape = 'u8[1024]{0}', space=vmem, size = 0x400, scoped, tag = 'input window, operand 4']
    #allocation10 [shape = 's32[2]{0}', space=sflag, size = 0x8, scoped, tag = 'scoped memory for tpu_custom_call.1']
    #allocation11 [shape = 'u8[1024]{0}', space=vmem, size = 0x400, scoped, tag = 'input window, operand 6']
    #allocation12 [shape = 'u8[1024]{0}', space=vmem, size = 0x400, scoped, tag = 'input window, operand 8']
    #allocation13 [shape = 's32[2]{0}', space=sflag, size = 0x8, scoped, tag = 'scoped memory for tpu_custom_call.1']
    #allocation14 [shape = 'u8[1024]{0}', space=vmem, size = 0x400, scoped, tag = 'input window, operand 10']
    #allocation15 [shape = 'u8[16384]{0}', space=vmem, size = 0x4000, scoped, tag = 'input window, operand 11']
    #allocation16 [shape = 's32[2]{0}', space=sflag, size = 0x8, scoped, tag = 'scoped memory for tpu_custom_call.1']
    #allocation17 [shape = 'u8[1024]{0}', space=vmem, size = 0x400, scoped, tag = 'input window, operand 12']
    #allocation18 [shape = 'u8[16384]{0}', space=vmem, size = 0x4000, scoped, tag = 'input window, operand 13']
    #allocation19 [shape = 's32[2]{0}', space=sflag, size = 0x8, scoped, tag = 'scoped memory for tpu_custom_call.1']
    #allocation20 [shape = 'u8[1024]{0}', space=vmem, size = 0x400, scoped, tag = 'input window, operand 14']
    #allocation21 [shape = 'u8[16384]{0}', space=vmem, size = 0x4000, scoped, tag = 'input window, operand 15']
    #allocation22 [shape = 's32[2]{0}', space=sflag, size = 0x8, scoped, tag = 'scoped memory for tpu_custom_call.1']
    #allocation23 [shape = 'u8[1024]{0}', space=vmem, size = 0x400, scoped, tag = 'input window, operand 16']
    #allocation24 [shape = 'u8[16384]{0}', space=vmem, size = 0x4000, scoped, tag = 'input window, operand 17']
    #allocation25 [shape = 's32[2]{0}', space=sflag, size = 0x8, scoped, tag = 'scoped memory for tpu_custom_call.1']
    #allocation26 [shape = 'u8[16384]{0}', space=vmem, size = 0x4000, scoped, tag = 'input window, operand 19']
    #allocation27 [shape = 'u8[8192]{0}', space=vmem, size = 0x2000, scoped, tag = 'output window, operand 0, single buffered']
    %64 = vsyncpa [#allocation4], 0
    %65 = vsyncpa [#allocation7], 0
    %66 = vsyncpa [#allocation10], 0
    %s67 = scalar_lea.sflag [#allocation10], 1
    %68 = vsyncpa %s67, 0
    %69 = vsyncpa [#allocation13], 0
    %s70 = scalar_lea.sflag [#allocation13], 1
    %71 = vsyncpa %s70, 0
    %72 = vsyncpa [#allocation16], 0
    %s73 = scalar_lea.sflag [#allocation16], 1
    %74 = vsyncpa %s73, 0
    %75 = vsyncpa [#allocation19], 0
    %s76 = scalar_lea.sflag [#allocation19], 1
    %77 = vsyncpa %s76, 0
    %78 = vsyncpa [#allocation22], 0
    %s79 = scalar_lea.sflag [#allocation22], 1
    %80 = vsyncpa %s79, 0
    %81 = vsyncpa [#allocation25], 0
    %s82 = scalar_lea.sflag [#allocation25], 1
    %83 = vsyncpa %s82, 0
    %84 = vsyncpa [#allocation5], 0
    loop: start=0, step=1, limit=4
    $region2: #{tpu_custom_call.1} parent=1 // loop_pre_header
      _
    $region3: #{tpu_custom_call.1} parent=1 // loop_header
      %s86 = sphi 0, %s90
      %p87 = scmp.ge.s32.totalorder %s86, 4
      %s93 = sphi 0, %s105
      %s94 = sphi 0, %s101
      %s95 = sphi 0, %s93
      %s96 = sphi 0, %s94
      %s97 = sphi 0, %s95
      %s98 = sphi 0, %s96
      %s108 = sphi 0, %s110
      %s111 = sphi 0, %s108
      %s112 = sphi 0, %s111
      %s128 = sphi 0, %s112
      %s134 = sphi 0, %s136
      %s137 = sphi 0, %s134
      %s138 = sphi 0, %s137
      %s154 = sphi 0, %s138
      %s160 = sphi 0, %s162
      %s163 = sphi 0, %s160
      %s164 = sphi 0, %s163
      %s180 = sphi 0, %s164
      %s186 = sphi 0, %s188
      %s189 = sphi 0, %s186
      %s190 = sphi 0, %s189
      %s206 = sphi 0, %s190
      %s212 = sphi 0, %s214
      %s215 = sphi 0, %s212
      %s216 = sphi 0, %s215
      %s232 = sphi 0, %s216
      %s238 = sphi 0, %s240
      %s241 = sphi 0, %s238
      %s242 = sphi 0, %s241
      %s258 = sphi 0, %s242
      %s264 = sphi 0, %s266
      %s267 = sphi 0, %s264
      %s268 = sphi 0, %s267
      %s284 = sphi 0, %s268
      %s290 = sphi 0, %s292
      %s293 = sphi 0, %s290
      %s294 = sphi 0, %s293
      %s310 = sphi 0, %s294
      %s316 = sphi 0, %s318
      %s319 = sphi 0, %s316
      %s320 = sphi 0, %s319
      %s336 = sphi 0, %s320
      %s342 = sphi 0, %s344
      %s345 = sphi 0, %s342
      %s346 = sphi 0, %s345
      %s362 = sphi 0, %s346
      %s368 = sphi 0, %s370
      %s371 = sphi 0, %s368
      %s372 = sphi 0, %s371
      %s388 = sphi 0, %s372
      %s394 = sphi 0, %s396
      %s397 = sphi 0, %s394
      %s398 = sphi 0, %s397
      %s414 = sphi 0, %s398
      %s420 = sphi 0, %s422
      %s423 = sphi 0, %s420
      %s424 = sphi 0, %s423
      %s440 = sphi 0, %s424
      %s446 = sphi 0, %s448
      %s449 = sphi 0, %s446
      %s450 = sphi 0, %s449
      %s466 = sphi 0, %s450
      %s472 = sphi 0, %s474
      %s475 = sphi 0, %s472
      %s476 = sphi 0, %s475
      %s492 = sphi 0, %s476
      %s498 = sphi 0, %s500
      %s501 = sphi 0, %s498
      %s502 = sphi 0, %s501
      %s518 = sphi 0, %s502
      %s524 = sphi 0, %s526
      %s527 = sphi 0, %s524
      %s528 = sphi 0, %s527
      %s544 = sphi 0, %s528
      %s550 = sphi 0, %s552
      %s553 = sphi 0, %s550
      %s554 = sphi 0, %s553
      %s570 = sphi 0, %s554
      %s576 = sphi 0, %s578
      %s579 = sphi 0, %s576
      %s580 = sphi 0, %s579
      %s596 = sphi 0, %s580
      %s602 = sphi 0, %s604
      %s605 = sphi 0, %s602
      %s606 = sphi 0, %s605
      %s622 = sphi 0, %s606
      %s628 = sphi 0, %s630
      %s631 = sphi 0, %s628
      %s632 = sphi 0, %s631
      %s648 = sphi 0, %s632
      %s654 = sphi 0, %s656
      %s657 = sphi 0, %s654
      %s658 = sphi 0, %s657
      %s674 = sphi 0, %s658
      %s680 = sphi 0, %s682
      %s683 = sphi 0, %s680
      %s684 = sphi 0, %s683
      %s700 = sphi 0, %s684
      %s706 = sphi 0, %s708
      %s709 = sphi 0, %s706
      %s710 = sphi 0, %s709
      %s726 = sphi 0, %s710
      %s732 = sphi 0, %s734
      %s735 = sphi 0, %s732
      %s736 = sphi 0, %s735
      %s752 = sphi 0, %s736
      %s758 = sphi 0, %s760
      %s761 = sphi 0, %s758
      %s762 = sphi 0, %s761
      %s778 = sphi 0, %s762
      %s784 = sphi 0, %s786
      %s787 = sphi 0, %s784
      %s788 = sphi 0, %s787
      %s804 = sphi 0, %s788
      %s810 = sphi 0, %s812
      %s813 = sphi 0, %s810
      %s814 = sphi 0, %s813
      %s830 = sphi 0, %s814
      %s836 = sphi 0, %s838
      %s839 = sphi 0, %s836
      %s840 = sphi 0, %s839
      %s856 = sphi 0, %s840
      %s862 = sphi 0, %s864
      %s865 = sphi 0, %s862
      %s866 = sphi 0, %s865
      %s882 = sphi 0, %s866
    $region4: #{tpu_custom_call.1} parent=1 // loop_header_branch
      %89 = sbr.rel (%p87) target = $region8
    $region5: #{tpu_custom_call.1} parent=1 // loop_body
      %s91 = ssub.s32 %s86, 1
      %s92 = ssub.s32 %s86, 2
      %s99 = sadd.s32 1, %s94
      %p100 = scmp.ge.s32.totalorder %s99, 2
      %s101 = scalar_select %p100, 0, %s99
      %s102 = sadd.s32 1, %s93
      %s103 = scalar_select %p100, %s102, %s93
      %p104 = scmp.ge.s32.totalorder %s103, 1
      %s105 = scalar_select %p104, 0, %s103
      %s106 = ssub.s32 %s93, %s105
      %p107 = scmp.eq.s32.totalorder %s106, 0
      %s109 = sadd.s32 %s108, 1
      %s110 = scalar_select %p107, %s108, %s109
      %p113 = pneg %p107
      %p114 = scmp.eq.s32.totalorder %s86, 1
      %p115 = por %p113, %p114
      %p116 = scmp.ne.s32.totalorder %s108, %s111
      %p117 = scmp.eq.s32.totalorder %s86, 0
      %p118 = por %p116, %p117
      %p119 = scmp.ne.s32.totalorder %s108, %s111
      %p120 = scmp.eq.s32.totalorder %s91, 1
      %p121 = por %p119, %p120
      %p122 = scmp.ne.s32.totalorder %s111, %s112
      %p123 = scmp.eq.s32.totalorder %s91, 0
      %p124 = por %p122, %p123
      %p125 = scmp.ne.s32.totalorder %s111, %s112
      %p126 = scmp.eq.s32.totalorder %s92, 1
      %p127 = por %p125, %p126
      %p129 = scmp.ne.s32.totalorder %s112, %s128
      %p130 = scmp.eq.s32.totalorder %s92, 0
      %p131 = por %p129, %p130
      %s132 = ssub.s32 %s93, %s105
      %p133 = scmp.eq.s32.totalorder %s132, 0
      %s135 = sadd.s32 %s134, 1
      %s136 = scalar_select %p133, %s134, %s135
      %p139 = pneg %p133
      %p140 = scmp.eq.s32.totalorder %s86, 1
      %p141 = por %p139, %p140
      %p142 = scmp.ne.s32.totalorder %s134, %s137
      %p143 = scmp.eq.s32.totalorder %s86, 0
      %p144 = por %p142, %p143
      %p145 = scmp.ne.s32.totalorder %s134, %s137
      %p146 = scmp.eq.s32.totalorder %s91, 1
      %p147 = por %p145, %p146
      %p148 = scmp.ne.s32.totalorder %s137, %s138
      %p149 = scmp.eq.s32.totalorder %s91, 0
      %p150 = por %p148, %p149
      %p151 = scmp.ne.s32.totalorder %s137, %s138
      %p152 = scmp.eq.s32.totalorder %s92, 1
      %p153 = por %p151, %p152
      %p155 = scmp.ne.s32.totalorder %s138, %s154
      %p156 = scmp.eq.s32.totalorder %s92, 0
      %p157 = por %p155, %p156
      %s158 = ssub.s32 %s93, %s105
      %p159 = scmp.eq.s32.totalorder %s158, 0
      %s161 = sadd.s32 %s160, 1
      %s162 = scalar_select %p159, %s160, %s161
      %p165 = pneg %p159
      %p166 = scmp.eq.s32.totalorder %s86, 1
      %p167 = por %p165, %p166
      %p168 = scmp.ne.s32.totalorder %s160, %s163
      %p169 = scmp.eq.s32.totalorder %s86, 0
      %p170 = por %p168, %p169
      %p171 = scmp.ne.s32.totalorder %s160, %s163
      %p172 = scmp.eq.s32.totalorder %s91, 1
      %p173 = por %p171, %p172
      %p174 = scmp.ne.s32.totalorder %s163, %s164
      %p175 = scmp.eq.s32.totalorder %s91, 0
      %p176 = por %p174, %p175
      %p177 = scmp.ne.s32.totalorder %s163, %s164
      %p178 = scmp.eq.s32.totalorder %s92, 1
      %p179 = por %p177, %p178
      %p181 = scmp.ne.s32.totalorder %s164, %s180
      %p182 = scmp.eq.s32.totalorder %s92, 0
      %p183 = por %p181, %p182
      %s184 = ssub.s32 %s94, %s101
      %p185 = scmp.eq.s32.totalorder %s184, 0
      %s187 = sadd.s32 %s186, 1
      %s188 = scalar_select %p185, %s186, %s187
      %p191 = pneg %p185
      %p192 = scmp.eq.s32.totalorder %s86, 1
      %p193 = por %p191, %p192
      %p194 = scmp.ne.s32.totalorder %s186, %s189
      %p195 = scmp.eq.s32.totalorder %s86, 0
      %p196 = por %p194, %p195
      %p197 = scmp.ne.s32.totalorder %s186, %s189
      %p198 = scmp.eq.s32.totalorder %s91, 1
      %p199 = por %p197, %p198
      %p200 = scmp.ne.s32.totalorder %s189, %s190
      %p201 = scmp.eq.s32.totalorder %s91, 0
      %p202 = por %p200, %p201
      %p203 = scmp.ne.s32.totalorder %s189, %s190
      %p204 = scmp.eq.s32.totalorder %s92, 1
      %p205 = por %p203, %p204
      %p207 = scmp.ne.s32.totalorder %s190, %s206
      %p208 = scmp.eq.s32.totalorder %s92, 0
      %p209 = por %p207, %p208
      %s210 = ssub.s32 %s94, %s101
      %p211 = scmp.eq.s32.totalorder %s210, 0
      %s213 = sadd.s32 %s212, 1
      %s214 = scalar_select %p211, %s212, %s213
      %p217 = pneg %p211
      %p218 = scmp.eq.s32.totalorder %s86, 1
      %p219 = por %p217, %p218
      %p220 = scmp.ne.s32.totalorder %s212, %s215
      %p221 = scmp.eq.s32.totalorder %s86, 0
      %p222 = por %p220, %p221
      %p223 = scmp.ne.s32.totalorder %s212, %s215
      %p224 = scmp.eq.s32.totalorder %s91, 1
      %p225 = por %p223, %p224
      %p226 = scmp.ne.s32.totalorder %s215, %s216
      %p227 = scmp.eq.s32.totalorder %s91, 0
      %p228 = por %p226, %p227
      %p229 = scmp.ne.s32.totalorder %s215, %s216
      %p230 = scmp.eq.s32.totalorder %s92, 1
      %p231 = por %p229, %p230
      %p233 = scmp.ne.s32.totalorder %s216, %s232
      %p234 = scmp.eq.s32.totalorder %s92, 0
      %p235 = por %p233, %p234
      %s236 = ssub.s32 %s94, %s101
      %p237 = scmp.eq.s32.totalorder %s236, 0
      %s239 = sadd.s32 %s238, 1
      %s240 = scalar_select %p237, %s238, %s239
      %p243 = pneg %p237
      %p244 = scmp.eq.s32.totalorder %s86, 1
      %p245 = por %p243, %p244
      %p246 = scmp.ne.s32.totalorder %s238, %s241
      %p247 = scmp.eq.s32.totalorder %s86, 0
      %p248 = por %p246, %p247
      %p249 = scmp.ne.s32.totalorder %s238, %s241
      %p250 = scmp.eq.s32.totalorder %s91, 1
      %p251 = por %p249, %p250
      %p252 = scmp.ne.s32.totalorder %s241, %s242
      %p253 = scmp.eq.s32.totalorder %s91, 0
      %p254 = por %p252, %p253
      %p255 = scmp.ne.s32.totalorder %s241, %s242
      %p256 = scmp.eq.s32.totalorder %s92, 1
      %p257 = por %p255, %p256
      %p259 = scmp.ne.s32.totalorder %s242, %s258
      %p260 = scmp.eq.s32.totalorder %s92, 0
      %p261 = por %p259, %p260
      %s262 = ssub.s32 %s94, %s101
      %p263 = scmp.eq.s32.totalorder %s262, 0
      %s265 = sadd.s32 %s264, 1
      %s266 = scalar_select %p263, %s264, %s265
      %p269 = pneg %p263
      %p270 = scmp.eq.s32.totalorder %s86, 1
      %p271 = por %p269, %p270
      %p272 = scmp.ne.s32.totalorder %s264, %s267
      %p273 = scmp.eq.s32.totalorder %s86, 0
      %p274 = por %p272, %p273
      %p275 = scmp.ne.s32.totalorder %s264, %s267
      %p276 = scmp.eq.s32.totalorder %s91, 1
      %p277 = por %p275, %p276
      %p278 = scmp.ne.s32.totalorder %s267, %s268
      %p279 = scmp.eq.s32.totalorder %s91, 0
      %p280 = por %p278, %p279
      %p281 = scmp.ne.s32.totalorder %s267, %s268
      %p282 = scmp.eq.s32.totalorder %s92, 1
      %p283 = por %p281, %p282
      %p285 = scmp.ne.s32.totalorder %s268, %s284
      %p286 = scmp.eq.s32.totalorder %s92, 0
      %p287 = por %p285, %p286
      %s288 = ssub.s32 %s94, %s101
      %p289 = scmp.eq.s32.totalorder %s288, 0
      %s291 = sadd.s32 %s290, 1
      %s292 = scalar_select %p289, %s290, %s291
      %p295 = pneg %p289
      %p296 = scmp.eq.s32.totalorder %s86, 1
      %p297 = por %p295, %p296
      %p298 = scmp.ne.s32.totalorder %s290, %s293
      %p299 = scmp.eq.s32.totalorder %s86, 0
      %p300 = por %p298, %p299
      %p301 = scmp.ne.s32.totalorder %s290, %s293
      %p302 = scmp.eq.s32.totalorder %s91, 1
      %p303 = por %p301, %p302
      %p304 = scmp.ne.s32.totalorder %s293, %s294
      %p305 = scmp.eq.s32.totalorder %s91, 0
      %p306 = por %p304, %p305
      %p307 = scmp.ne.s32.totalorder %s293, %s294
      %p308 = scmp.eq.s32.totalorder %s92, 1
      %p309 = por %p307, %p308
      %p311 = scmp.ne.s32.totalorder %s294, %s310
      %p312 = scmp.eq.s32.totalorder %s92, 0
      %p313 = por %p311, %p312
      %s314 = ssub.s32 %s94, %s101
      %p315 = scmp.eq.s32.totalorder %s314, 0
      %s317 = sadd.s32 %s316, 1
      %s318 = scalar_select %p315, %s316, %s317
      %p321 = pneg %p315
      %p322 = scmp.eq.s32.totalorder %s86, 1
      %p323 = por %p321, %p322
      %p324 = scmp.ne.s32.totalorder %s316, %s319
      %p325 = scmp.eq.s32.totalorder %s86, 0
      %p326 = por %p324, %p325
      %p327 = scmp.ne.s32.totalorder %s316, %s319
      %p328 = scmp.eq.s32.totalorder %s91, 1
      %p329 = por %p327, %p328
      %p330 = scmp.ne.s32.totalorder %s319, %s320
      %p331 = scmp.eq.s32.totalorder %s91, 0
      %p332 = por %p330, %p331
      %p333 = scmp.ne.s32.totalorder %s319, %s320
      %p334 = scmp.eq.s32.totalorder %s92, 1
      %p335 = por %p333, %p334
      %p337 = scmp.ne.s32.totalorder %s320, %s336
      %p338 = scmp.eq.s32.totalorder %s92, 0
      %p339 = por %p337, %p338
      %s340 = ssub.s32 %s94, %s101
      %p341 = scmp.eq.s32.totalorder %s340, 0
      %s343 = sadd.s32 %s342, 1
      %s344 = scalar_select %p341, %s342, %s343
      %p347 = pneg %p341
      %p348 = scmp.eq.s32.totalorder %s86, 1
      %p349 = por %p347, %p348
      %p350 = scmp.ne.s32.totalorder %s342, %s345
      %p351 = scmp.eq.s32.totalorder %s86, 0
      %p352 = por %p350, %p351
      %p353 = scmp.ne.s32.totalorder %s342, %s345
      %p354 = scmp.eq.s32.totalorder %s91, 1
      %p355 = por %p353, %p354
      %p356 = scmp.ne.s32.totalorder %s345, %s346
      %p357 = scmp.eq.s32.totalorder %s91, 0
      %p358 = por %p356, %p357
      %p359 = scmp.ne.s32.totalorder %s345, %s346
      %p360 = scmp.eq.s32.totalorder %s92, 1
      %p361 = por %p359, %p360
      %p363 = scmp.ne.s32.totalorder %s346, %s362
      %p364 = scmp.eq.s32.totalorder %s92, 0
      %p365 = por %p363, %p364
      %s366 = ssub.s32 %s94, %s101
      %p367 = scmp.eq.s32.totalorder %s366, 0
      %s369 = sadd.s32 %s368, 1
      %s370 = scalar_select %p367, %s368, %s369
      %p373 = pneg %p367
      %p374 = scmp.eq.s32.totalorder %s86, 1
      %p375 = por %p373, %p374
      %p376 = scmp.ne.s32.totalorder %s368, %s371
      %p377 = scmp.eq.s32.totalorder %s86, 0
      %p378 = por %p376, %p377
      %p379 = scmp.ne.s32.totalorder %s368, %s371
      %p380 = scmp.eq.s32.totalorder %s91, 1
      %p381 = por %p379, %p380
      %p382 = scmp.ne.s32.totalorder %s371, %s372
      %p383 = scmp.eq.s32.totalorder %s91, 0
      %p384 = por %p382, %p383
      %p385 = scmp.ne.s32.totalorder %s371, %s372
      %p386 = scmp.eq.s32.totalorder %s92, 1
      %p387 = por %p385, %p386
      %p389 = scmp.ne.s32.totalorder %s372, %s388
      %p390 = scmp.eq.s32.totalorder %s92, 0
      %p391 = por %p389, %p390
      %s392 = ssub.s32 %s94, %s101
      %p393 = scmp.eq.s32.totalorder %s392, 0
      %s395 = sadd.s32 %s394, 1
      %s396 = scalar_select %p393, %s394, %s395
      %p399 = pneg %p393
      %p400 = scmp.eq.s32.totalorder %s86, 1
      %p401 = por %p399, %p400
      %p402 = scmp.ne.s32.totalorder %s394, %s397
      %p403 = scmp.eq.s32.totalorder %s86, 0
      %p404 = por %p402, %p403
      %p405 = scmp.ne.s32.totalorder %s394, %s397
      %p406 = scmp.eq.s32.totalorder %s91, 1
      %p407 = por %p405, %p406
      %p408 = scmp.ne.s32.totalorder %s397, %s398
      %p409 = scmp.eq.s32.totalorder %s91, 0
      %p410 = por %p408, %p409
      %p411 = scmp.ne.s32.totalorder %s397, %s398
      %p412 = scmp.eq.s32.totalorder %s92, 1
      %p413 = por %p411, %p412
      %p415 = scmp.ne.s32.totalorder %s398, %s414
      %p416 = scmp.eq.s32.totalorder %s92, 0
      %p417 = por %p415, %p416
      %s418 = ssub.s32 %s94, %s101
      %p419 = scmp.eq.s32.totalorder %s418, 0
      %s421 = sadd.s32 %s420, 1
      %s422 = scalar_select %p419, %s420, %s421
      %p425 = pneg %p419
      %p426 = scmp.eq.s32.totalorder %s86, 1
      %p427 = por %p425, %p426
      %p428 = scmp.ne.s32.totalorder %s420, %s423
      %p429 = scmp.eq.s32.totalorder %s86, 0
      %p430 = por %p428, %p429
      %p431 = scmp.ne.s32.totalorder %s420, %s423
      %p432 = scmp.eq.s32.totalorder %s91, 1
      %p433 = por %p431, %p432
      %p434 = scmp.ne.s32.totalorder %s423, %s424
      %p435 = scmp.eq.s32.totalorder %s91, 0
      %p436 = por %p434, %p435
      %p437 = scmp.ne.s32.totalorder %s423, %s424
      %p438 = scmp.eq.s32.totalorder %s92, 1
      %p439 = por %p437, %p438
      %p441 = scmp.ne.s32.totalorder %s424, %s440
      %p442 = scmp.eq.s32.totalorder %s92, 0
      %p443 = por %p441, %p442
      %s444 = ssub.s32 %s94, %s101
      %p445 = scmp.eq.s32.totalorder %s444, 0
      %s447 = sadd.s32 %s446, 1
      %s448 = scalar_select %p445, %s446, %s447
      %p451 = pneg %p445
      %p452 = scmp.eq.s32.totalorder %s86, 1
      %p453 = por %p451, %p452
      %p454 = scmp.ne.s32.totalorder %s446, %s449
      %p455 = scmp.eq.s32.totalorder %s86, 0
      %p456 = por %p454, %p455
      %p457 = scmp.ne.s32.totalorder %s446, %s449
      %p458 = scmp.eq.s32.totalorder %s91, 1
      %p459 = por %p457, %p458
      %p460 = scmp.ne.s32.totalorder %s449, %s450
      %p461 = scmp.eq.s32.totalorder %s91, 0
      %p462 = por %p460, %p461
      %p463 = scmp.ne.s32.totalorder %s449, %s450
      %p464 = scmp.eq.s32.totalorder %s92, 1
      %p465 = por %p463, %p464
      %p467 = scmp.ne.s32.totalorder %s450, %s466
      %p468 = scmp.eq.s32.totalorder %s92, 0
      %p469 = por %p467, %p468
      %s470 = ssub.s32 %s94, %s101
      %p471 = scmp.eq.s32.totalorder %s470, 0
      %s473 = sadd.s32 %s472, 1
      %s474 = scalar_select %p471, %s472, %s473
      %p477 = pneg %p471
      %p478 = scmp.eq.s32.totalorder %s86, 1
      %p479 = por %p477, %p478
      %p480 = scmp.ne.s32.totalorder %s472, %s475
      %p481 = scmp.eq.s32.totalorder %s86, 0
      %p482 = por %p480, %p481
      %p483 = scmp.ne.s32.totalorder %s472, %s475
      %p484 = scmp.eq.s32.totalorder %s91, 1
      %p485 = por %p483, %p484
      %p486 = scmp.ne.s32.totalorder %s475, %s476
      %p487 = scmp.eq.s32.totalorder %s91, 0
      %p488 = por %p486, %p487
      %p489 = scmp.ne.s32.totalorder %s475, %s476
      %p490 = scmp.eq.s32.totalorder %s92, 1
      %p491 = por %p489, %p490
      %p493 = scmp.ne.s32.totalorder %s476, %s492
      %p494 = scmp.eq.s32.totalorder %s92, 0
      %p495 = por %p493, %p494
      %s496 = ssub.s32 %s94, %s101
      %p497 = scmp.eq.s32.totalorder %s496, 0
      %s499 = sadd.s32 %s498, 1
      %s500 = scalar_select %p497, %s498, %s499
      %p503 = pneg %p497
      %p504 = scmp.eq.s32.totalorder %s86, 1
      %p505 = por %p503, %p504
      %p506 = scmp.ne.s32.totalorder %s498, %s501
      %p507 = scmp.eq.s32.totalorder %s86, 0
      %p508 = por %p506, %p507
      %p509 = scmp.ne.s32.totalorder %s498, %s501
      %p510 = scmp.eq.s32.totalorder %s91, 1
      %p511 = por %p509, %p510
      %p512 = scmp.ne.s32.totalorder %s501, %s502
      %p513 = scmp.eq.s32.totalorder %s91, 0
      %p514 = por %p512, %p513
      %p515 = scmp.ne.s32.totalorder %s501, %s502
      %p516 = scmp.eq.s32.totalorder %s92, 1
      %p517 = por %p515, %p516
      %p519 = scmp.ne.s32.totalorder %s502, %s518
      %p520 = scmp.eq.s32.totalorder %s92, 0
      %p521 = por %p519, %p520
      %s522 = ssub.s32 %s94, %s101
      %p523 = scmp.eq.s32.totalorder %s522, 0
      %s525 = sadd.s32 %s524, 1
      %s526 = scalar_select %p523, %s524, %s525
      %p529 = pneg %p523
      %p530 = scmp.eq.s32.totalorder %s86, 1
      %p531 = por %p529, %p530
      %p532 = scmp.ne.s32.totalorder %s524, %s527
      %p533 = scmp.eq.s32.totalorder %s86, 0
      %p534 = por %p532, %p533
      %p535 = scmp.ne.s32.totalorder %s524, %s527
      %p536 = scmp.eq.s32.totalorder %s91, 1
      %p537 = por %p535, %p536
      %p538 = scmp.ne.s32.totalorder %s527, %s528
      %p539 = scmp.eq.s32.totalorder %s91, 0
      %p540 = por %p538, %p539
      %p541 = scmp.ne.s32.totalorder %s527, %s528
      %p542 = scmp.eq.s32.totalorder %s92, 1
      %p543 = por %p541, %p542
      %p545 = scmp.ne.s32.totalorder %s528, %s544
      %p546 = scmp.eq.s32.totalorder %s92, 0
      %p547 = por %p545, %p546
      %s548 = ssub.s32 %s94, %s101
      %p549 = scmp.eq.s32.totalorder %s548, 0
      %s551 = sadd.s32 %s550, 1
      %s552 = scalar_select %p549, %s550, %s551
      %p555 = pneg %p549
      %p556 = scmp.eq.s32.totalorder %s86, 1
      %p557 = por %p555, %p556
      %p558 = scmp.ne.s32.totalorder %s550, %s553
      %p559 = scmp.eq.s32.totalorder %s86, 0
      %p560 = por %p558, %p559
      %p561 = scmp.ne.s32.totalorder %s550, %s553
      %p562 = scmp.eq.s32.totalorder %s91, 1
      %p563 = por %p561, %p562
      %p564 = scmp.ne.s32.totalorder %s553, %s554
      %p565 = scmp.eq.s32.totalorder %s91, 0
      %p566 = por %p564, %p565
      %p567 = scmp.ne.s32.totalorder %s553, %s554
      %p568 = scmp.eq.s32.totalorder %s92, 1
      %p569 = por %p567, %p568
      %p571 = scmp.ne.s32.totalorder %s554, %s570
      %p572 = scmp.eq.s32.totalorder %s92, 0
      %p573 = por %p571, %p572
      %s574 = ssub.s32 %s94, %s101
      %p575 = scmp.eq.s32.totalorder %s574, 0
      %s577 = sadd.s32 %s576, 1
      %s578 = scalar_select %p575, %s576, %s577
      %p581 = pneg %p575
      %p582 = scmp.eq.s32.totalorder %s86, 1
      %p583 = por %p581, %p582
      %p584 = scmp.ne.s32.totalorder %s576, %s579
      %p585 = scmp.eq.s32.totalorder %s86, 0
      %p586 = por %p584, %p585
      %p587 = scmp.ne.s32.totalorder %s576, %s579
      %p588 = scmp.eq.s32.totalorder %s91, 1
      %p589 = por %p587, %p588
      %p590 = scmp.ne.s32.totalorder %s579, %s580
      %p591 = scmp.eq.s32.totalorder %s91, 0
      %p592 = por %p590, %p591
      %p593 = scmp.ne.s32.totalorder %s579, %s580
      %p594 = scmp.eq.s32.totalorder %s92, 1
      %p595 = por %p593, %p594
      %p597 = scmp.ne.s32.totalorder %s580, %s596
      %p598 = scmp.eq.s32.totalorder %s92, 0
      %p599 = por %p597, %p598
      %s600 = ssub.s32 %s94, %s101
      %p601 = scmp.eq.s32.totalorder %s600, 0
      %s603 = sadd.s32 %s602, 1
      %s604 = scalar_select %p601, %s602, %s603
      %p607 = pneg %p601
      %p608 = scmp.eq.s32.totalorder %s86, 1
      %p609 = por %p607, %p608
      %p610 = scmp.ne.s32.totalorder %s602, %s605
      %p611 = scmp.eq.s32.totalorder %s86, 0
      %p612 = por %p610, %p611
      %p613 = scmp.ne.s32.totalorder %s602, %s605
      %p614 = scmp.eq.s32.totalorder %s91, 1
      %p615 = por %p613, %p614
      %p616 = scmp.ne.s32.totalorder %s605, %s606
      %p617 = scmp.eq.s32.totalorder %s91, 0
      %p618 = por %p616, %p617
      %p619 = scmp.ne.s32.totalorder %s605, %s606
      %p620 = scmp.eq.s32.totalorder %s92, 1
      %p621 = por %p619, %p620
      %p623 = scmp.ne.s32.totalorder %s606, %s622
      %p624 = scmp.eq.s32.totalorder %s92, 0
      %p625 = por %p623, %p624
      %s626 = ssub.s32 %s94, %s101
      %p627 = scmp.eq.s32.totalorder %s626, 0
      %s629 = sadd.s32 %s628, 1
      %s630 = scalar_select %p627, %s628, %s629
      %p633 = pneg %p627
      %p634 = scmp.eq.s32.totalorder %s86, 1
      %p635 = por %p633, %p634
      %p636 = scmp.ne.s32.totalorder %s628, %s631
      %p637 = scmp.eq.s32.totalorder %s86, 0
      %p638 = por %p636, %p637
      %p639 = scmp.ne.s32.totalorder %s628, %s631
      %p640 = scmp.eq.s32.totalorder %s91, 1
      %p641 = por %p639, %p640
      %p642 = scmp.ne.s32.totalorder %s631, %s632
      %p643 = scmp.eq.s32.totalorder %s91, 0
      %p644 = por %p642, %p643
      %p645 = scmp.ne.s32.totalorder %s631, %s632
      %p646 = scmp.eq.s32.totalorder %s92, 1
      %p647 = por %p645, %p646
      %p649 = scmp.ne.s32.totalorder %s632, %s648
      %p650 = scmp.eq.s32.totalorder %s92, 0
      %p651 = por %p649, %p650
      %s652 = ssub.s32 %s94, %s101
      %p653 = scmp.eq.s32.totalorder %s652, 0
      %s655 = sadd.s32 %s654, 1
      %s656 = scalar_select %p653, %s654, %s655
      %p659 = pneg %p653
      %p660 = scmp.eq.s32.totalorder %s86, 1
      %p661 = por %p659, %p660
      %p662 = scmp.ne.s32.totalorder %s654, %s657
      %p663 = scmp.eq.s32.totalorder %s86, 0
      %p664 = por %p662, %p663
      %p665 = scmp.ne.s32.totalorder %s654, %s657
      %p666 = scmp.eq.s32.totalorder %s91, 1
      %p667 = por %p665, %p666
      %p668 = scmp.ne.s32.totalorder %s657, %s658
      %p669 = scmp.eq.s32.totalorder %s91, 0
      %p670 = por %p668, %p669
      %p671 = scmp.ne.s32.totalorder %s657, %s658
      %p672 = scmp.eq.s32.totalorder %s92, 1
      %p673 = por %p671, %p672
      %p675 = scmp.ne.s32.totalorder %s658, %s674
      %p676 = scmp.eq.s32.totalorder %s92, 0
      %p677 = por %p675, %p676
      %s678 = ssub.s32 %s94, %s101
      %p679 = scmp.eq.s32.totalorder %s678, 0
      %s681 = sadd.s32 %s680, 1
      %s682 = scalar_select %p679, %s680, %s681
      %p685 = pneg %p679
      %p686 = scmp.eq.s32.totalorder %s86, 1
      %p687 = por %p685, %p686
      %p688 = scmp.ne.s32.totalorder %s680, %s683
      %p689 = scmp.eq.s32.totalorder %s86, 0
      %p690 = por %p688, %p689
      %p691 = scmp.ne.s32.totalorder %s680, %s683
      %p692 = scmp.eq.s32.totalorder %s91, 1
      %p693 = por %p691, %p692
      %p694 = scmp.ne.s32.totalorder %s683, %s684
      %p695 = scmp.eq.s32.totalorder %s91, 0
      %p696 = por %p694, %p695
      %p697 = scmp.ne.s32.totalorder %s683, %s684
      %p698 = scmp.eq.s32.totalorder %s92, 1
      %p699 = por %p697, %p698
      %p701 = scmp.ne.s32.totalorder %s684, %s700
      %p702 = scmp.eq.s32.totalorder %s92, 0
      %p703 = por %p701, %p702
      %s704 = ssub.s32 %s94, %s101
      %p705 = scmp.eq.s32.totalorder %s704, 0
      %s707 = sadd.s32 %s706, 1
      %s708 = scalar_select %p705, %s706, %s707
      %p711 = pneg %p705
      %p712 = scmp.eq.s32.totalorder %s86, 1
      %p713 = por %p711, %p712
      %p714 = scmp.ne.s32.totalorder %s706, %s709
      %p715 = scmp.eq.s32.totalorder %s86, 0
      %p716 = por %p714, %p715
      %p717 = scmp.ne.s32.totalorder %s706, %s709
      %p718 = scmp.eq.s32.totalorder %s91, 1
      %p719 = por %p717, %p718
      %p720 = scmp.ne.s32.totalorder %s709, %s710
      %p721 = scmp.eq.s32.totalorder %s91, 0
      %p722 = por %p720, %p721
      %p723 = scmp.ne.s32.totalorder %s709, %s710
      %p724 = scmp.eq.s32.totalorder %s92, 1
      %p725 = por %p723, %p724
      %p727 = scmp.ne.s32.totalorder %s710, %s726
      %p728 = scmp.eq.s32.totalorder %s92, 0
      %p729 = por %p727, %p728
      %s730 = ssub.s32 %s94, %s101
      %p731 = scmp.eq.s32.totalorder %s730, 0
      %s733 = sadd.s32 %s732, 1
      %s734 = scalar_select %p731, %s732, %s733
      %p737 = pneg %p731
      %p738 = scmp.eq.s32.totalorder %s86, 1
      %p739 = por %p737, %p738
      %p740 = scmp.ne.s32.totalorder %s732, %s735
      %p741 = scmp.eq.s32.totalorder %s86, 0
      %p742 = por %p740, %p741
      %p743 = scmp.ne.s32.totalorder %s732, %s735
      %p744 = scmp.eq.s32.totalorder %s91, 1
      %p745 = por %p743, %p744
      %p746 = scmp.ne.s32.totalorder %s735, %s736
      %p747 = scmp.eq.s32.totalorder %s91, 0
      %p748 = por %p746, %p747
      %p749 = scmp.ne.s32.totalorder %s735, %s736
      %p750 = scmp.eq.s32.totalorder %s92, 1
      %p751 = por %p749, %p750
      %p753 = scmp.ne.s32.totalorder %s736, %s752
      %p754 = scmp.eq.s32.totalorder %s92, 0
      %p755 = por %p753, %p754
      %s756 = ssub.s32 %s94, %s101
      %p757 = scmp.eq.s32.totalorder %s756, 0
      %s759 = sadd.s32 %s758, 1
      %s760 = scalar_select %p757, %s758, %s759
      %p763 = pneg %p757
      %p764 = scmp.eq.s32.totalorder %s86, 1
      %p765 = por %p763, %p764
      %p766 = scmp.ne.s32.totalorder %s758, %s761
      %p767 = scmp.eq.s32.totalorder %s86, 0
      %p768 = por %p766, %p767
      %p769 = scmp.ne.s32.totalorder %s758, %s761
      %p770 = scmp.eq.s32.totalorder %s91, 1
      %p771 = por %p769, %p770
      %p772 = scmp.ne.s32.totalorder %s761, %s762
      %p773 = scmp.eq.s32.totalorder %s91, 0
      %p774 = por %p772, %p773
      %p775 = scmp.ne.s32.totalorder %s761, %s762
      %p776 = scmp.eq.s32.totalorder %s92, 1
      %p777 = por %p775, %p776
      %p779 = scmp.ne.s32.totalorder %s762, %s778
      %p780 = scmp.eq.s32.totalorder %s92, 0
      %p781 = por %p779, %p780
      %s782 = ssub.s32 %s94, %s101
      %p783 = scmp.eq.s32.totalorder %s782, 0
      %s785 = sadd.s32 %s784, 1
      %s786 = scalar_select %p783, %s784, %s785
      %p789 = pneg %p783
      %p790 = scmp.eq.s32.totalorder %s86, 1
      %p791 = por %p789, %p790
      %p792 = scmp.ne.s32.totalorder %s784, %s787
      %p793 = scmp.eq.s32.totalorder %s86, 0
      %p794 = por %p792, %p793
      %p795 = scmp.ne.s32.totalorder %s784, %s787
      %p796 = scmp.eq.s32.totalorder %s91, 1
      %p797 = por %p795, %p796
      %p798 = scmp.ne.s32.totalorder %s787, %s788
      %p799 = scmp.eq.s32.totalorder %s91, 0
      %p800 = por %p798, %p799
      %p801 = scmp.ne.s32.totalorder %s787, %s788
      %p802 = scmp.eq.s32.totalorder %s92, 1
      %p803 = por %p801, %p802
      %p805 = scmp.ne.s32.totalorder %s788, %s804
      %p806 = scmp.eq.s32.totalorder %s92, 0
      %p807 = por %p805, %p806
      %s808 = ssub.s32 %s94, %s101
      %p809 = scmp.eq.s32.totalorder %s808, 0
      %s811 = sadd.s32 %s810, 1
      %s812 = scalar_select %p809, %s810, %s811
      %p815 = pneg %p809
      %p816 = scmp.eq.s32.totalorder %s86, 1
      %p817 = por %p815, %p816
      %p818 = scmp.ne.s32.totalorder %s810, %s813
      %p819 = scmp.eq.s32.totalorder %s86, 0
      %p820 = por %p818, %p819
      %p821 = scmp.ne.s32.totalorder %s810, %s813
      %p822 = scmp.eq.s32.totalorder %s91, 1
      %p823 = por %p821, %p822
      %p824 = scmp.ne.s32.totalorder %s813, %s814
      %p825 = scmp.eq.s32.totalorder %s91, 0
      %p826 = por %p824, %p825
      %p827 = scmp.ne.s32.totalorder %s813, %s814
      %p828 = scmp.eq.s32.totalorder %s92, 1
      %p829 = por %p827, %p828
      %p831 = scmp.ne.s32.totalorder %s814, %s830
      %p832 = scmp.eq.s32.totalorder %s92, 0
      %p833 = por %p831, %p832
      %s834 = ssub.s32 %s94, %s101
      %p835 = scmp.eq.s32.totalorder %s834, 0
      %s837 = sadd.s32 %s836, 1
      %s838 = scalar_select %p835, %s836, %s837
      %p841 = pneg %p835
      %p842 = scmp.eq.s32.totalorder %s86, 1
      %p843 = por %p841, %p842
      %p844 = scmp.ne.s32.totalorder %s836, %s839
      %p845 = scmp.eq.s32.totalorder %s86, 0
      %p846 = por %p844, %p845
      %p847 = scmp.ne.s32.totalorder %s836, %s839
      %p848 = scmp.eq.s32.totalorder %s91, 1
      %p849 = por %p847, %p848
      %p850 = scmp.ne.s32.totalorder %s839, %s840
      %p851 = scmp.eq.s32.totalorder %s91, 0
      %p852 = por %p850, %p851
      %p853 = scmp.ne.s32.totalorder %s839, %s840
      %p854 = scmp.eq.s32.totalorder %s92, 1
      %p855 = por %p853, %p854
      %p857 = scmp.ne.s32.totalorder %s840, %s856
      %p858 = scmp.eq.s32.totalorder %s92, 0
      %p859 = por %p857, %p858
      %s860 = ssub.s32 %s93, %s105
      %p861 = scmp.eq.s32.totalorder %s860, 0
      %s863 = sadd.s32 %s862, 1
      %s864 = scalar_select %p861, %s862, %s863
      %p867 = pneg %p861
      %p868 = scmp.eq.s32.totalorder %s86, 1
      %p869 = por %p867, %p868
      %p870 = scmp.ne.s32.totalorder %s862, %s865
      %p871 = scmp.eq.s32.totalorder %s86, 0
      %p872 = por %p870, %p871
      %p873 = scmp.ne.s32.totalorder %s862, %s865
      %p874 = scmp.eq.s32.totalorder %s91, 1
      %p875 = por %p873, %p874
      %p876 = scmp.ne.s32.totalorder %s865, %s866
      %p877 = scmp.eq.s32.totalorder %s91, 0
      %p878 = por %p876, %p877
      %p879 = scmp.ne.s32.totalorder %s865, %s866
      %p880 = scmp.eq.s32.totalorder %s92, 1
      %p881 = por %p879, %p880
      %p883 = scmp.ne.s32.totalorder %s866, %s882
      %p884 = scmp.eq.s32.totalorder %s92, 0
      %p885 = por %p883, %p884
      %p886 = scmp.le.s32.totalorder 1, %s86
      %p887 = scmp.lt.s32.totalorder %s86, 3
      %p888 = pnand %p886, %p887
      %p889 = pneg %p888
      // Predicated region
      $region9: #{tpu_custom_call.1} parent=5 // pred_check
        _
      $region10: #{tpu_custom_call.1} parent=5 // pred_check_branch
        %891 = sbr.rel (%p888) target = $region12
      $region11: #{tpu_custom_call.1} parent=5 // pred_region
        %s892 = ssub.s32 %s86, 1
        // Predicated region
        $region13: #{tpu_custom_call.1} parent=11 // pred_check
          %p893 = pneg %p124
        $region14: #{tpu_custom_call.1} parent=11 // pred_check_branch
          %895 = sbr.rel (%p893) target = $region16
        $region15: #{tpu_custom_call.1} parent=11 // pred_region
          %s896 = smul.u32 2, %s95
          %s898 = ssub.s32 128, 128
          %899 = vsyncadd [#allocation4], %s898
          %s900 = smul.addr %s896, 64
          %s901 = scalar_lea.hbm %s1, %s900
          %s902 = sshll.u32 [#allocation3], 4
          %s903 = int_to_ptr.vmem [resolvable:$true] %s902
          %908 = dma.hbm_to_vmem [thread:$0]  %s901, 128, %s903, [#allocation4], 64, 64, 4
        $region16: #{tpu_custom_call.1} parent=11 // pred_fallthru
          _
        // Predicated region
        $region17: #{tpu_custom_call.1} parent=11 // pred_check
          %p909 = pneg %p150
        $region18: #{tpu_custom_call.1} parent=11 // pred_check_branch
          %911 = sbr.rel (%p909) target = $region20
        $region19: #{tpu_custom_call.1} parent=11 // pred_region
          %s912 = smul.u32 2, %s95
          %s914 = ssub.s32 256, 256
          %915 = vsyncadd [#allocation7], %s914
          %s916 = smul.addr %s912, 2
          %s917 = smul.addr %s916, 64
          %s918 = scalar_lea.hbm %s3, %s917
          %s919 = sshll.u32 [#allocation6], 4
          %s920 = int_to_ptr.vmem [resolvable:$true] %s919
          %925 = dma.hbm_to_vmem [thread:$0]  %s918, 256, %s920, [#allocation7], 64, 64, 4
        $region20: #{tpu_custom_call.1} parent=11 // pred_fallthru
          _
        // Predicated region
        $region21: #{tpu_custom_call.1} parent=11 // pred_check
          %p926 = pneg %p176
        $region22: #{tpu_custom_call.1} parent=11 // pred_check_branch
          %928 = sbr.rel (%p926) target = $region24
        $region23: #{tpu_custom_call.1} parent=11 // pred_region
          %s929 = smul.u32 2, %s95
          %s931 = ssub.s32 32, 32
          %932 = vsyncadd [#allocation7], %s931
          %s933 = smul.addr %s929, 16
          %s934 = scalar_lea.hbm %s5, %s933
          %s935 = sshll.u32 [#allocation8], 4
          %s936 = int_to_ptr.vmem [resolvable:$true] %s935
          %941 = dma.hbm_to_vmem [thread:$0]  %s934, 32, %s936, [#allocation7], 16, 16, 1
        $region24: #{tpu_custom_call.1} parent=11 // pred_fallthru
          _
      $region12: #{tpu_custom_call.1} parent=5 // pred_fallthru
        _
      %p942 = scmp.lt.s32.totalorder %s86, 2
      // Predicated region
      $region25: #{tpu_custom_call.1} parent=5 // pred_check
        %p943 = pneg %p942
      $region26: #{tpu_custom_call.1} parent=5 // pred_check_branch
        %945 = sbr.rel (%p943) target = $region28
      $region27: #{tpu_custom_call.1} parent=5 // pred_region
        // Predicated region
        $region29: #{tpu_custom_call.1} parent=27 // pred_check
          %p946 = pneg %p196
        $region30: #{tpu_custom_call.1} parent=27 // pred_check_branch
          %948 = sbr.rel (%p946) target = $region32
        $region31: #{tpu_custom_call.1} parent=27 // pred_region
          %p949 = scmp.lt.s32.totalorder %s94, 1
          %s950 = scalar_select %p949, %s94, 1
          %s951 = smul.addr %s950, 4
          %s952 = smul.addr %s951, 4
          %s953 = scalar_lea.vmem %s7, %s952
        $region32: #{tpu_custom_call.1} parent=27 // pred_fallthru
          _
        // Predicated region
        $region33: #{tpu_custom_call.1} parent=27 // pred_check
          %p954 = pneg %p222
        $region34: #{tpu_custom_call.1} parent=27 // pred_check_branch
          %956 = sbr.rel (%p954) target = $region36
        $region35: #{tpu_custom_call.1} parent=27 // pred_region
          %s957 = sand.u32 %s86, 1
          %s958 = scalar_lea.sflag [#allocation10], %s957
          %s959 = sand.u32 %s212, 1
          %s960 = scalar_lea.vmem [#allocation9], %s959
          %s962 = ssub.s32 16, 16
          %963 = vsyncadd %s958, %s962
          %s964 = smul.addr %s94, 16
          %s965 = scalar_lea.hbm %s9, %s964
          %s967 = sshll.u32 %s960, 4
          %s968 = int_to_ptr.vmem [resolvable:$true] %s967
          %970 = dma.hbm_to_vmem [thread:$0]  %s965, 16, %s968, %s958
        $region36: #{tpu_custom_call.1} parent=27 // pred_fallthru
          _
        // Predicated region
        $region37: #{tpu_custom_call.1} parent=27 // pred_check
          %p971 = pneg %p248
        $region38: #{tpu_custom_call.1} parent=27 // pred_check_branch
          %973 = sbr.rel (%p971) target = $region40
        $region39: #{tpu_custom_call.1} parent=27 // pred_region
          %p974 = scmp.lt.s32.totalorder %s94, 1
          %s975 = scalar_select %p974, %s94, 1
          %s976 = smul.addr %s975, 4
          %s977 = smul.addr %s976, 4
          %s978 = scalar_lea.vmem %s11, %s977
        $region40: #{tpu_custom_call.1} parent=27 // pred_fallthru
          _
        // Predicated region
        $region41: #{tpu_custom_call.1} parent=27 // pred_check
          %p979 = pneg %p274
        $region42: #{tpu_custom_call.1} parent=27 // pred_check_branch
          %981 = sbr.rel (%p979) target = $region44
        $region43: #{tpu_custom_call.1} parent=27 // pred_region
          %s982 = sand.u32 %s86, 1
          %s983 = scalar_lea.sflag [#allocation10], %s982
          %s984 = sand.u32 %s264, 1
          %s985 = scalar_lea.vmem [#allocation11], %s984
          %s987 = ssub.s32 16, 16
          %988 = vsyncadd %s983, %s987
          %s989 = smul.addr %s94, 16
          %s990 = scalar_lea.hbm %s13, %s989
          %s992 = sshll.u32 %s985, 4
          %s993 = int_to_ptr.vmem [resolvable:$true] %s992
          %995 = dma.hbm_to_vmem [thread:$0]  %s990, 16, %s993, %s983
        $region44: #{tpu_custom_call.1} parent=27 // pred_fallthru
          _
        // Predicated region
        $region45: #{tpu_custom_call.1} parent=27 // pred_check
          %p996 = pneg %p300
        $region46: #{tpu_custom_call.1} parent=27 // pred_check_branch
          %998 = sbr.rel (%p996) target = $region48
        $region47: #{tpu_custom_call.1} parent=27 // pred_region
          %p999 = scmp.lt.s32.totalorder %s94, 1
          %s1000 = scalar_select %p999, %s94, 1
          %s1001 = smul.addr %s1000, 4
          %s1002 = smul.addr %s1001, 4
          %s1003 = scalar_lea.vmem %s15, %s1002
        $region48: #{tpu_custom_call.1} parent=27 // pred_fallthru
          _
        // Predicated region
        $region49: #{tpu_custom_call.1} parent=27 // pred_check
          %p1004 = pneg %p326
        $region50: #{tpu_custom_call.1} parent=27 // pred_check_branch
          %1006 = sbr.rel (%p1004) target = $region52
        $region51: #{tpu_custom_call.1} parent=27 // pred_region
          %s1007 = sand.u32 %s86, 1
          %s1008 = scalar_lea.sflag [#allocation13], %s1007
          %s1009 = sand.u32 %s316, 1
          %s1010 = scalar_lea.vmem [#allocation12], %s1009
          %s1012 = ssub.s32 16, 16
          %1013 = vsyncadd %s1008, %s1012
          %s1014 = smul.addr %s94, 16
          %s1015 = scalar_lea.hbm %s17, %s1014
          %s1017 = sshll.u32 %s1010, 4
          %s1018 = int_to_ptr.vmem [resolvable:$true] %s1017
          %1020 = dma.hbm_to_vmem [thread:$0]  %s1015, 16, %s1018, %s1008
        $region52: #{tpu_custom_call.1} parent=27 // pred_fallthru
          _
        // Predicated region
        $region53: #{tpu_custom_call.1} parent=27 // pred_check
          %p1021 = pneg %p352
        $region54: #{tpu_custom_call.1} parent=27 // pred_check_branch
          %1023 = sbr.rel (%p1021) target = $region56
        $region55: #{tpu_custom_call.1} parent=27 // pred_region
          %p1024 = scmp.lt.s32.totalorder %s94, 1
          %s1025 = scalar_select %p1024, %s94, 1
          %s1026 = smul.addr %s1025, 4
          %s1027 = smul.addr %s1026, 4
          %s1028 = scalar_lea.vmem %s19, %s1027
        $region56: #{tpu_custom_call.1} parent=27 // pred_fallthru
          _
        // Predicated region
        $region57: #{tpu_custom_call.1} parent=27 // pred_check
          %p1029 = pneg %p378
        $region58: #{tpu_custom_call.1} parent=27 // pred_check_branch
          %1031 = sbr.rel (%p1029) target = $region60
        $region59: #{tpu_custom_call.1} parent=27 // pred_region
          %s1032 = sand.u32 %s86, 1
          %s1033 = scalar_lea.sflag [#allocation13], %s1032
          %s1034 = sand.u32 %s368, 1
          %s1035 = scalar_lea.vmem [#allocation14], %s1034
          %s1037 = ssub.s32 16, 16
          %1038 = vsyncadd %s1033, %s1037
          %s1039 = smul.addr %s94, 16
          %s1040 = scalar_lea.hbm %s21, %s1039
          %s1042 = sshll.u32 %s1035, 4
          %s1043 = int_to_ptr.vmem [resolvable:$true] %s1042
          %1045 = dma.hbm_to_vmem [thread:$0]  %s1040, 16, %s1043, %s1033
        $region60: #{tpu_custom_call.1} parent=27 // pred_fallthru
          _
        // Predicated region
        $region61: #{tpu_custom_call.1} parent=27 // pred_check
          %p1046 = pneg %p404
        $region62: #{tpu_custom_call.1} parent=27 // pred_check_branch
          %1048 = sbr.rel (%p1046) target = $region64
        $region63: #{tpu_custom_call.1} parent=27 // pred_region
          %s1049 = sand.u32 %s86, 1
          %s1050 = scalar_lea.sflag [#allocation16], %s1049
          %s1051 = sand.u32 %s394, 1
          %s1052 = smul.addr %s1051, 16
          %s1053 = scalar_lea.vmem [#allocation15], %s1052
          %s1055 = ssub.s32 256, 256
          %1056 = vsyncadd %s1050, %s1055
          %s1057 = smul.addr %s94, 4
          %s1058 = smul.addr %s1057, 64
          %s1059 = scalar_lea.hbm %s23, %s1058
          %s1060 = sshll.u32 %s1053, 4
          %s1061 = int_to_ptr.vmem [resolvable:$true] %s1060
          %1066 = dma.hbm_to_vmem [thread:$0]  %s1059, 256, %s1061, %s1050, 64, 64, 4
        $region64: #{tpu_custom_call.1} parent=27 // pred_fallthru
          _
        // Predicated region
        $region65: #{tpu_custom_call.1} parent=27 // pred_check
          %p1067 = pneg %p430
        $region66: #{tpu_custom_call.1} parent=27 // pred_check_branch
          %1069 = sbr.rel (%p1067) target = $region68
        $region67: #{tpu_custom_call.1} parent=27 // pred_region
          %s1070 = sand.u32 %s86, 1
          %s1071 = scalar_lea.sflag [#allocation16], %s1070
          %s1072 = sand.u32 %s420, 1
          %s1073 = scalar_lea.vmem [#allocation17], %s1072
          %s1075 = ssub.s32 16, 16
          %1076 = vsyncadd %s1071, %s1075
          %s1077 = smul.addr %s94, 16
          %s1078 = scalar_lea.hbm %s25, %s1077
          %s1080 = sshll.u32 %s1073, 4
          %s1081 = int_to_ptr.vmem [resolvable:$true] %s1080
          %1083 = dma.hbm_to_vmem [thread:$0]  %s1078, 16, %s1081, %s1071
        $region68: #{tpu_custom_call.1} parent=27 // pred_fallthru
          _
        // Predicated region
        $region69: #{tpu_custom_call.1} parent=27 // pred_check
          %p1084 = pneg %p456
        $region70: #{tpu_custom_call.1} parent=27 // pred_check_branch
          %1086 = sbr.rel (%p1084) target = $region72
        $region71: #{tpu_custom_call.1} parent=27 // pred_region
          %s1087 = sand.u32 %s86, 1
          %s1088 = scalar_lea.sflag [#allocation19], %s1087
          %s1089 = sand.u32 %s446, 1
          %s1090 = smul.addr %s1089, 16
          %s1091 = scalar_lea.vmem [#allocation18], %s1090
          %s1093 = ssub.s32 256, 256
          %1094 = vsyncadd %s1088, %s1093
          %s1095 = smul.addr %s94, 4
          %s1096 = smul.addr %s1095, 64
          %s1097 = scalar_lea.hbm %s27, %s1096
          %s1098 = sshll.u32 %s1091, 4
          %s1099 = int_to_ptr.vmem [resolvable:$true] %s1098
          %1104 = dma.hbm_to_vmem [thread:$0]  %s1097, 256, %s1099, %s1088, 64, 64, 4
        $region72: #{tpu_custom_call.1} parent=27 // pred_fallthru
          _
        // Predicated region
        $region73: #{tpu_custom_call.1} parent=27 // pred_check
          %p1105 = pneg %p482
        $region74: #{tpu_custom_call.1} parent=27 // pred_check_branch
          %1107 = sbr.rel (%p1105) target = $region76
        $region75: #{tpu_custom_call.1} parent=27 // pred_region
          %s1108 = sand.u32 %s86, 1
          %s1109 = scalar_lea.sflag [#allocation19], %s1108
          %s1110 = sand.u32 %s472, 1
          %s1111 = scalar_lea.vmem [#allocation20], %s1110
          %s1113 = ssub.s32 16, 16
          %1114 = vsyncadd %s1109, %s1113
          %s1115 = smul.addr %s94, 16
          %s1116 = scalar_lea.hbm %s29, %s1115
          %s1118 = sshll.u32 %s1111, 4
          %s1119 = int_to_ptr.vmem [resolvable:$true] %s1118
          %1121 = dma.hbm_to_vmem [thread:$0]  %s1116, 16, %s1119, %s1109
        $region76: #{tpu_custom_call.1} parent=27 // pred_fallthru
          _
        // Predicated region
        $region77: #{tpu_custom_call.1} parent=27 // pred_check
          %p1122 = pneg %p508
        $region78: #{tpu_custom_call.1} parent=27 // pred_check_branch
          %1124 = sbr.rel (%p1122) target = $region80
        $region79: #{tpu_custom_call.1} parent=27 // pred_region
          %s1125 = sand.u32 %s86, 1
          %s1126 = scalar_lea.sflag [#allocation22], %s1125
          %s1127 = sand.u32 %s498, 1
          %s1128 = smul.addr %s1127, 16
          %s1129 = scalar_lea.vmem [#allocation21], %s1128
          %s1131 = ssub.s32 256, 256
          %1132 = vsyncadd %s1126, %s1131
          %s1133 = smul.addr %s94, 4
          %s1134 = smul.addr %s1133, 64
          %s1135 = scalar_lea.hbm %s31, %s1134
          %s1136 = sshll.u32 %s1129, 4
          %s1137 = int_to_ptr.vmem [resolvable:$true] %s1136
          %1142 = dma.hbm_to_vmem [thread:$0]  %s1135, 256, %s1137, %s1126, 64, 64, 4
        $region80: #{tpu_custom_call.1} parent=27 // pred_fallthru
          _
        // Predicated region
        $region81: #{tpu_custom_call.1} parent=27 // pred_check
          %p1143 = pneg %p534
        $region82: #{tpu_custom_call.1} parent=27 // pred_check_branch
          %1145 = sbr.rel (%p1143) target = $region84
        $region83: #{tpu_custom_call.1} parent=27 // pred_region
          %s1146 = sand.u32 %s86, 1
          %s1147 = scalar_lea.sflag [#allocation22], %s1146
          %s1148 = sand.u32 %s524, 1
          %s1149 = scalar_lea.vmem [#allocation23], %s1148
          %s1151 = ssub.s32 16, 16
          %1152 = vsyncadd %s1147, %s1151
          %s1153 = smul.addr %s94, 16
          %s1154 = scalar_lea.hbm %s33, %s1153
          %s1156 = sshll.u32 %s1149, 4
          %s1157 = int_to_ptr.vmem [resolvable:$true] %s1156
          %1159 = dma.hbm_to_vmem [thread:$0]  %s1154, 16, %s1157, %s1147
        $region84: #{tpu_custom_call.1} parent=27 // pred_fallthru
          _
        // Predicated region
        $region85: #{tpu_custom_call.1} parent=27 // pred_check
          %p1160 = pneg %p560
        $region86: #{tpu_custom_call.1} parent=27 // pred_check_branch
          %1162 = sbr.rel (%p1160) target = $region88
        $region87: #{tpu_custom_call.1} parent=27 // pred_region
          %s1163 = sand.u32 %s86, 1
          %s1164 = scalar_lea.sflag [#allocation25], %s1163
          %s1165 = sand.u32 %s550, 1
          %s1166 = smul.addr %s1165, 16
          %s1167 = scalar_lea.vmem [#allocation24], %s1166
          %s1169 = ssub.s32 256, 256
          %1170 = vsyncadd %s1164, %s1169
          %s1171 = smul.addr %s94, 4
          %s1172 = smul.addr %s1171, 64
          %s1173 = scalar_lea.hbm %s35, %s1172
          %s1174 = sshll.u32 %s1167, 4
          %s1175 = int_to_ptr.vmem [resolvable:$true] %s1174
          %1180 = dma.hbm_to_vmem [thread:$0]  %s1173, 256, %s1175, %s1164, 64, 64, 4
        $region88: #{tpu_custom_call.1} parent=27 // pred_fallthru
          _
        // Predicated region
        $region89: #{tpu_custom_call.1} parent=27 // pred_check
          %p1181 = pneg %p586
        $region90: #{tpu_custom_call.1} parent=27 // pred_check_branch
          %1183 = sbr.rel (%p1181) target = $region92
        $region91: #{tpu_custom_call.1} parent=27 // pred_region
          %p1184 = scmp.lt.s32.totalorder %s94, 1
          %s1185 = scalar_select %p1184, %s94, 1
          %s1186 = scalar_lea.vmem %s37, %s1185
        $region92: #{tpu_custom_call.1} parent=27 // pred_fallthru
          _
        // Predicated region
        $region93: #{tpu_custom_call.1} parent=27 // pred_check
          %p1187 = pneg %p612
        $region94: #{tpu_custom_call.1} parent=27 // pred_check_branch
          %1189 = sbr.rel (%p1187) target = $region96
        $region95: #{tpu_custom_call.1} parent=27 // pred_region
          %s1190 = sand.u32 %s86, 1
          %s1191 = scalar_lea.sflag [#allocation25], %s1190
          %s1192 = sand.u32 %s602, 1
          %s1193 = smul.addr %s1192, 16
          %s1194 = scalar_lea.vmem [#allocation26], %s1193
          %s1196 = ssub.s32 256, 256
          %1197 = vsyncadd %s1191, %s1196
          %s1198 = smul.addr %s94, 4
          %s1199 = smul.addr %s1198, 64
          %s1200 = scalar_lea.hbm %s39, %s1199
          %s1201 = sshll.u32 %s1194, 4
          %s1202 = int_to_ptr.vmem [resolvable:$true] %s1201
          %1207 = dma.hbm_to_vmem [thread:$0]  %s1200, 256, %s1202, %s1191, 64, 64, 4
        $region96: #{tpu_custom_call.1} parent=27 // pred_fallthru
          _
        // Predicated region
        $region97: #{tpu_custom_call.1} parent=27 // pred_check
          %p1208 = pneg %p638
        $region98: #{tpu_custom_call.1} parent=27 // pred_check_branch
          %1210 = sbr.rel (%p1208) target = $region100
        $region99: #{tpu_custom_call.1} parent=27 // pred_region
          %p1211 = scmp.lt.s32.totalorder %s94, 1
          %s1212 = scalar_select %p1211, %s94, 1
          %s1213 = scalar_lea.vmem %s41, %s1212
        $region100: #{tpu_custom_call.1} parent=27 // pred_fallthru
          _
        // Predicated region
        $region101: #{tpu_custom_call.1} parent=27 // pred_check
          %p1214 = pneg %p664
        $region102: #{tpu_custom_call.1} parent=27 // pred_check_branch
          %1216 = sbr.rel (%p1214) target = $region104
        $region103: #{tpu_custom_call.1} parent=27 // pred_region
          %p1217 = scmp.lt.s32.totalorder %s94, 1
          %s1218 = scalar_select %p1217, %s94, 1
          %s1219 = smul.addr %s1218, 8
          %s1220 = smul.addr %s1219, 4
          %s1221 = scalar_lea.vmem %s43, %s1220
        $region104: #{tpu_custom_call.1} parent=27 // pred_fallthru
          _
        // Predicated region
        $region105: #{tpu_custom_call.1} parent=27 // pred_check
          %p1222 = pneg %p690
        $region106: #{tpu_custom_call.1} parent=27 // pred_check_branch
          %1224 = sbr.rel (%p1222) target = $region108
        $region107: #{tpu_custom_call.1} parent=27 // pred_region
          %p1225 = scmp.lt.s32.totalorder %s94, 1
          %s1226 = scalar_select %p1225, %s94, 1
          %s1227 = scalar_lea.vmem %s45, %s1226
        $region108: #{tpu_custom_call.1} parent=27 // pred_fallthru
          _
        // Predicated region
        $region109: #{tpu_custom_call.1} parent=27 // pred_check
          %p1228 = pneg %p716
        $region110: #{tpu_custom_call.1} parent=27 // pred_check_branch
          %1230 = sbr.rel (%p1228) target = $region112
        $region111: #{tpu_custom_call.1} parent=27 // pred_region
          %p1231 = scmp.lt.s32.totalorder %s94, 1
          %s1232 = scalar_select %p1231, %s94, 1
          %s1233 = scalar_lea.vmem %s47, %s1232
        $region112: #{tpu_custom_call.1} parent=27 // pred_fallthru
          _
        // Predicated region
        $region113: #{tpu_custom_call.1} parent=27 // pred_check
          %p1234 = pneg %p742
        $region114: #{tpu_custom_call.1} parent=27 // pred_check_branch
          %1236 = sbr.rel (%p1234) target = $region116
        $region115: #{tpu_custom_call.1} parent=27 // pred_region
          %p1237 = scmp.lt.s32.totalorder %s94, 1
          %s1238 = scalar_select %p1237, %s94, 1
          %s1239 = scalar_lea.vmem %s49, %s1238
        $region116: #{tpu_custom_call.1} parent=27 // pred_fallthru
          _
        // Predicated region
        $region117: #{tpu_custom_call.1} parent=27 // pred_check
          %p1240 = pneg %p768
        $region118: #{tpu_custom_call.1} parent=27 // pred_check_branch
          %1242 = sbr.rel (%p1240) target = $region120
        $region119: #{tpu_custom_call.1} parent=27 // pred_region
          %p1243 = scmp.lt.s32.totalorder %s94, 1
          %s1244 = scalar_select %p1243, %s94, 1
          %s1245 = scalar_lea.vmem %s51, %s1244
        $region120: #{tpu_custom_call.1} parent=27 // pred_fallthru
          _
        // Predicated region
        $region121: #{tpu_custom_call.1} parent=27 // pred_check
          %p1246 = pneg %p794
        $region122: #{tpu_custom_call.1} parent=27 // pred_check_branch
          %1248 = sbr.rel (%p1246) target = $region124
        $region123: #{tpu_custom_call.1} parent=27 // pred_region
          %p1249 = scmp.lt.s32.totalorder %s94, 1
          %s1250 = scalar_select %p1249, %s94, 1
          %s1251 = scalar_lea.vmem %s53, %s1250
        $region124: #{tpu_custom_call.1} parent=27 // pred_fallthru
          _
        // Predicated region
        $region125: #{tpu_custom_call.1} parent=27 // pred_check
          %p1252 = pneg %p820
        $region126: #{tpu_custom_call.1} parent=27 // pred_check_branch
          %1254 = sbr.rel (%p1252) target = $region128
        $region127: #{tpu_custom_call.1} parent=27 // pred_region
          %p1255 = scmp.lt.s32.totalorder %s94, 1
          %s1256 = scalar_select %p1255, %s94, 1
          %s1257 = scalar_lea.vmem %s55, %s1256
        $region128: #{tpu_custom_call.1} parent=27 // pred_fallthru
          _
        // Predicated region
        $region129: #{tpu_custom_call.1} parent=27 // pred_check
          %p1258 = pneg %p846
        $region130: #{tpu_custom_call.1} parent=27 // pred_check_branch
          %1260 = sbr.rel (%p1258) target = $region132
        $region131: #{tpu_custom_call.1} parent=27 // pred_region
          %p1261 = scmp.lt.s32.totalorder %s94, 1
          %s1262 = scalar_select %p1261, %s94, 1
          %s1263 = scalar_lea.vmem %s57, %s1262
        $region132: #{tpu_custom_call.1} parent=27 // pred_fallthru
          _
      $region28: #{tpu_custom_call.1} parent=5 // pred_fallthru
        _
      %p1264 = scmp.le.s32.totalorder 1, %s86
      %p1265 = scmp.lt.s32.totalorder %s86, 3
      %p1266 = pnand %p1264, %p1265
      %p1267 = pneg %p1266
      // Predicated region
      $region133: #{tpu_custom_call.1} parent=5 // pred_check
        _
      $region134: #{tpu_custom_call.1} parent=5 // pred_check_branch
        %1269 = sbr.rel (%p1266) target = $region136
      $region135: #{tpu_custom_call.1} parent=5 // pred_region
        %s1270 = ssub.s32 %s86, 1
        // Predicated region
        $region137: #{tpu_custom_call.1} parent=135 // pred_check
          %p1271 = pneg %p124
        $region138: #{tpu_custom_call.1} parent=135 // pred_check_branch
          %1273 = sbr.rel (%p1271) target = $region140
        $region139: #{tpu_custom_call.1} parent=135 // pred_region
          %1274 = dma.done [#allocation4], 128
        $region140: #{tpu_custom_call.1} parent=135 // pred_fallthru
          _
        // Predicated region
        $region141: #{tpu_custom_call.1} parent=135 // pred_check
          %p1275 = pneg %p150
        $region142: #{tpu_custom_call.1} parent=135 // pred_check_branch
          %1277 = sbr.rel (%p1275) target = $region144
        $region143: #{tpu_custom_call.1} parent=135 // pred_region
          %1278 = dma.done [#allocation7], 256
        $region144: #{tpu_custom_call.1} parent=135 // pred_fallthru
          _
        // Predicated region
        $region145: #{tpu_custom_call.1} parent=135 // pred_check
          %p1279 = pneg %p176
        $region146: #{tpu_custom_call.1} parent=135 // pred_check_branch
          %1281 = sbr.rel (%p1279) target = $region148
        $region147: #{tpu_custom_call.1} parent=135 // pred_region
          %1282 = dma.done [#allocation7], 32
        $region148: #{tpu_custom_call.1} parent=135 // pred_fallthru
          _
        %s1283 = sand.u32 %s91, 1
        %s1284 = scalar_lea.sflag [#allocation10], %s1283
        %s1285 = sand.u32 %s215, 1
        %s1286 = scalar_lea.vmem [#allocation9], %s1285
        // Predicated region
        $region149: #{tpu_custom_call.1} parent=135 // pred_check
          %p1287 = pneg %p228
        $region150: #{tpu_custom_call.1} parent=135 // pred_check_branch
          %1289 = sbr.rel (%p1287) target = $region152
        $region151: #{tpu_custom_call.1} parent=135 // pred_region
          %1290 = dma.done %s1284, 16
        $region152: #{tpu_custom_call.1} parent=135 // pred_fallthru
          _
        %s1291 = sand.u32 %s91, 1
        %s1292 = scalar_lea.sflag [#allocation10], %s1291
        %s1293 = sand.u32 %s267, 1
        %s1294 = scalar_lea.vmem [#allocation11], %s1293
        // Predicated region
        $region153: #{tpu_custom_call.1} parent=135 // pred_check
          %p1295 = pneg %p280
        $region154: #{tpu_custom_call.1} parent=135 // pred_check_branch
          %1297 = sbr.rel (%p1295) target = $region156
        $region155: #{tpu_custom_call.1} parent=135 // pred_region
          %1298 = dma.done %s1292, 16
        $region156: #{tpu_custom_call.1} parent=135 // pred_fallthru
          _
        %s1299 = sand.u32 %s91, 1
        %s1300 = scalar_lea.sflag [#allocation13], %s1299
        %s1301 = sand.u32 %s319, 1
        %s1302 = scalar_lea.vmem [#allocation12], %s1301
        // Predicated region
        $region157: #{tpu_custom_call.1} parent=135 // pred_check
          %p1303 = pneg %p332
        $region158: #{tpu_custom_call.1} parent=135 // pred_check_branch
          %1305 = sbr.rel (%p1303) target = $region160
        $region159: #{tpu_custom_call.1} parent=135 // pred_region
          %1306 = dma.done %s1300, 16
        $region160: #{tpu_custom_call.1} parent=135 // pred_fallthru
          _
        %s1307 = sand.u32 %s91, 1
        %s1308 = scalar_lea.sflag [#allocation13], %s1307
        %s1309 = sand.u32 %s371, 1
        %s1310 = scalar_lea.vmem [#allocation14], %s1309
        // Predicated region
        $region161: #{tpu_custom_call.1} parent=135 // pred_check
          %p1311 = pneg %p384
        $region162: #{tpu_custom_call.1} parent=135 // pred_check_branch
          %1313 = sbr.rel (%p1311) target = $region164
        $region163: #{tpu_custom_call.1} parent=135 // pred_region
          %1314 = dma.done %s1308, 16
        $region164: #{tpu_custom_call.1} parent=135 // pred_fallthru
          _
        %s1315 = sand.u32 %s91, 1
        %s1316 = scalar_lea.sflag [#allocation16], %s1315
        %s1317 = sand.u32 %s397, 1
        %s1318 = smul.addr %s1317, 16
        %s1319 = scalar_lea.vmem [#allocation15], %s1318
        // Predicated region
        $region165: #{tpu_custom_call.1} parent=135 // pred_check
          %p1320 = pneg %p410
        $region166: #{tpu_custom_call.1} parent=135 // pred_check_branch
          %1322 = sbr.rel (%p1320) target = $region168
        $region167: #{tpu_custom_call.1} parent=135 // pred_region
          %1323 = dma.done %s1316, 256
        $region168: #{tpu_custom_call.1} parent=135 // pred_fallthru
          _
        %s1324 = sand.u32 %s91, 1
        %s1325 = scalar_lea.sflag [#allocation16], %s1324
        %s1326 = sand.u32 %s423, 1
        %s1327 = scalar_lea.vmem [#allocation17], %s1326
        // Predicated region
        $region169: #{tpu_custom_call.1} parent=135 // pred_check
          %p1328 = pneg %p436
        $region170: #{tpu_custom_call.1} parent=135 // pred_check_branch
          %1330 = sbr.rel (%p1328) target = $region172
        $region171: #{tpu_custom_call.1} parent=135 // pred_region
          %1331 = dma.done %s1325, 16
        $region172: #{tpu_custom_call.1} parent=135 // pred_fallthru
          _
        %s1332 = sand.u32 %s91, 1
        %s1333 = scalar_lea.sflag [#allocation19], %s1332
        %s1334 = sand.u32 %s449, 1
        %s1335 = smul.addr %s1334, 16
        %s1336 = scalar_lea.vmem [#allocation18], %s1335
        // Predicated region
        $region173: #{tpu_custom_call.1} parent=135 // pred_check
          %p1337 = pneg %p462
        $region174: #{tpu_custom_call.1} parent=135 // pred_check_branch
          %1339 = sbr.rel (%p1337) target = $region176
        $region175: #{tpu_custom_call.1} parent=135 // pred_region
          %1340 = dma.done %s1333, 256
        $region176: #{tpu_custom_call.1} parent=135 // pred_fallthru
          _
        %s1341 = sand.u32 %s91, 1
        %s1342 = scalar_lea.sflag [#allocation19], %s1341
        %s1343 = sand.u32 %s475, 1
        %s1344 = scalar_lea.vmem [#allocation20], %s1343
        // Predicated region
        $region177: #{tpu_custom_call.1} parent=135 // pred_check
          %p1345 = pneg %p488
        $region178: #{tpu_custom_call.1} parent=135 // pred_check_branch
          %1347 = sbr.rel (%p1345) target = $region180
        $region179: #{tpu_custom_call.1} parent=135 // pred_region
          %1348 = dma.done %s1342, 16
        $region180: #{tpu_custom_call.1} parent=135 // pred_fallthru
          _
        %s1349 = sand.u32 %s91, 1
        %s1350 = scalar_lea.sflag [#allocation22], %s1349
        %s1351 = sand.u32 %s501, 1
        %s1352 = smul.addr %s1351, 16
        %s1353 = scalar_lea.vmem [#allocation21], %s1352
        // Predicated region
        $region181: #{tpu_custom_call.1} parent=135 // pred_check
          %p1354 = pneg %p514
        $region182: #{tpu_custom_call.1} parent=135 // pred_check_branch
          %1356 = sbr.rel (%p1354) target = $region184
        $region183: #{tpu_custom_call.1} parent=135 // pred_region
          %1357 = dma.done %s1350, 256
        $region184: #{tpu_custom_call.1} parent=135 // pred_fallthru
          _
        %s1358 = sand.u32 %s91, 1
        %s1359 = scalar_lea.sflag [#allocation22], %s1358
        %s1360 = sand.u32 %s527, 1
        %s1361 = scalar_lea.vmem [#allocation23], %s1360
        // Predicated region
        $region185: #{tpu_custom_call.1} parent=135 // pred_check
          %p1362 = pneg %p540
        $region186: #{tpu_custom_call.1} parent=135 // pred_check_branch
          %1364 = sbr.rel (%p1362) target = $region188
        $region187: #{tpu_custom_call.1} parent=135 // pred_region
          %1365 = dma.done %s1359, 16
        $region188: #{tpu_custom_call.1} parent=135 // pred_fallthru
          _
        %s1366 = sand.u32 %s91, 1
        %s1367 = scalar_lea.sflag [#allocation25], %s1366
        %s1368 = sand.u32 %s553, 1
        %s1369 = smul.addr %s1368, 16
        %s1370 = scalar_lea.vmem [#allocation24], %s1369
        // Predicated region
        $region189: #{tpu_custom_call.1} parent=135 // pred_check
          %p1371 = pneg %p566
        $region190: #{tpu_custom_call.1} parent=135 // pred_check_branch
          %1373 = sbr.rel (%p1371) target = $region192
        $region191: #{tpu_custom_call.1} parent=135 // pred_region
          %1374 = dma.done %s1367, 256
        $region192: #{tpu_custom_call.1} parent=135 // pred_fallthru
          _
        %s1375 = sand.u32 %s91, 1
        %s1376 = scalar_lea.sflag [#allocation25], %s1375
        %s1377 = sand.u32 %s605, 1
        %s1378 = smul.addr %s1377, 16
        %s1379 = scalar_lea.vmem [#allocation26], %s1378
        // Predicated region
        $region193: #{tpu_custom_call.1} parent=135 // pred_check
          %p1380 = pneg %p618
        $region194: #{tpu_custom_call.1} parent=135 // pred_check_branch
          %1382 = sbr.rel (%p1380) target = $region196
        $region195: #{tpu_custom_call.1} parent=135 // pred_region
          %1383 = dma.done %s1376, 256
        $region196: #{tpu_custom_call.1} parent=135 // pred_fallthru
          _
        %p1384 = pneg %p124
        %p1385 = pneg %p121
        %p1386 = pneg %p150
        %p1387 = pneg %p147
        %p1388 = pneg %p176
        %p1389 = pneg %p173
        %p1390 = scmp.lt.s32.totalorder %s96, 1
        %s1391 = scalar_select %p1390, %s96, 1
        %s1392 = smul.addr %s1391, 4
        %s1393 = smul.addr %s1392, 4
        %s1394 = scalar_lea.vmem %s7, %s1393
        %p1395 = pneg %p202
        %p1396 = pneg %p199
        %s1397 = sand.u32 %s91, 1
        %s1398 = scalar_lea.sflag [#allocation10], %s1397
        %s1399 = sand.u32 %s215, 1
        %s1400 = scalar_lea.vmem [#allocation9], %s1399
        %p1401 = pneg %p228
        %p1402 = pneg %p225
        %p1403 = scmp.lt.s32.totalorder %s96, 1
        %s1404 = scalar_select %p1403, %s96, 1
        %s1405 = smul.addr %s1404, 4
        %s1406 = smul.addr %s1405, 4
        %s1407 = scalar_lea.vmem %s11, %s1406
        %p1408 = pneg %p254
        %p1409 = pneg %p251
        %s1410 = sand.u32 %s91, 1
        %s1411 = scalar_lea.sflag [#allocation10], %s1410
        %s1412 = sand.u32 %s267, 1
        %s1413 = scalar_lea.vmem [#allocation11], %s1412
        %p1414 = pneg %p280
        %p1415 = pneg %p277
        %p1416 = scmp.lt.s32.totalorder %s96, 1
        %s1417 = scalar_select %p1416, %s96, 1
        %s1418 = smul.addr %s1417, 4
        %s1419 = smul.addr %s1418, 4
        %s1420 = scalar_lea.vmem %s15, %s1419
        %p1421 = pneg %p306
        %p1422 = pneg %p303
        %s1423 = sand.u32 %s91, 1
        %s1424 = scalar_lea.sflag [#allocation13], %s1423
        %s1425 = sand.u32 %s319, 1
        %s1426 = scalar_lea.vmem [#allocation12], %s1425
        %p1427 = pneg %p332
        %p1428 = pneg %p329
        %p1429 = scmp.lt.s32.totalorder %s96, 1
        %s1430 = scalar_select %p1429, %s96, 1
        %s1431 = smul.addr %s1430, 4
        %s1432 = smul.addr %s1431, 4
        %s1433 = scalar_lea.vmem %s19, %s1432
        %p1434 = pneg %p358
        %p1435 = pneg %p355
        %s1436 = sand.u32 %s91, 1
        %s1437 = scalar_lea.sflag [#allocation13], %s1436
        %s1438 = sand.u32 %s371, 1
        %s1439 = scalar_lea.vmem [#allocation14], %s1438
        %p1440 = pneg %p384
        %p1441 = pneg %p381
        %s1442 = sand.u32 %s91, 1
        %s1443 = scalar_lea.sflag [#allocation16], %s1442
        %s1444 = sand.u32 %s397, 1
        %s1445 = smul.addr %s1444, 16
        %s1446 = scalar_lea.vmem [#allocation15], %s1445
        %p1447 = pneg %p410
        %p1448 = pneg %p407
        %s1449 = sand.u32 %s91, 1
        %s1450 = scalar_lea.sflag [#allocation16], %s1449
        %s1451 = sand.u32 %s423, 1
        %s1452 = scalar_lea.vmem [#allocation17], %s1451
        %p1453 = pneg %p436
        %p1454 = pneg %p433
        %s1455 = sand.u32 %s91, 1
        %s1456 = scalar_lea.sflag [#allocation19], %s1455
        %s1457 = sand.u32 %s449, 1
        %s1458 = smul.addr %s1457, 16
        %s1459 = scalar_lea.vmem [#allocation18], %s1458
        %p1460 = pneg %p462
        %p1461 = pneg %p459
        %s1462 = sand.u32 %s91, 1
        %s1463 = scalar_lea.sflag [#allocation19], %s1462
        %s1464 = sand.u32 %s475, 1
        %s1465 = scalar_lea.vmem [#allocation20], %s1464
        %p1466 = pneg %p488
        %p1467 = pneg %p485
        %s1468 = sand.u32 %s91, 1
        %s1469 = scalar_lea.sflag [#allocation22], %s1468
        %s1470 = sand.u32 %s501, 1
        %s1471 = smul.addr %s1470, 16
        %s1472 = scalar_lea.vmem [#allocation21], %s1471
        %p1473 = pneg %p514
        %p1474 = pneg %p511
        %s1475 = sand.u32 %s91, 1
        %s1476 = scalar_lea.sflag [#allocation22], %s1475
        %s1477 = sand.u32 %s527, 1
        %s1478 = scalar_lea.vmem [#allocation23], %s1477
        %p1479 = pneg %p540
        %p1480 = pneg %p537
        %s1481 = sand.u32 %s91, 1
        %s1482 = scalar_lea.sflag [#allocation25], %s1481
        %s1483 = sand.u32 %s553, 1
        %s1484 = smul.addr %s1483, 16
        %s1485 = scalar_lea.vmem [#allocation24], %s1484
        %p1486 = pneg %p566
        %p1487 = pneg %p563
        %p1488 = scmp.lt.s32.totalorder %s96, 1
        %s1489 = scalar_select %p1488, %s96, 1
        %s1490 = scalar_lea.vmem %s37, %s1489
        %p1491 = pneg %p592
        %p1492 = pneg %p589
        %s1493 = sand.u32 %s91, 1
        %s1494 = scalar_lea.sflag [#allocation25], %s1493
        %s1495 = sand.u32 %s605, 1
        %s1496 = smul.addr %s1495, 16
        %s1497 = scalar_lea.vmem [#allocation26], %s1496
        %p1498 = pneg %p618
        %p1499 = pneg %p615
        %p1500 = scmp.lt.s32.totalorder %s96, 1
        %s1501 = scalar_select %p1500, %s96, 1
        %s1502 = scalar_lea.vmem %s41, %s1501
        %p1503 = pneg %p644
        %p1504 = pneg %p641
        %p1505 = scmp.lt.s32.totalorder %s96, 1
        %s1506 = scalar_select %p1505, %s96, 1
        %s1507 = smul.addr %s1506, 8
        %s1508 = smul.addr %s1507, 4
        %s1509 = scalar_lea.vmem %s43, %s1508
        %p1510 = pneg %p670
        %p1511 = pneg %p667
        %p1512 = scmp.lt.s32.totalorder %s96, 1
        %s1513 = scalar_select %p1512, %s96, 1
        %s1514 = scalar_lea.vmem %s45, %s1513
        %p1515 = pneg %p696
        %p1516 = pneg %p693
        %p1517 = scmp.lt.s32.totalorder %s96, 1
        %s1518 = scalar_select %p1517, %s96, 1
        %s1519 = scalar_lea.vmem %s47, %s1518
        %p1520 = pneg %p722
        %p1521 = pneg %p719
        %p1522 = scmp.lt.s32.totalorder %s96, 1
        %s1523 = scalar_select %p1522, %s96, 1
        %s1524 = scalar_lea.vmem %s49, %s1523
        %p1525 = pneg %p748
        %p1526 = pneg %p745
        %p1527 = scmp.lt.s32.totalorder %s96, 1
        %s1528 = scalar_select %p1527, %s96, 1
        %s1529 = scalar_lea.vmem %s51, %s1528
        %p1530 = pneg %p774
        %p1531 = pneg %p771
        %p1532 = scmp.lt.s32.totalorder %s96, 1
        %s1533 = scalar_select %p1532, %s96, 1
        %s1534 = scalar_lea.vmem %s53, %s1533
        %p1535 = pneg %p800
        %p1536 = pneg %p797
        %p1537 = scmp.lt.s32.totalorder %s96, 1
        %s1538 = scalar_select %p1537, %s96, 1
        %s1539 = scalar_lea.vmem %s55, %s1538
        %p1540 = pneg %p826
        %p1541 = pneg %p823
        %p1542 = scmp.lt.s32.totalorder %s96, 1
        %s1543 = scalar_select %p1542, %s96, 1
        %s1544 = scalar_lea.vmem %s57, %s1543
        %p1545 = pneg %p852
        %p1546 = pneg %p849
        %p1547 = pneg %p878
        %p1548 = pneg %p875
        %s1549 = smul.u32 2, %s95
        %s1550 = smul.u32 2, %s95
        %s1551 = smul.u32 2, %s95
        %p1552 = scmp.lt.s32.totalorder %s96, 1
        %s1553 = scalar_select %p1552, %s96, 1
        %s1554 = smul.addr %s1553, 4
        %s1555 = smul.addr %s1554, 4
        %s1556 = scalar_lea.vmem %s7, %s1555
        %p1557 = scmp.lt.s32.totalorder %s96, 1
        %s1558 = scalar_select %p1557, %s96, 1
        %s1559 = smul.addr %s1558, 4
        %s1560 = smul.addr %s1559, 4
        %s1561 = scalar_lea.vmem %s11, %s1560
        %p1562 = scmp.lt.s32.totalorder %s96, 1
        %s1563 = scalar_select %p1562, %s96, 1
        %s1564 = smul.addr %s1563, 4
        %s1565 = smul.addr %s1564, 4
        %s1566 = scalar_lea.vmem %s15, %s1565
        %p1567 = scmp.lt.s32.totalorder %s96, 1
        %s1568 = scalar_select %p1567, %s96, 1
        %s1569 = smul.addr %s1568, 4
        %s1570 = smul.addr %s1569, 4
        %s1571 = scalar_lea.vmem %s19, %s1570
        %p1572 = scmp.lt.s32.totalorder %s96, 1
        %s1573 = scalar_select %p1572, %s96, 1
        %s1574 = scalar_lea.vmem %s37, %s1573
        %p1575 = scmp.lt.s32.totalorder %s96, 1
        %s1576 = scalar_select %p1575, %s96, 1
        %s1577 = scalar_lea.vmem %s41, %s1576
        %p1578 = scmp.lt.s32.totalorder %s96, 1
        %s1579 = scalar_select %p1578, %s96, 1
        %s1580 = smul.addr %s1579, 8
        %s1581 = smul.addr %s1580, 4
        %s1582 = scalar_lea.vmem %s43, %s1581
        %p1583 = scmp.lt.s32.totalorder %s96, 1
        %s1584 = scalar_select %p1583, %s96, 1
        %s1585 = scalar_lea.vmem %s45, %s1584
        %p1586 = scmp.lt.s32.totalorder %s96, 1
        %s1587 = scalar_select %p1586, %s96, 1
        %s1588 = scalar_lea.vmem %s47, %s1587
        %p1589 = scmp.lt.s32.totalorder %s96, 1
        %s1590 = scalar_select %p1589, %s96, 1
        %s1591 = scalar_lea.vmem %s49, %s1590
        %p1592 = scmp.lt.s32.totalorder %s96, 1
        %s1593 = scalar_select %p1592, %s96, 1
        %s1594 = scalar_lea.vmem %s51, %s1593
        %p1595 = scmp.lt.s32.totalorder %s96, 1
        %s1596 = scalar_select %p1595, %s96, 1
        %s1597 = scalar_lea.vmem %s53, %s1596
        %p1598 = scmp.lt.s32.totalorder %s96, 1
        %s1599 = scalar_select %p1598, %s96, 1
        %s1600 = scalar_lea.vmem %s55, %s1599
        %p1601 = scmp.lt.s32.totalorder %s96, 1
        %s1602 = scalar_select %p1601, %s96, 1
        %s1603 = scalar_lea.vmem %s57, %s1602
        %s1604 = smul.u32 2, %s95
        %p1606 = scmp.eq.s32.totalorder %s96, 0
        // Predicated region
        $region197: #{tpu_custom_call.1} parent=135 // pred_check
          %p1607 = pneg %p1606
        $region198: #{tpu_custom_call.1} parent=135 // pred_check_branch
          %1609 = sbr.rel (%p1607) target = $region200
        $region199: #{tpu_custom_call.1} parent=135 // pred_region
          %v1610 = vld [vmem:[#allocation3] sm:$0xf]
          %v1611 = vld [vmem:[#allocation3 + $0x4] sm:$0xf]
          %v1612 = vunpack.c.l.bf16 %v1610
          %v1613 = vunpack.c.l.bf16 %v1611
          %vm1614 = vcmask 261120
          %1615 = vst.msk [vmem:[#allocation2] sm:$0xff] %vm1614, %v1612
          %1616 = vst.msk [vmem:[#allocation2 + $0x8] sm:$0xff] %vm1614, %v1613
        $region200: #{tpu_custom_call.1} parent=135 // pred_fallthru
          _
        %v1617 = vld [vmem:[#allocation2] sm:$0xff]
        %v1618 = vld [vmem:[#allocation2 + $0x8] sm:$0xff]
        %v1619 = vld [vmem:[#allocation6] sm:$0xf]
        %v1620 = vld [vmem:[#allocation6 + $0x4] sm:$0xf]
        %v1621 = vld [vmem:[#allocation6 + $0x8] sm:$0xf]
        %v1622 = vld [vmem:[#allocation6 + $0xc] sm:$0xf]
        %v1623 = vld [vmem:[#allocation8] sm:$0x1]
        %v1624 = vld [vmem:[#allocation8 + $0x1] sm:$0x1]
        %v1625 = vpack.c.bf16 %v1618, %v1617
        %v1626 = vld [vmem:[%s1556] sm:$0xf]
        %v1627 = vld [vmem:[%s1556 + $0x4] sm:$0xf]
        %v1628 = vld [vmem:[%s1556 + $0x8] sm:$0xf]
        %v1629 = vld [vmem:[%s1556 + $0xc] sm:$0xf]
        %v1630 = vld [vmem:[%s1286] sm:$0x1]
        %v1632 = vlaneseq
        %v1633 = vshrl.u32 %v1632, 7
        %v1634 = vsub.s32 0, %v1633
        %v1635 = vrot.slane %v1630, %v1634
        %v1641 = vunpack.c.l.b16 %v1626
        %v1642 = vunpack.c.l.b16 %v1627
        %v1643 = vunpack.c.l.b16 %v1628
        %v1644 = vunpack.c.l.b16 %v1629
        %v1645 = vpack.c.b16 %v1642, %v1641
        %v1646 = vpack.c.b16 %v1644, %v1643
        %vm1649 = vcmask 261120
        %v1651 = vsel %vm1649, %v1625, 0
        %1653 = vmatprep.subr.bf16.mxu0 0
        %1654 = vmatpush1.bf16.msra.mxu0 %v1645
        %1655 = vmatprep.subr.bf16.mxu0 0
        %1656 = vmatpush1.bf16.msra.mxu0 %v1646
        %1657 = vmatprep.subr.bf16.mxu0 0
        %1658 = vmatpush1.bf16.msra.mxu0 0
        %1659 = vmatprep.subr.bf16.mxu0 0
        %1660 = vmatpush1.bf16.msra.mxu0 0
        %1661 = vmatprep.subr.bf16.mxu0 0
        %1662 = vmatpush1.bf16.msra.mxu0 0
        %1663 = vmatprep.subr.bf16.mxu0 0
        %1664 = vmatpush1.bf16.msra.mxu0 0
        %1665 = vmatprep.subr.bf16.mxu0 0
        %1666 = vmatpush1.bf16.msra.mxu0 0
        %1667 = vmatprep.subr.bf16.mxu0 0
        %1668 = vmatpush1.bf16.msra.mxu0 0
        %1669 = vmatprep.subr.bf16.mxu0 0
        %1670 = vmatpush1.bf16.msra.mxu0 0
        %1671 = vmatprep.subr.bf16.mxu0 0
        %1672 = vmatpush1.bf16.msra.mxu0 0
        %1673 = vmatprep.subr.bf16.mxu0 0
        %1674 = vmatpush1.bf16.msra.mxu0 0
        %1675 = vmatprep.subr.bf16.mxu0 0
        %1676 = vmatpush1.bf16.msra.mxu0 0
        %1677 = vmatprep.subr.bf16.mxu0 0
        %1678 = vmatpush1.bf16.msra.mxu0 0
        %1679 = vmatprep.subr.bf16.mxu0 0
        %1680 = vmatpush1.bf16.msra.mxu0 0
        %1681 = vmatprep.subr.bf16.mxu0 0
        %1682 = vmatpush1.bf16.msra.mxu0 0
        %1683 = vmatprep.subr.bf16.mxu0 0
        %1684 = vmatpush1.bf16.msra.mxu0 0
        %1685 = vmatprep.mubr.bf16.mxu0 0
        %1686 = vmatmul.mubr.bf16.gmra.mrb[0].mxu0 %v1651
        %v1687 = vpop.f32.mrb[0].mxu0
        %v1688 = vadd.f32 %v1635, %v1687
        %v1689 = vpop.f32.mrb[0].mxu0
        %v1690 = vpop.f32.mrb[0].mxu0
        %v1691 = vadd.f32 %v1635, %v1690
        %v1692 = vpop.f32.mrb[0].mxu0
        %1693 = vdwg.mxu0
        %v1694 = vld [vmem:[%s1561] sm:$0xf]
        %v1695 = vld [vmem:[%s1561 + $0x4] sm:$0xf]
        %v1696 = vld [vmem:[%s1561 + $0x8] sm:$0xf]
        %v1697 = vld [vmem:[%s1561 + $0xc] sm:$0xf]
        %v1698 = vld [vmem:[%s1294] sm:$0x1]
        %v1700 = vlaneseq
        %v1701 = vshrl.u32 %v1700, 7
        %v1702 = vsub.s32 0, %v1701
        %v1703 = vrot.slane %v1698, %v1702
        %v1709 = vunpack.c.l.b16 %v1694
        %v1710 = vunpack.c.l.b16 %v1695
        %v1711 = vunpack.c.l.b16 %v1696
        %v1712 = vunpack.c.l.b16 %v1697
        %v1713 = vpack.c.b16 %v1710, %v1709
        %v1714 = vpack.c.b16 %v1712, %v1711
        %1717 = vmatprep.subr.bf16.mxu0 0
        %1718 = vmatpush1.bf16.msra.mxu0 %v1713
        %1719 = vmatprep.subr.bf16.mxu0 0
        %1720 = vmatpush1.bf16.msra.mxu0 %v1714
        %1721 = vmatprep.subr.bf16.mxu0 0
        %1722 = vmatpush1.bf16.msra.mxu0 0
        %1723 = vmatprep.subr.bf16.mxu0 0
        %1724 = vmatpush1.bf16.msra.mxu0 0
        %1725 = vmatprep.subr.bf16.mxu0 0
        %1726 = vmatpush1.bf16.msra.mxu0 0
        %1727 = vmatprep.subr.bf16.mxu0 0
        %1728 = vmatpush1.bf16.msra.mxu0 0
        %1729 = vmatprep.subr.bf16.mxu0 0
        %1730 = vmatpush1.bf16.msra.mxu0 0
        %1731 = vmatprep.subr.bf16.mxu0 0
        %1732 = vmatpush1.bf16.msra.mxu0 0
        %1733 = vmatprep.subr.bf16.mxu0 0
        %1734 = vmatpush1.bf16.msra.mxu0 0
        %1735 = vmatprep.subr.bf16.mxu0 0
        %1736 = vmatpush1.bf16.msra.mxu0 0
        %1737 = vmatprep.subr.bf16.mxu0 0
        %1738 = vmatpush1.bf16.msra.mxu0 0
        %1739 = vmatprep.subr.bf16.mxu0 0
        %1740 = vmatpush1.bf16.msra.mxu0 0
        %1741 = vmatprep.subr.bf16.mxu0 0
        %1742 = vmatpush1.bf16.msra.mxu0 0
        %1743 = vmatprep.subr.bf16.mxu0 0
        %1744 = vmatpush1.bf16.msra.mxu0 0
        %1745 = vmatprep.subr.bf16.mxu0 0
        %1746 = vmatpush1.bf16.msra.mxu0 0
        %1747 = vmatprep.subr.bf16.mxu0 0
        %1748 = vmatpush1.bf16.msra.mxu0 0
        %1749 = vmatprep.mubr.bf16.mxu0 0
        %1750 = vmatmul.mubr.bf16.gmra.mrb[0].mxu0 %v1651
        %v1751 = vpop.f32.mrb[0].mxu0
        %v1752 = vadd.f32 %v1703, %v1751
        %v1753 = vpop.f32.mrb[0].mxu0
        %v1754 = vpop.f32.mrb[0].mxu0
        %v1755 = vadd.f32 %v1703, %v1754
        %v1756 = vpop.f32.mrb[0].mxu0
        %1757 = vdwg.mxu0
        %v1758 = vld [vmem:[%s1566] sm:$0xf]
        %v1759 = vld [vmem:[%s1566 + $0x4] sm:$0xf]
        %v1760 = vld [vmem:[%s1566 + $0x8] sm:$0xf]
        %v1761 = vld [vmem:[%s1566 + $0xc] sm:$0xf]
        %v1762 = vld [vmem:[%s1302] sm:$0x1]
        %v1764 = vlaneseq
        %v1765 = vshrl.u32 %v1764, 7
        %v1766 = vsub.s32 0, %v1765
        %v1767 = vrot.slane %v1762, %v1766
        %v1773 = vunpack.c.l.b16 %v1758
        %v1774 = vunpack.c.l.b16 %v1759
        %v1775 = vunpack.c.l.b16 %v1760
        %v1776 = vunpack.c.l.b16 %v1761
        %v1777 = vpack.c.b16 %v1774, %v1773
        %v1778 = vpack.c.b16 %v1776, %v1775
        %1781 = vmatprep.subr.bf16.mxu0 0
        %1782 = vmatpush1.bf16.msra.mxu0 %v1777
        %1783 = vmatprep.subr.bf16.mxu0 0
        %1784 = vmatpush1.bf16.msra.mxu0 %v1778
        %1785 = vmatprep.subr.bf16.mxu0 0
        %1786 = vmatpush1.bf16.msra.mxu0 0
        %1787 = vmatprep.subr.bf16.mxu0 0
        %1788 = vmatpush1.bf16.msra.mxu0 0
        %1789 = vmatprep.subr.bf16.mxu0 0
        %1790 = vmatpush1.bf16.msra.mxu0 0
        %1791 = vmatprep.subr.bf16.mxu0 0
        %1792 = vmatpush1.bf16.msra.mxu0 0
        %1793 = vmatprep.subr.bf16.mxu0 0
        %1794 = vmatpush1.bf16.msra.mxu0 0
        %1795 = vmatprep.subr.bf16.mxu0 0
        %1796 = vmatpush1.bf16.msra.mxu0 0
        %1797 = vmatprep.subr.bf16.mxu0 0
        %1798 = vmatpush1.bf16.msra.mxu0 0
        %1799 = vmatprep.subr.bf16.mxu0 0
        %1800 = vmatpush1.bf16.msra.mxu0 0
        %1801 = vmatprep.subr.bf16.mxu0 0
        %1802 = vmatpush1.bf16.msra.mxu0 0
        %1803 = vmatprep.subr.bf16.mxu0 0
        %1804 = vmatpush1.bf16.msra.mxu0 0
        %1805 = vmatprep.subr.bf16.mxu0 0
        %1806 = vmatpush1.bf16.msra.mxu0 0
        %1807 = vmatprep.subr.bf16.mxu0 0
        %1808 = vmatpush1.bf16.msra.mxu0 0
        %1809 = vmatprep.subr.bf16.mxu0 0
        %1810 = vmatpush1.bf16.msra.mxu0 0
        %1811 = vmatprep.subr.bf16.mxu0 0
        %1812 = vmatpush1.bf16.msra.mxu0 0
        %1813 = vmatprep.mubr.bf16.mxu0 0
        %1814 = vmatmul.mubr.bf16.gmra.mrb[0].mxu0 %v1651
        %v1815 = vpop.f32.mrb[0].mxu0
        %v1816 = vadd.f32 %v1767, %v1815
        %v1817 = vpop.f32.mrb[0].mxu0
        %v1818 = vpop.f32.mrb[0].mxu0
        %v1819 = vadd.f32 %v1767, %v1818
        %v1820 = vpop.f32.mrb[0].mxu0
        %1821 = vdwg.mxu0
        %v1822 = vpack.c.bf16 %v1691, %v1688
        %v1824 = vunpack.c.l.b16 %v1822
        %v1825 = vunpack.c.h.b16 %v1822
        %v1826 = vpack.c.b16 %v1824, %v1824
        %v1827 = vpack.c.b16 %v1825, %v1825
        %1828 = vrot.lane.b32.xlu0 %v1826, 120
        %v1829 = vpop.permute.xlu0 %1828
        %1830 = vrot.lane.b32.xlu0 %v1827, 120
        %v1831 = vpop.permute.xlu0 %1830
        %1832 = vrot.lane.b32.xlu0 %v1826, 112
        %v1833 = vpop.permute.xlu0 %1832
        %1834 = vrot.lane.b32.xlu0 %v1827, 112
        %v1835 = vpop.permute.xlu0 %1834
        %1836 = vrot.lane.b32.xlu0 %v1826, 104
        %v1837 = vpop.permute.xlu0 %1836
        %1838 = vrot.lane.b32.xlu0 %v1827, 104
        %v1839 = vpop.permute.xlu0 %1838
        %v1840 = vpack.c.bf16 %v1755, %v1752
        %v1842 = vunpack.c.l.b16 %v1840
        %v1843 = vunpack.c.h.b16 %v1840
        %v1844 = vpack.c.b16 %v1842, %v1842
        %v1845 = vpack.c.b16 %v1843, %v1843
        %1846 = vrot.lane.b32.xlu0 %v1844, 120
        %v1847 = vpop.permute.xlu0 %1846
        %1848 = vrot.lane.b32.xlu0 %v1845, 120
        %v1849 = vpop.permute.xlu0 %1848
        %1850 = vrot.lane.b32.xlu0 %v1844, 112
        %v1851 = vpop.permute.xlu0 %1850
        %1852 = vrot.lane.b32.xlu0 %v1845, 112
        %v1853 = vpop.permute.xlu0 %1852
        %1854 = vrot.lane.b32.xlu0 %v1844, 104
        %v1855 = vpop.permute.xlu0 %1854
        %1856 = vrot.lane.b32.xlu0 %v1845, 104
        %v1857 = vpop.permute.xlu0 %1856
        %v1858 = vpack.c.bf16 %v1819, %v1816
        %v1860 = vunpack.c.l.b16 %v1858
        %v1861 = vunpack.c.h.b16 %v1858
        %v1862 = vpack.c.b16 %v1860, %v1860
        %v1863 = vpack.c.b16 %v1861, %v1861
        %1864 = vrot.lane.b32.xlu0 %v1862, 120
        %v1865 = vpop.permute.xlu0 %1864
        %1866 = vrot.lane.b32.xlu0 %v1863, 120
        %v1867 = vpop.permute.xlu0 %1866
        %1868 = vrot.lane.b32.xlu0 %v1862, 112
        %v1869 = vpop.permute.xlu0 %1868
        %1870 = vrot.lane.b32.xlu0 %v1863, 112
        %v1871 = vpop.permute.xlu0 %1870
        %1872 = vrot.lane.b32.xlu0 %v1862, 104
        %v1873 = vpop.permute.xlu0 %1872
        %1874 = vrot.lane.b32.xlu0 %v1863, 104
        %v1875 = vpop.permute.xlu0 %1874
        %v1878 = vlaneseq
        %v1879 = vshrl.u32 %v1878, 7
        %v1880 = vsub.s32 0, %v1879
        %v1881 = vrot.slane %v1623, %v1880
        %v1882 = vlaneseq
        %v1883 = vshrl.u32 %v1882, 7
        %v1884 = vsub.s32 0, %v1883
        %v1885 = vrot.slane %v1624, %v1884
        %vm1888 = vcmask 64512
        %v1890 = vsel %vm1888, %v1826, 0
        %v1893 = vsel %vm1888, %v1844, 0
        %1895 = vmatprep.subr.bf16.mxu0 0
        %1896 = vmatpush1.bf16.xpose.msra.mxu0 %v1893
        %1897 = vmatprep.subr.bf16.mxu0 0
        %1898 = vmatpush1.bf16.xpose.msra.mxu0 0
        %1899 = vmatprep.subr.bf16.mxu0 0
        %1900 = vmatpush1.bf16.xpose.msra.mxu0 0
        %1901 = vmatprep.subr.bf16.mxu0 0
        %1902 = vmatpush1.bf16.xpose.msra.mxu0 0
        %1903 = vmatprep.subr.bf16.mxu0 0
        %1904 = vmatpush1.bf16.xpose.msra.mxu0 0
        %1905 = vmatprep.subr.bf16.mxu0 0
        %1906 = vmatpush1.bf16.xpose.msra.mxu0 0
        %1907 = vmatprep.subr.bf16.mxu0 0
        %1908 = vmatpush1.bf16.xpose.msra.mxu0 0
        %1909 = vmatprep.subr.bf16.mxu0 0
        %1910 = vmatpush1.bf16.xpose.msra.mxu0 0
        %1911 = vmatprep.subr.bf16.mxu0 0
        %1912 = vmatpush1.bf16.xpose.msra.mxu0 0
        %1913 = vmatprep.subr.bf16.mxu0 0
        %1914 = vmatpush1.bf16.xpose.msra.mxu0 0
        %1915 = vmatprep.subr.bf16.mxu0 0
        %1916 = vmatpush1.bf16.xpose.msra.mxu0 0
        %1917 = vmatprep.subr.bf16.mxu0 0
        %1918 = vmatpush1.bf16.xpose.msra.mxu0 0
        %1919 = vmatprep.subr.bf16.mxu0 0
        %1920 = vmatpush1.bf16.xpose.msra.mxu0 0
        %1921 = vmatprep.subr.bf16.mxu0 0
        %1922 = vmatpush1.bf16.xpose.msra.mxu0 0
        %1923 = vmatprep.subr.bf16.mxu0 0
        %1924 = vmatpush1.bf16.xpose.msra.mxu0 0
        %1925 = vmatprep.subr.bf16.mxu0 0
        %1926 = vmatpush1.bf16.xpose.msra.mxu0 0
        %1927 = vmatprep.mubr.bf16.mxu0 0
        %1928 = vmatmul.mubr.bf16.gmra.mrb[0].mxu0 %v1890
        %v1929 = vpop.f32.mrb[0].mxu0
        %v1930 = vadd.f32 %v1881, %v1929
        %v1931 = vpop.f32.mrb[0].mxu0
        %v1932 = vpop.f32.mrb[0].mxu0
        %v1933 = vpop.f32.mrb[0].mxu0
        %1934 = vdwg.mxu0
        %v1936 = vsel %vm1888, %v1827, 0
        %v1939 = vsel %vm1888, %v1845, 0
        %1941 = vmatprep.subr.bf16.mxu0 0
        %1942 = vmatpush1.bf16.xpose.msra.mxu0 %v1939
        %1943 = vmatprep.subr.bf16.mxu0 0
        %1944 = vmatpush1.bf16.xpose.msra.mxu0 0
        %1945 = vmatprep.subr.bf16.mxu0 0
        %1946 = vmatpush1.bf16.xpose.msra.mxu0 0
        %1947 = vmatprep.subr.bf16.mxu0 0
        %1948 = vmatpush1.bf16.xpose.msra.mxu0 0
        %1949 = vmatprep.subr.bf16.mxu0 0
        %1950 = vmatpush1.bf16.xpose.msra.mxu0 0
        %1951 = vmatprep.subr.bf16.mxu0 0
        %1952 = vmatpush1.bf16.xpose.msra.mxu0 0
        %1953 = vmatprep.subr.bf16.mxu0 0
        %1954 = vmatpush1.bf16.xpose.msra.mxu0 0
        %1955 = vmatprep.subr.bf16.mxu0 0
        %1956 = vmatpush1.bf16.xpose.msra.mxu0 0
        %1957 = vmatprep.subr.bf16.mxu0 0
        %1958 = vmatpush1.bf16.xpose.msra.mxu0 0
        %1959 = vmatprep.subr.bf16.mxu0 0
        %1960 = vmatpush1.bf16.xpose.msra.mxu0 0
        %1961 = vmatprep.subr.bf16.mxu0 0
        %1962 = vmatpush1.bf16.xpose.msra.mxu0 0
        %1963 = vmatprep.subr.bf16.mxu0 0
        %1964 = vmatpush1.bf16.xpose.msra.mxu0 0
        %1965 = vmatprep.subr.bf16.mxu0 0
        %1966 = vmatpush1.bf16.xpose.msra.mxu0 0
        %1967 = vmatprep.subr.bf16.mxu0 0
        %1968 = vmatpush1.bf16.xpose.msra.mxu0 0
        %1969 = vmatprep.subr.bf16.mxu0 0
        %1970 = vmatpush1.bf16.xpose.msra.mxu0 0
        %1971 = vmatprep.subr.bf16.mxu0 0
        %1972 = vmatpush1.bf16.xpose.msra.mxu0 0
        %1973 = vmatprep.mubr.bf16.mxu0 0
        %1974 = vmatmul.mubr.bf16.gmra.mrb[0].mxu0 %v1936
        %v1975 = vpop.f32.mrb[0].mxu0
        %v1976 = vadd.f32 %v1885, %v1975
        %v1977 = vpop.f32.mrb[0].mxu0
        %v1978 = vpop.f32.mrb[0].mxu0
        %v1979 = vpop.f32.mrb[0].mxu0
        %1980 = vdwg.mxu0
        %v1982 = vsel %vm1888, %v1829, 0
        %v1985 = vsel %vm1888, %v1847, 0
        %1987 = vmatprep.subr.bf16.mxu0 0
        %1988 = vmatpush1.bf16.xpose.msra.mxu0 %v1985
        %1989 = vmatprep.subr.bf16.mxu0 0
        %1990 = vmatpush1.bf16.xpose.msra.mxu0 0
        %1991 = vmatprep.subr.bf16.mxu0 0
        %1992 = vmatpush1.bf16.xpose.msra.mxu0 0
        %1993 = vmatprep.subr.bf16.mxu0 0
        %1994 = vmatpush1.bf16.xpose.msra.mxu0 0
        %1995 = vmatprep.subr.bf16.mxu0 0
        %1996 = vmatpush1.bf16.xpose.msra.mxu0 0
        %1997 = vmatprep.subr.bf16.mxu0 0
        %1998 = vmatpush1.bf16.xpose.msra.mxu0 0
        %1999 = vmatprep.subr.bf16.mxu0 0
        %2000 = vmatpush1.bf16.xpose.msra.mxu0 0
        %2001 = vmatprep.subr.bf16.mxu0 0
        %2002 = vmatpush1.bf16.xpose.msra.mxu0 0
        %2003 = vmatprep.subr.bf16.mxu0 0
        %2004 = vmatpush1.bf16.xpose.msra.mxu0 0
        %2005 = vmatprep.subr.bf16.mxu0 0
        %2006 = vmatpush1.bf16.xpose.msra.mxu0 0
        %2007 = vmatprep.subr.bf16.mxu0 0
        %2008 = vmatpush1.bf16.xpose.msra.mxu0 0
        %2009 = vmatprep.subr.bf16.mxu0 0
        %2010 = vmatpush1.bf16.xpose.msra.mxu0 0
        %2011 = vmatprep.subr.bf16.mxu0 0
        %2012 = vmatpush1.bf16.xpose.msra.mxu0 0
        %2013 = vmatprep.subr.bf16.mxu0 0
        %2014 = vmatpush1.bf16.xpose.msra.mxu0 0
        %2015 = vmatprep.subr.bf16.mxu0 0
        %2016 = vmatpush1.bf16.xpose.msra.mxu0 0
        %2017 = vmatprep.subr.bf16.mxu0 0
        %2018 = vmatpush1.bf16.xpose.msra.mxu0 0
        %2019 = vmatprep.mubr.bf16.mxu0 0
        %2020 = vmatmul.mubr.bf16.gmra.mrb[0].mxu0 %v1982
        %v2021 = vpop.f32.mrb[0].mxu0
        %v2022 = vadd.f32 %v1881, %v2021
        %v2023 = vpop.f32.mrb[0].mxu0
        %v2024 = vpop.f32.mrb[0].mxu0
        %v2025 = vpop.f32.mrb[0].mxu0
        %2026 = vdwg.mxu0
        %v2028 = vsel %vm1888, %v1831, 0
        %v2031 = vsel %vm1888, %v1849, 0
        %2033 = vmatprep.subr.bf16.mxu0 0
        %2034 = vmatpush1.bf16.xpose.msra.mxu0 %v2031
        %2035 = vmatprep.subr.bf16.mxu0 0
        %2036 = vmatpush1.bf16.xpose.msra.mxu0 0
        %2037 = vmatprep.subr.bf16.mxu0 0
        %2038 = vmatpush1.bf16.xpose.msra.mxu0 0
        %2039 = vmatprep.subr.bf16.mxu0 0
        %2040 = vmatpush1.bf16.xpose.msra.mxu0 0
        %2041 = vmatprep.subr.bf16.mxu0 0
        %2042 = vmatpush1.bf16.xpose.msra.mxu0 0
        %2043 = vmatprep.subr.bf16.mxu0 0
        %2044 = vmatpush1.bf16.xpose.msra.mxu0 0
        %2045 = vmatprep.subr.bf16.mxu0 0
        %2046 = vmatpush1.bf16.xpose.msra.mxu0 0
        %2047 = vmatprep.subr.bf16.mxu0 0
        %2048 = vmatpush1.bf16.xpose.msra.mxu0 0
        %2049 = vmatprep.subr.bf16.mxu0 0
        %2050 = vmatpush1.bf16.xpose.msra.mxu0 0
        %2051 = vmatprep.subr.bf16.mxu0 0
        %2052 = vmatpush1.bf16.xpose.msra.mxu0 0
        %2053 = vmatprep.subr.bf16.mxu0 0
        %2054 = vmatpush1.bf16.xpose.msra.mxu0 0
        %2055 = vmatprep.subr.bf16.mxu0 0
        %2056 = vmatpush1.bf16.xpose.msra.mxu0 0
        %2057 = vmatprep.subr.bf16.mxu0 0
        %2058 = vmatpush1.bf16.xpose.msra.mxu0 0
        %2059 = vmatprep.subr.bf16.mxu0 0
        %2060 = vmatpush1.bf16.xpose.msra.mxu0 0
        %2061 = vmatprep.subr.bf16.mxu0 0
        %2062 = vmatpush1.bf16.xpose.msra.mxu0 0
        %2063 = vmatprep.subr.bf16.mxu0 0
        %2064 = vmatpush1.bf16.xpose.msra.mxu0 0
        %2065 = vmatprep.mubr.bf16.mxu0 0
        %2066 = vmatmul.mubr.bf16.gmra.mrb[0].mxu0 %v2028
        %v2067 = vpop.f32.mrb[0].mxu0
        %v2068 = vadd.f32 %v1885, %v2067
        %v2069 = vpop.f32.mrb[0].mxu0
        %v2070 = vpop.f32.mrb[0].mxu0
        %v2071 = vpop.f32.mrb[0].mxu0
        %2072 = vdwg.mxu0
        %v2074 = vsel %vm1888, %v1833, 0
        %v2077 = vsel %vm1888, %v1851, 0
        %2079 = vmatprep.subr.bf16.mxu0 0
        %2080 = vmatpush1.bf16.xpose.msra.mxu0 %v2077
        %2081 = vmatprep.subr.bf16.mxu0 0
        %2082 = vmatpush1.bf16.xpose.msra.mxu0 0
        %2083 = vmatprep.subr.bf16.mxu0 0
        %2084 = vmatpush1.bf16.xpose.msra.mxu0 0
        %2085 = vmatprep.subr.bf16.mxu0 0
        %2086 = vmatpush1.bf16.xpose.msra.mxu0 0
        %2087 = vmatprep.subr.bf16.mxu0 0
        %2088 = vmatpush1.bf16.xpose.msra.mxu0 0
        %2089 = vmatprep.subr.bf16.mxu0 0
        %2090 = vmatpush1.bf16.xpose.msra.mxu0 0
        %2091 = vmatprep.subr.bf16.mxu0 0
        %2092 = vmatpush1.bf16.xpose.msra.mxu0 0
        %2093 = vmatprep.subr.bf16.mxu0 0
        %2094 = vmatpush1.bf16.xpose.msra.mxu0 0
        %2095 = vmatprep.subr.bf16.mxu0 0
        %2096 = vmatpush1.bf16.xpose.msra.mxu0 0
        %2097 = vmatprep.subr.bf16.mxu0 0
        %2098 = vmatpush1.bf16.xpose.msra.mxu0 0
        %2099 = vmatprep.subr.bf16.mxu0 0
        %2100 = vmatpush1.bf16.xpose.msra.mxu0 0
        %2101 = vmatprep.subr.bf16.mxu0 0
        %2102 = vmatpush1.bf16.xpose.msra.mxu0 0
        %2103 = vmatprep.subr.bf16.mxu0 0
        %2104 = vmatpush1.bf16.xpose.msra.mxu0 0
        %2105 = vmatprep.subr.bf16.mxu0 0
        %2106 = vmatpush1.bf16.xpose.msra.mxu0 0
        %2107 = vmatprep.subr.bf16.mxu0 0
        %2108 = vmatpush1.bf16.xpose.msra.mxu0 0
        %2109 = vmatprep.subr.bf16.mxu0 0
        %2110 = vmatpush1.bf16.xpose.msra.mxu0 0
        %2111 = vmatprep.mubr.bf16.mxu0 0
        %2112 = vmatmul.mubr.bf16.gmra.mrb[0].mxu0 %v2074
        %v2113 = vpop.f32.mrb[0].mxu0
        %v2114 = vadd.f32 %v1881, %v2113
        %v2115 = vpop.f32.mrb[0].mxu0
        %v2116 = vpop.f32.mrb[0].mxu0
        %v2117 = vpop.f32.mrb[0].mxu0
        %2118 = vdwg.mxu0
        %v2120 = vsel %vm1888, %v1835, 0
        %v2123 = vsel %vm1888, %v1853, 0
        %2125 = vmatprep.subr.bf16.mxu0 0
        %2126 = vmatpush1.bf16.xpose.msra.mxu0 %v2123
        %2127 = vmatprep.subr.bf16.mxu0 0
        %2128 = vmatpush1.bf16.xpose.msra.mxu0 0
        %2129 = vmatprep.subr.bf16.mxu0 0
        %2130 = vmatpush1.bf16.xpose.msra.mxu0 0
        %2131 = vmatprep.subr.bf16.mxu0 0
        %2132 = vmatpush1.bf16.xpose.msra.mxu0 0
        %2133 = vmatprep.subr.bf16.mxu0 0
        %2134 = vmatpush1.bf16.xpose.msra.mxu0 0
        %2135 = vmatprep.subr.bf16.mxu0 0
        %2136 = vmatpush1.bf16.xpose.msra.mxu0 0
        %2137 = vmatprep.subr.bf16.mxu0 0
        %2138 = vmatpush1.bf16.xpose.msra.mxu0 0
        %2139 = vmatprep.subr.bf16.mxu0 0
        %2140 = vmatpush1.bf16.xpose.msra.mxu0 0
        %2141 = vmatprep.subr.bf16.mxu0 0
        %2142 = vmatpush1.bf16.xpose.msra.mxu0 0
        %2143 = vmatprep.subr.bf16.mxu0 0
        %2144 = vmatpush1.bf16.xpose.msra.mxu0 0
        %2145 = vmatprep.subr.bf16.mxu0 0
        %2146 = vmatpush1.bf16.xpose.msra.mxu0 0
        %2147 = vmatprep.subr.bf16.mxu0 0
        %2148 = vmatpush1.bf16.xpose.msra.mxu0 0
        %2149 = vmatprep.subr.bf16.mxu0 0
        %2150 = vmatpush1.bf16.xpose.msra.mxu0 0
        %2151 = vmatprep.subr.bf16.mxu0 0
        %2152 = vmatpush1.bf16.xpose.msra.mxu0 0
        %2153 = vmatprep.subr.bf16.mxu0 0
        %2154 = vmatpush1.bf16.xpose.msra.mxu0 0
        %2155 = vmatprep.subr.bf16.mxu0 0
        %2156 = vmatpush1.bf16.xpose.msra.mxu0 0
        %2157 = vmatprep.mubr.bf16.mxu0 0
        %2158 = vmatmul.mubr.bf16.gmra.mrb[0].mxu0 %v2120
        %v2159 = vpop.f32.mrb[0].mxu0
        %v2160 = vadd.f32 %v1885, %v2159
        %v2161 = vpop.f32.mrb[0].mxu0
        %v2162 = vpop.f32.mrb[0].mxu0
        %v2163 = vpop.f32.mrb[0].mxu0
        %2164 = vdwg.mxu0
        %v2166 = vsel %vm1888, %v1837, 0
        %v2169 = vsel %vm1888, %v1855, 0
        %2171 = vmatprep.subr.bf16.mxu0 0
        %2172 = vmatpush1.bf16.xpose.msra.mxu0 %v2169
        %2173 = vmatprep.subr.bf16.mxu0 0
        %2174 = vmatpush1.bf16.xpose.msra.mxu0 0
        %2175 = vmatprep.subr.bf16.mxu0 0
        %2176 = vmatpush1.bf16.xpose.msra.mxu0 0
        %2177 = vmatprep.subr.bf16.mxu0 0
        %2178 = vmatpush1.bf16.xpose.msra.mxu0 0
        %2179 = vmatprep.subr.bf16.mxu0 0
        %2180 = vmatpush1.bf16.xpose.msra.mxu0 0
        %2181 = vmatprep.subr.bf16.mxu0 0
        %2182 = vmatpush1.bf16.xpose.msra.mxu0 0
        %2183 = vmatprep.subr.bf16.mxu0 0
        %2184 = vmatpush1.bf16.xpose.msra.mxu0 0
        %2185 = vmatprep.subr.bf16.mxu0 0
        %2186 = vmatpush1.bf16.xpose.msra.mxu0 0
        %2187 = vmatprep.subr.bf16.mxu0 0
        %2188 = vmatpush1.bf16.xpose.msra.mxu0 0
        %2189 = vmatprep.subr.bf16.mxu0 0
        %2190 = vmatpush1.bf16.xpose.msra.mxu0 0
        %2191 = vmatprep.subr.bf16.mxu0 0
        %2192 = vmatpush1.bf16.xpose.msra.mxu0 0
        %2193 = vmatprep.subr.bf16.mxu0 0
        %2194 = vmatpush1.bf16.xpose.msra.mxu0 0
        %2195 = vmatprep.subr.bf16.mxu0 0
        %2196 = vmatpush1.bf16.xpose.msra.mxu0 0
        %2197 = vmatprep.subr.bf16.mxu0 0
        %2198 = vmatpush1.bf16.xpose.msra.mxu0 0
        %2199 = vmatprep.subr.bf16.mxu0 0
        %2200 = vmatpush1.bf16.xpose.msra.mxu0 0
        %2201 = vmatprep.subr.bf16.mxu0 0
        %2202 = vmatpush1.bf16.xpose.msra.mxu0 0
        %2203 = vmatprep.mubr.bf16.mxu0 0
        %2204 = vmatmul.mubr.bf16.gmra.mrb[0].mxu0 %v2166
        %v2205 = vpop.f32.mrb[0].mxu0
        %v2206 = vadd.f32 %v1881, %v2205
        %v2207 = vpop.f32.mrb[0].mxu0
        %v2208 = vpop.f32.mrb[0].mxu0
        %v2209 = vpop.f32.mrb[0].mxu0
        %2210 = vdwg.mxu0
        %v2212 = vsel %vm1888, %v1839, 0
        %v2215 = vsel %vm1888, %v1857, 0
        %2217 = vmatprep.subr.bf16.mxu0 0
        %2218 = vmatpush1.bf16.xpose.msra.mxu0 %v2215
        %2219 = vmatprep.subr.bf16.mxu0 0
        %2220 = vmatpush1.bf16.xpose.msra.mxu0 0
        %2221 = vmatprep.subr.bf16.mxu0 0
        %2222 = vmatpush1.bf16.xpose.msra.mxu0 0
        %2223 = vmatprep.subr.bf16.mxu0 0
        %2224 = vmatpush1.bf16.xpose.msra.mxu0 0
        %2225 = vmatprep.subr.bf16.mxu0 0
        %2226 = vmatpush1.bf16.xpose.msra.mxu0 0
        %2227 = vmatprep.subr.bf16.mxu0 0
        %2228 = vmatpush1.bf16.xpose.msra.mxu0 0
        %2229 = vmatprep.subr.bf16.mxu0 0
        %2230 = vmatpush1.bf16.xpose.msra.mxu0 0
        %2231 = vmatprep.subr.bf16.mxu0 0
        %2232 = vmatpush1.bf16.xpose.msra.mxu0 0
        %2233 = vmatprep.subr.bf16.mxu0 0
        %2234 = vmatpush1.bf16.xpose.msra.mxu0 0
        %2235 = vmatprep.subr.bf16.mxu0 0
        %2236 = vmatpush1.bf16.xpose.msra.mxu0 0
        %2237 = vmatprep.subr.bf16.mxu0 0
        %2238 = vmatpush1.bf16.xpose.msra.mxu0 0
        %2239 = vmatprep.subr.bf16.mxu0 0
        %2240 = vmatpush1.bf16.xpose.msra.mxu0 0
        %2241 = vmatprep.subr.bf16.mxu0 0
        %2242 = vmatpush1.bf16.xpose.msra.mxu0 0
        %2243 = vmatprep.subr.bf16.mxu0 0
        %2244 = vmatpush1.bf16.xpose.msra.mxu0 0
        %2245 = vmatprep.subr.bf16.mxu0 0
        %2246 = vmatpush1.bf16.xpose.msra.mxu0 0
        %2247 = vmatprep.subr.bf16.mxu0 0
        %2248 = vmatpush1.bf16.xpose.msra.mxu0 0
        %2249 = vmatprep.mubr.bf16.mxu0 0
        %2250 = vmatmul.mubr.bf16.gmra.mrb[0].mxu0 %v2212
        %v2251 = vpop.f32.mrb[0].mxu0
        %v2252 = vadd.f32 %v1885, %v2251
        %v2253 = vpop.f32.mrb[0].mxu0
        %v2254 = vpop.f32.mrb[0].mxu0
        %v2255 = vpop.f32.mrb[0].mxu0
        %2256 = vdwg.mxu0
        %v2257 = vsel %vm1888, %v1930, -inf
        %2258 = vmax.xlane.f32.xlu0 %v2257
        %v2259 = vpop.xlane.xlu0 %2258
        %v2260 = vsel %vm1888, %v1976, -inf
        %2261 = vmax.xlane.f32.xlu0 %v2260
        %v2262 = vpop.xlane.xlu0 %2261
        %v2263 = vsel %vm1888, %v2022, -inf
        %2264 = vmax.xlane.f32.xlu0 %v2263
        %v2265 = vpop.xlane.xlu0 %2264
        %v2266 = vsel %vm1888, %v2068, -inf
        %2267 = vmax.xlane.f32.xlu0 %v2266
        %v2268 = vpop.xlane.xlu0 %2267
        %v2269 = vsel %vm1888, %v2114, -inf
        %2270 = vmax.xlane.f32.xlu0 %v2269
        %v2271 = vpop.xlane.xlu0 %2270
        %v2272 = vsel %vm1888, %v2160, -inf
        %2273 = vmax.xlane.f32.xlu0 %v2272
        %v2274 = vpop.xlane.xlu0 %2273
        %v2275 = vsel %vm1888, %v2206, -inf
        %2276 = vmax.xlane.f32.xlu0 %v2275
        %v2277 = vpop.xlane.xlu0 %2276
        %v2278 = vsel %vm1888, %v2252, -inf
        %2279 = vmax.xlane.f32.xlu0 %v2278
        %v2280 = vpop.xlane.xlu0 %2279
        %v2281 = vsub.f32 %v1930, %v2259
        %v2282 = vsub.f32 %v1976, %v2262
        %v2283 = vsub.f32 %v2022, %v2265
        %v2284 = vsub.f32 %v2068, %v2268
        %v2285 = vsub.f32 %v2114, %v2271
        %v2286 = vsub.f32 %v2160, %v2274
        %v2287 = vsub.f32 %v2206, %v2277
        %v2288 = vsub.f32 %v2252, %v2280
        %v2289 = vmul.f32 %v2281, 1.442695
        %v2290 = vpow.pop %v2289
        %v2291 = vmul.f32 %v2282, 1.442695
        %v2292 = vpow.pop %v2291
        %v2293 = vmul.f32 %v2283, 1.442695
        %v2294 = vpow.pop %v2293
        %v2295 = vmul.f32 %v2284, 1.442695
        %v2296 = vpow.pop %v2295
        %v2297 = vmul.f32 %v2285, 1.442695
        %v2298 = vpow.pop %v2297
        %v2299 = vmul.f32 %v2286, 1.442695
        %v2300 = vpow.pop %v2299
        %v2301 = vmul.f32 %v2287, 1.442695
        %v2302 = vpow.pop %v2301
        %v2303 = vmul.f32 %v2288, 1.442695
        %v2304 = vpow.pop %v2303
        %v2305 = vsel %vm1888, %v2290, 0.0
        %2306 = vadd.xlane.f32.xlu0 %v2305
        %v2307 = vpop.xlane.xlu0 %2306
        %v2308 = vsel %vm1888, %v2292, 0.0
        %2309 = vadd.xlane.f32.xlu0 %v2308
        %v2310 = vpop.xlane.xlu0 %2309
        %v2311 = vsel %vm1888, %v2294, 0.0
        %2312 = vadd.xlane.f32.xlu0 %v2311
        %v2313 = vpop.xlane.xlu0 %2312
        %v2314 = vsel %vm1888, %v2296, 0.0
        %2315 = vadd.xlane.f32.xlu0 %v2314
        %v2316 = vpop.xlane.xlu0 %2315
        %v2317 = vsel %vm1888, %v2298, 0.0
        %2318 = vadd.xlane.f32.xlu0 %v2317
        %v2319 = vpop.xlane.xlu0 %2318
        %v2320 = vsel %vm1888, %v2300, 0.0
        %2321 = vadd.xlane.f32.xlu0 %v2320
        %v2322 = vpop.xlane.xlu0 %2321
        %v2323 = vsel %vm1888, %v2302, 0.0
        %2324 = vadd.xlane.f32.xlu0 %v2323
        %v2325 = vpop.xlane.xlu0 %2324
        %v2326 = vsel %vm1888, %v2304, 0.0
        %2327 = vadd.xlane.f32.xlu0 %v2326
        %v2328 = vpop.xlane.xlu0 %2327
        %v2329 = vrcp.pop %v2307
        %v2330 = vrcp.pop %v2310
        %v2331 = vrcp.pop %v2313
        %v2332 = vrcp.pop %v2316
        %v2333 = vrcp.pop %v2319
        %v2334 = vrcp.pop %v2322
        %v2335 = vrcp.pop %v2325
        %v2336 = vrcp.pop %v2328
        %v2337 = vmul.f32 %v2290, %v2329
        %v2338 = vmul.f32 %v2292, %v2330
        %v2339 = vmul.f32 %v2294, %v2331
        %v2340 = vmul.f32 %v2296, %v2332
        %v2341 = vmul.f32 %v2298, %v2333
        %v2342 = vmul.f32 %v2300, %v2334
        %v2343 = vmul.f32 %v2302, %v2335
        %v2344 = vmul.f32 %v2304, %v2336
        %v2345 = vpack.c.bf16 %v2337, %v2337
        %v2346 = vpack.c.bf16 %v2338, %v2338
        %v2347 = vpack.c.bf16 %v2339, %v2339
        %v2348 = vpack.c.bf16 %v2340, %v2340
        %v2349 = vpack.c.bf16 %v2341, %v2341
        %v2350 = vpack.c.bf16 %v2342, %v2342
        %v2351 = vpack.c.bf16 %v2343, %v2343
        %v2352 = vpack.c.bf16 %v2344, %v2344
        %v2354 = vsel %vm1888, %v2345, 0
        %vm2356 = vcmask 1043456
        %v2358 = vsel %vm2356, %v1862, 0
        %2360 = vmatprep.subr.bf16.mxu0 0
        %2361 = vmatpush1.bf16.msra.mxu0 %v2358
        %2362 = vmatprep.subr.bf16.mxu0 0
        %2363 = vmatpush1.bf16.msra.mxu0 0
        %2364 = vmatprep.subr.bf16.mxu0 0
        %2365 = vmatpush1.bf16.msra.mxu0 0
        %2366 = vmatprep.subr.bf16.mxu0 0
        %2367 = vmatpush1.bf16.msra.mxu0 0
        %2368 = vmatprep.subr.bf16.mxu0 0
        %2369 = vmatpush1.bf16.msra.mxu0 0
        %2370 = vmatprep.subr.bf16.mxu0 0
        %2371 = vmatpush1.bf16.msra.mxu0 0
        %2372 = vmatprep.subr.bf16.mxu0 0
        %2373 = vmatpush1.bf16.msra.mxu0 0
        %2374 = vmatprep.subr.bf16.mxu0 0
        %2375 = vmatpush1.bf16.msra.mxu0 0
        %2376 = vmatprep.subr.bf16.mxu0 0
        %2377 = vmatpush1.bf16.msra.mxu0 0
        %2378 = vmatprep.subr.bf16.mxu0 0
        %2379 = vmatpush1.bf16.msra.mxu0 0
        %2380 = vmatprep.subr.bf16.mxu0 0
        %2381 = vmatpush1.bf16.msra.mxu0 0
        %2382 = vmatprep.subr.bf16.mxu0 0
        %2383 = vmatpush1.bf16.msra.mxu0 0
        %2384 = vmatprep.subr.bf16.mxu0 0
        %2385 = vmatpush1.bf16.msra.mxu0 0
        %2386 = vmatprep.subr.bf16.mxu0 0
        %2387 = vmatpush1.bf16.msra.mxu0 0
        %2388 = vmatprep.subr.bf16.mxu0 0
        %2389 = vmatpush1.bf16.msra.mxu0 0
        %2390 = vmatprep.subr.bf16.mxu0 0
        %2391 = vmatpush1.bf16.msra.mxu0 0
        %2392 = vmatprep.mubr.bf16.mxu0 0
        %2393 = vmatmul.mubr.bf16.gmra.mrb[0].mxu0 %v2354
        %v2394 = vpop.f32.mrb[0].mxu0
        %v2395 = vadd.f32 0.0, %v2394
        %v2396 = vpop.f32.mrb[0].mxu0
        %v2397 = vpop.f32.mrb[0].mxu0
        %v2398 = vpop.f32.mrb[0].mxu0
        %2399 = vdwg.mxu0
        %v2401 = vsel %vm1888, %v2346, 0
        %v2404 = vsel %vm2356, %v1863, 0
        %2406 = vmatprep.subr.bf16.mxu0 0
        %2407 = vmatpush1.bf16.msra.mxu0 %v2404
        %2408 = vmatprep.subr.bf16.mxu0 0
        %2409 = vmatpush1.bf16.msra.mxu0 0
        %2410 = vmatprep.subr.bf16.mxu0 0
        %2411 = vmatpush1.bf16.msra.mxu0 0
        %2412 = vmatprep.subr.bf16.mxu0 0
        %2413 = vmatpush1.bf16.msra.mxu0 0
        %2414 = vmatprep.subr.bf16.mxu0 0
        %2415 = vmatpush1.bf16.msra.mxu0 0
        %2416 = vmatprep.subr.bf16.mxu0 0
        %2417 = vmatpush1.bf16.msra.mxu0 0
        %2418 = vmatprep.subr.bf16.mxu0 0
        %2419 = vmatpush1.bf16.msra.mxu0 0
        %2420 = vmatprep.subr.bf16.mxu0 0
        %2421 = vmatpush1.bf16.msra.mxu0 0
        %2422 = vmatprep.subr.bf16.mxu0 0
        %2423 = vmatpush1.bf16.msra.mxu0 0
        %2424 = vmatprep.subr.bf16.mxu0 0
        %2425 = vmatpush1.bf16.msra.mxu0 0
        %2426 = vmatprep.subr.bf16.mxu0 0
        %2427 = vmatpush1.bf16.msra.mxu0 0
        %2428 = vmatprep.subr.bf16.mxu0 0
        %2429 = vmatpush1.bf16.msra.mxu0 0
        %2430 = vmatprep.subr.bf16.mxu0 0
        %2431 = vmatpush1.bf16.msra.mxu0 0
        %2432 = vmatprep.subr.bf16.mxu0 0
        %2433 = vmatpush1.bf16.msra.mxu0 0
        %2434 = vmatprep.subr.bf16.mxu0 0
        %2435 = vmatpush1.bf16.msra.mxu0 0
        %2436 = vmatprep.subr.bf16.mxu0 0
        %2437 = vmatpush1.bf16.msra.mxu0 0
        %2438 = vmatprep.mubr.bf16.mxu0 0
        %2439 = vmatmul.mubr.bf16.gmra.mrb[0].mxu0 %v2401
        %v2440 = vpop.f32.mrb[0].mxu0
        %v2441 = vadd.f32 0.0, %v2440
        %v2442 = vpop.f32.mrb[0].mxu0
        %v2443 = vpop.f32.mrb[0].mxu0
        %v2444 = vpop.f32.mrb[0].mxu0
        %2445 = vdwg.mxu0
        %v2447 = vsel %vm1888, %v2347, 0
        %v2450 = vsel %vm2356, %v1865, 0
        %2452 = vmatprep.subr.bf16.mxu0 0
        %2453 = vmatpush1.bf16.msra.mxu0 %v2450
        %2454 = vmatprep.subr.bf16.mxu0 0
        %2455 = vmatpush1.bf16.msra.mxu0 0
        %2456 = vmatprep.subr.bf16.mxu0 0
        %2457 = vmatpush1.bf16.msra.mxu0 0
        %2458 = vmatprep.subr.bf16.mxu0 0
        %2459 = vmatpush1.bf16.msra.mxu0 0
        %2460 = vmatprep.subr.bf16.mxu0 0
        %2461 = vmatpush1.bf16.msra.mxu0 0
        %2462 = vmatprep.subr.bf16.mxu0 0
        %2463 = vmatpush1.bf16.msra.mxu0 0
        %2464 = vmatprep.subr.bf16.mxu0 0
        %2465 = vmatpush1.bf16.msra.mxu0 0
        %2466 = vmatprep.subr.bf16.mxu0 0
        %2467 = vmatpush1.bf16.msra.mxu0 0
        %2468 = vmatprep.subr.bf16.mxu0 0
        %2469 = vmatpush1.bf16.msra.mxu0 0
        %2470 = vmatprep.subr.bf16.mxu0 0
        %2471 = vmatpush1.bf16.msra.mxu0 0
        %2472 = vmatprep.subr.bf16.mxu0 0
        %2473 = vmatpush1.bf16.msra.mxu0 0
        %2474 = vmatprep.subr.bf16.mxu0 0
        %2475 = vmatpush1.bf16.msra.mxu0 0
        %2476 = vmatprep.subr.bf16.mxu0 0
        %2477 = vmatpush1.bf16.msra.mxu0 0
        %2478 = vmatprep.subr.bf16.mxu0 0
        %2479 = vmatpush1.bf16.msra.mxu0 0
        %2480 = vmatprep.subr.bf16.mxu0 0
        %2481 = vmatpush1.bf16.msra.mxu0 0
        %2482 = vmatprep.subr.bf16.mxu0 0
        %2483 = vmatpush1.bf16.msra.mxu0 0
        %2484 = vmatprep.mubr.bf16.mxu0 0
        %2485 = vmatmul.mubr.bf16.gmra.mrb[0].mxu0 %v2447
        %v2486 = vpop.f32.mrb[0].mxu0
        %v2487 = vadd.f32 0.0, %v2486
        %v2488 = vpop.f32.mrb[0].mxu0
        %v2489 = vpop.f32.mrb[0].mxu0
        %v2490 = vpop.f32.mrb[0].mxu0
        %2491 = vdwg.mxu0
        %v2493 = vsel %vm1888, %v2348, 0
        %v2496 = vsel %vm2356, %v1867, 0
        %2498 = vmatprep.subr.bf16.mxu0 0
        %2499 = vmatpush1.bf16.msra.mxu0 %v2496
        %2500 = vmatprep.subr.bf16.mxu0 0
        %2501 = vmatpush1.bf16.msra.mxu0 0
        %2502 = vmatprep.subr.bf16.mxu0 0
        %2503 = vmatpush1.bf16.msra.mxu0 0
        %2504 = vmatprep.subr.bf16.mxu0 0
        %2505 = vmatpush1.bf16.msra.mxu0 0
        %2506 = vmatprep.subr.bf16.mxu0 0
        %2507 = vmatpush1.bf16.msra.mxu0 0
        %2508 = vmatprep.subr.bf16.mxu0 0
        %2509 = vmatpush1.bf16.msra.mxu0 0
        %2510 = vmatprep.subr.bf16.mxu0 0
        %2511 = vmatpush1.bf16.msra.mxu0 0
        %2512 = vmatprep.subr.bf16.mxu0 0
        %2513 = vmatpush1.bf16.msra.mxu0 0
        %2514 = vmatprep.subr.bf16.mxu0 0
        %2515 = vmatpush1.bf16.msra.mxu0 0
        %2516 = vmatprep.subr.bf16.mxu0 0
        %2517 = vmatpush1.bf16.msra.mxu0 0
        %2518 = vmatprep.subr.bf16.mxu0 0
        %2519 = vmatpush1.bf16.msra.mxu0 0
        %2520 = vmatprep.subr.bf16.mxu0 0
        %2521 = vmatpush1.bf16.msra.mxu0 0
        %2522 = vmatprep.subr.bf16.mxu0 0
        %2523 = vmatpush1.bf16.msra.mxu0 0
        %2524 = vmatprep.subr.bf16.mxu0 0
        %2525 = vmatpush1.bf16.msra.mxu0 0
        %2526 = vmatprep.subr.bf16.mxu0 0
        %2527 = vmatpush1.bf16.msra.mxu0 0
        %2528 = vmatprep.subr.bf16.mxu0 0
        %2529 = vmatpush1.bf16.msra.mxu0 0
        %2530 = vmatprep.mubr.bf16.mxu0 0
        %2531 = vmatmul.mubr.bf16.gmra.mrb[0].mxu0 %v2493
        %v2532 = vpop.f32.mrb[0].mxu0
        %v2533 = vadd.f32 0.0, %v2532
        %v2534 = vpop.f32.mrb[0].mxu0
        %v2535 = vpop.f32.mrb[0].mxu0
        %v2536 = vpop.f32.mrb[0].mxu0
        %2537 = vdwg.mxu0
        %v2539 = vsel %vm1888, %v2349, 0
        %v2542 = vsel %vm2356, %v1869, 0
        %2544 = vmatprep.subr.bf16.mxu0 0
        %2545 = vmatpush1.bf16.msra.mxu0 %v2542
        %2546 = vmatprep.subr.bf16.mxu0 0
        %2547 = vmatpush1.bf16.msra.mxu0 0
        %2548 = vmatprep.subr.bf16.mxu0 0
        %2549 = vmatpush1.bf16.msra.mxu0 0
        %2550 = vmatprep.subr.bf16.mxu0 0
        %2551 = vmatpush1.bf16.msra.mxu0 0
        %2552 = vmatprep.subr.bf16.mxu0 0
        %2553 = vmatpush1.bf16.msra.mxu0 0
        %2554 = vmatprep.subr.bf16.mxu0 0
        %2555 = vmatpush1.bf16.msra.mxu0 0
        %2556 = vmatprep.subr.bf16.mxu0 0
        %2557 = vmatpush1.bf16.msra.mxu0 0
        %2558 = vmatprep.subr.bf16.mxu0 0
        %2559 = vmatpush1.bf16.msra.mxu0 0
        %2560 = vmatprep.subr.bf16.mxu0 0
        %2561 = vmatpush1.bf16.msra.mxu0 0
        %2562 = vmatprep.subr.bf16.mxu0 0
        %2563 = vmatpush1.bf16.msra.mxu0 0
        %2564 = vmatprep.subr.bf16.mxu0 0
        %2565 = vmatpush1.bf16.msra.mxu0 0
        %2566 = vmatprep.subr.bf16.mxu0 0
        %2567 = vmatpush1.bf16.msra.mxu0 0
        %2568 = vmatprep.subr.bf16.mxu0 0
        %2569 = vmatpush1.bf16.msra.mxu0 0
        %2570 = vmatprep.subr.bf16.mxu0 0
        %2571 = vmatpush1.bf16.msra.mxu0 0
        %2572 = vmatprep.subr.bf16.mxu0 0
        %2573 = vmatpush1.bf16.msra.mxu0 0
        %2574 = vmatprep.subr.bf16.mxu0 0
        %2575 = vmatpush1.bf16.msra.mxu0 0
        %2576 = vmatprep.mubr.bf16.mxu0 0
        %2577 = vmatmul.mubr.bf16.gmra.mrb[0].mxu0 %v2539
        %v2578 = vpop.f32.mrb[0].mxu0
        %v2579 = vadd.f32 0.0, %v2578
        %v2580 = vpop.f32.mrb[0].mxu0
        %v2581 = vpop.f32.mrb[0].mxu0
        %v2582 = vpop.f32.mrb[0].mxu0
        %2583 = vdwg.mxu0
        %v2585 = vsel %vm1888, %v2350, 0
        %v2588 = vsel %vm2356, %v1871, 0
        %2590 = vmatprep.subr.bf16.mxu0 0
        %2591 = vmatpush1.bf16.msra.mxu0 %v2588
        %2592 = vmatprep.subr.bf16.mxu0 0
        %2593 = vmatpush1.bf16.msra.mxu0 0
        %2594 = vmatprep.subr.bf16.mxu0 0
        %2595 = vmatpush1.bf16.msra.mxu0 0
        %2596 = vmatprep.subr.bf16.mxu0 0
        %2597 = vmatpush1.bf16.msra.mxu0 0
        %2598 = vmatprep.subr.bf16.mxu0 0
        %2599 = vmatpush1.bf16.msra.mxu0 0
        %2600 = vmatprep.subr.bf16.mxu0 0
        %2601 = vmatpush1.bf16.msra.mxu0 0
        %2602 = vmatprep.subr.bf16.mxu0 0
        %2603 = vmatpush1.bf16.msra.mxu0 0
        %2604 = vmatprep.subr.bf16.mxu0 0
        %2605 = vmatpush1.bf16.msra.mxu0 0
        %2606 = vmatprep.subr.bf16.mxu0 0
        %2607 = vmatpush1.bf16.msra.mxu0 0
        %2608 = vmatprep.subr.bf16.mxu0 0
        %2609 = vmatpush1.bf16.msra.mxu0 0
        %2610 = vmatprep.subr.bf16.mxu0 0
        %2611 = vmatpush1.bf16.msra.mxu0 0
        %2612 = vmatprep.subr.bf16.mxu0 0
        %2613 = vmatpush1.bf16.msra.mxu0 0
        %2614 = vmatprep.subr.bf16.mxu0 0
        %2615 = vmatpush1.bf16.msra.mxu0 0
        %2616 = vmatprep.subr.bf16.mxu0 0
        %2617 = vmatpush1.bf16.msra.mxu0 0
        %2618 = vmatprep.subr.bf16.mxu0 0
        %2619 = vmatpush1.bf16.msra.mxu0 0
        %2620 = vmatprep.subr.bf16.mxu0 0
        %2621 = vmatpush1.bf16.msra.mxu0 0
        %2622 = vmatprep.mubr.bf16.mxu0 0
        %2623 = vmatmul.mubr.bf16.gmra.mrb[0].mxu0 %v2585
        %v2624 = vpop.f32.mrb[0].mxu0
        %v2625 = vadd.f32 0.0, %v2624
        %v2626 = vpop.f32.mrb[0].mxu0
        %v2627 = vpop.f32.mrb[0].mxu0
        %v2628 = vpop.f32.mrb[0].mxu0
        %2629 = vdwg.mxu0
        %v2631 = vsel %vm1888, %v2351, 0
        %v2634 = vsel %vm2356, %v1873, 0
        %2636 = vmatprep.subr.bf16.mxu0 0
        %2637 = vmatpush1.bf16.msra.mxu0 %v2634
        %2638 = vmatprep.subr.bf16.mxu0 0
        %2639 = vmatpush1.bf16.msra.mxu0 0
        %2640 = vmatprep.subr.bf16.mxu0 0
        %2641 = vmatpush1.bf16.msra.mxu0 0
        %2642 = vmatprep.subr.bf16.mxu0 0
        %2643 = vmatpush1.bf16.msra.mxu0 0
        %2644 = vmatprep.subr.bf16.mxu0 0
        %2645 = vmatpush1.bf16.msra.mxu0 0
        %2646 = vmatprep.subr.bf16.mxu0 0
        %2647 = vmatpush1.bf16.msra.mxu0 0
        %2648 = vmatprep.subr.bf16.mxu0 0
        %2649 = vmatpush1.bf16.msra.mxu0 0
        %2650 = vmatprep.subr.bf16.mxu0 0
        %2651 = vmatpush1.bf16.msra.mxu0 0
        %2652 = vmatprep.subr.bf16.mxu0 0
        %2653 = vmatpush1.bf16.msra.mxu0 0
        %2654 = vmatprep.subr.bf16.mxu0 0
        %2655 = vmatpush1.bf16.msra.mxu0 0
        %2656 = vmatprep.subr.bf16.mxu0 0
        %2657 = vmatpush1.bf16.msra.mxu0 0
        %2658 = vmatprep.subr.bf16.mxu0 0
        %2659 = vmatpush1.bf16.msra.mxu0 0
        %2660 = vmatprep.subr.bf16.mxu0 0
        %2661 = vmatpush1.bf16.msra.mxu0 0
        %2662 = vmatprep.subr.bf16.mxu0 0
        %2663 = vmatpush1.bf16.msra.mxu0 0
        %2664 = vmatprep.subr.bf16.mxu0 0
        %2665 = vmatpush1.bf16.msra.mxu0 0
        %2666 = vmatprep.subr.bf16.mxu0 0
        %2667 = vmatpush1.bf16.msra.mxu0 0
        %2668 = vmatprep.mubr.bf16.mxu0 0
        %2669 = vmatmul.mubr.bf16.gmra.mrb[0].mxu0 %v2631
        %v2670 = vpop.f32.mrb[0].mxu0
        %v2671 = vadd.f32 0.0, %v2670
        %v2672 = vpop.f32.mrb[0].mxu0
        %v2673 = vpop.f32.mrb[0].mxu0
        %v2674 = vpop.f32.mrb[0].mxu0
        %2675 = vdwg.mxu0
        %v2677 = vsel %vm1888, %v2352, 0
        %v2680 = vsel %vm2356, %v1875, 0
        %2682 = vmatprep.subr.bf16.mxu0 0
        %2683 = vmatpush1.bf16.msra.mxu0 %v2680
        %2684 = vmatprep.subr.bf16.mxu0 0
        %2685 = vmatpush1.bf16.msra.mxu0 0
        %2686 = vmatprep.subr.bf16.mxu0 0
        %2687 = vmatpush1.bf16.msra.mxu0 0
        %2688 = vmatprep.subr.bf16.mxu0 0
        %2689 = vmatpush1.bf16.msra.mxu0 0
        %2690 = vmatprep.subr.bf16.mxu0 0
        %2691 = vmatpush1.bf16.msra.mxu0 0
        %2692 = vmatprep.subr.bf16.mxu0 0
        %2693 = vmatpush1.bf16.msra.mxu0 0
        %2694 = vmatprep.subr.bf16.mxu0 0
        %2695 = vmatpush1.bf16.msra.mxu0 0
        %2696 = vmatprep.subr.bf16.mxu0 0
        %2697 = vmatpush1.bf16.msra.mxu0 0
        %2698 = vmatprep.subr.bf16.mxu0 0
        %2699 = vmatpush1.bf16.msra.mxu0 0
        %2700 = vmatprep.subr.bf16.mxu0 0
        %2701 = vmatpush1.bf16.msra.mxu0 0
        %2702 = vmatprep.subr.bf16.mxu0 0
        %2703 = vmatpush1.bf16.msra.mxu0 0
        %2704 = vmatprep.subr.bf16.mxu0 0
        %2705 = vmatpush1.bf16.msra.mxu0 0
        %2706 = vmatprep.subr.bf16.mxu0 0
        %2707 = vmatpush1.bf16.msra.mxu0 0
        %2708 = vmatprep.subr.bf16.mxu0 0
        %2709 = vmatpush1.bf16.msra.mxu0 0
        %2710 = vmatprep.subr.bf16.mxu0 0
        %2711 = vmatpush1.bf16.msra.mxu0 0
        %2712 = vmatprep.subr.bf16.mxu0 0
        %2713 = vmatpush1.bf16.msra.mxu0 0
        %2714 = vmatprep.mubr.bf16.mxu0 0
        %2715 = vmatmul.mubr.bf16.gmra.mrb[0].mxu0 %v2677
        %v2716 = vpop.f32.mrb[0].mxu0
        %v2717 = vadd.f32 0.0, %v2716
        %v2718 = vpop.f32.mrb[0].mxu0
        %v2719 = vpop.f32.mrb[0].mxu0
        %v2720 = vpop.f32.mrb[0].mxu0
        %2721 = vdwg.mxu0
        %v2722 = vpack.c.bf16 %v2395, %v2395
        %v2723 = vpack.c.bf16 %v2441, %v2441
        %v2724 = vpack.c.bf16 %v2487, %v2487
        %v2725 = vpack.c.bf16 %v2533, %v2533
        %v2726 = vpack.c.bf16 %v2579, %v2579
        %v2727 = vpack.c.bf16 %v2625, %v2625
        %v2728 = vpack.c.bf16 %v2671, %v2671
        %v2729 = vpack.c.bf16 %v2717, %v2717
        %v2732 = vunpack.c.l.b16 %v2722
        %v2733 = vunpack.c.l.b16 %v2723
        %v2734 = vpack.c.b16 %v2733, %v2732
        %v2737 = vunpack.c.l.b16 %v2724
        %v2738 = vunpack.c.l.b16 %v2725
        %v2739 = vpack.c.b16 %v2738, %v2737
        %2740 = vrot.lane.b32.xlu0 %v2739, 8
        %v2741 = vpop.permute.xlu0 %2740
        %v2744 = vunpack.c.l.b16 %v2726
        %v2745 = vunpack.c.l.b16 %v2727
        %v2746 = vpack.c.b16 %v2745, %v2744
        %2747 = vrot.lane.b32.xlu0 %v2746, 16
        %v2748 = vpop.permute.xlu0 %2747
        %v2751 = vunpack.c.l.b16 %v2728
        %v2752 = vunpack.c.l.b16 %v2729
        %v2753 = vpack.c.b16 %v2752, %v2751
        %2754 = vrot.lane.b32.xlu0 %v2753, 24
        %v2755 = vpop.permute.xlu0 %2754
        %v2758 = vsel %vm1888, %v2734, %v2741
        %vm2759 = vcmask 130048
        %v2761 = vsel %vm2759, %v2758, %v2748
        %vm2762 = vcmask 195584
        %v2764 = vsel %vm2762, %v2761, %v2755
        %v2765 = vld [vmem:[%s1571] sm:$0xf]
        %v2766 = vld [vmem:[%s1571 + $0x4] sm:$0xf]
        %v2767 = vld [vmem:[%s1571 + $0x8] sm:$0xf]
        %v2768 = vld [vmem:[%s1571 + $0xc] sm:$0xf]
        %v2769 = vld [vmem:[%s1310] sm:$0x1]
        %v2771 = vlaneseq
        %v2772 = vshrl.u32 %v2771, 7
        %v2773 = vsub.s32 0, %v2772
        %v2774 = vrot.slane %v2769, %v2773
        %v2780 = vunpack.c.l.b16 %v2765
        %v2781 = vunpack.c.l.b16 %v2766
        %v2782 = vunpack.c.l.b16 %v2767
        %v2783 = vunpack.c.l.b16 %v2768
        %v2784 = vpack.c.b16 %v2781, %v2780
        %v2785 = vpack.c.b16 %v2783, %v2782
        %v2788 = vsel %vm1649, %v2764, 0
        %2790 = vmatprep.subr.bf16.mxu0 0
        %2791 = vmatpush1.bf16.msra.mxu0 %v2784
        %2792 = vmatprep.subr.bf16.mxu0 0
        %2793 = vmatpush1.bf16.msra.mxu0 %v2785
        %2794 = vmatprep.subr.bf16.mxu0 0
        %2795 = vmatpush1.bf16.msra.mxu0 0
        %2796 = vmatprep.subr.bf16.mxu0 0
        %2797 = vmatpush1.bf16.msra.mxu0 0
        %2798 = vmatprep.subr.bf16.mxu0 0
        %2799 = vmatpush1.bf16.msra.mxu0 0
        %2800 = vmatprep.subr.bf16.mxu0 0
        %2801 = vmatpush1.bf16.msra.mxu0 0
        %2802 = vmatprep.subr.bf16.mxu0 0
        %2803 = vmatpush1.bf16.msra.mxu0 0
        %2804 = vmatprep.subr.bf16.mxu0 0
        %2805 = vmatpush1.bf16.msra.mxu0 0
        %2806 = vmatprep.subr.bf16.mxu0 0
        %2807 = vmatpush1.bf16.msra.mxu0 0
        %2808 = vmatprep.subr.bf16.mxu0 0
        %2809 = vmatpush1.bf16.msra.mxu0 0
        %2810 = vmatprep.subr.bf16.mxu0 0
        %2811 = vmatpush1.bf16.msra.mxu0 0
        %2812 = vmatprep.subr.bf16.mxu0 0
        %2813 = vmatpush1.bf16.msra.mxu0 0
        %2814 = vmatprep.subr.bf16.mxu0 0
        %2815 = vmatpush1.bf16.msra.mxu0 0
        %2816 = vmatprep.subr.bf16.mxu0 0
        %2817 = vmatpush1.bf16.msra.mxu0 0
        %2818 = vmatprep.subr.bf16.mxu0 0
        %2819 = vmatpush1.bf16.msra.mxu0 0
        %2820 = vmatprep.subr.bf16.mxu0 0
        %2821 = vmatpush1.bf16.msra.mxu0 0
        %2822 = vmatprep.mubr.bf16.mxu0 0
        %2823 = vmatmul.mubr.bf16.gmra.mrb[0].mxu0 %v2788
        %v2824 = vpop.f32.mrb[0].mxu0
        %v2825 = vadd.f32 %v2774, %v2824
        %v2826 = vpop.f32.mrb[0].mxu0
        %v2827 = vpop.f32.mrb[0].mxu0
        %v2828 = vadd.f32 %v2774, %v2827
        %v2829 = vpop.f32.mrb[0].mxu0
        %2830 = vdwg.mxu0
        %v2831 = vadd.f32 %v1617, %v2825
        %v2832 = vadd.f32 %v1618, %v2828
        %v2833 = vsel %vm1649, %v2831, 0.0
        %2834 = vadd.xlane.f32.xlu0 %v2833
        %v2835 = vpop.xlane.xlu0 %2834
        %v2836 = vsel %vm1649, %v2832, 0.0
        %2837 = vadd.xlane.f32.xlu0 %v2836
        %v2838 = vpop.xlane.xlu0 %2837
        %v2839 = vrcp.pop 32.0
        %v2840 = vmul.f32 %v2835, %v2839
        %v2841 = vmul.f32 %v2838, %v2839
        %v2842 = vmul.f32 %v2831, %v2831
        %v2843 = vmul.f32 %v2832, %v2832
        %v2844 = vsel %vm1649, %v2842, 0.0
        %2845 = vadd.xlane.f32.xlu0 %v2844
        %v2846 = vpop.xlane.xlu0 %2845
        %v2847 = vsel %vm1649, %v2843, 0.0
        %2848 = vadd.xlane.f32.xlu0 %v2847
        %v2849 = vpop.xlane.xlu0 %2848
        %v2850 = vmul.f32 %v2846, %v2839
        %v2851 = vmul.f32 %v2849, %v2839
        %v2852 = vsub.f32 %v2831, %v2840
        %v2853 = vsub.f32 %v2832, %v2841
        %v2854 = vmul.f32 %v2840, %v2840
        %v2855 = vmul.f32 %v2841, %v2841
        %v2856 = vsub.f32 %v2850, %v2854
        %v2857 = vsub.f32 %v2851, %v2855
        %v2858 = vadd.f32 %v2856, 1e-05
        %v2859 = vadd.f32 %v2857, 1e-05
        %v2860 = vrsqrt.pop %v2858
        %v2861 = vrsqrt.pop %v2859
        %v2862 = vmul.f32 %v2852, %v2860
        %v2863 = vmul.f32 %v2853, %v2861
        %v2864 = vld [vmem:[%s1588] sm:$0x1]
        %v2866 = vlaneseq
        %v2867 = vshrl.u32 %v2866, 7
        %v2868 = vsub.s32 0, %v2867
        %v2869 = vrot.slane %v2864, %v2868
        %v2871 = vmul.f32 %v2862, %v2869
        %v2872 = vmul.f32 %v2863, %v2869
        %v2873 = vld [vmem:[%s1591] sm:$0x1]
        %v2875 = vlaneseq
        %v2876 = vshrl.u32 %v2875, 7
        %v2877 = vsub.s32 0, %v2876
        %v2878 = vrot.slane %v2873, %v2877
        %v2880 = vadd.f32 %v2871, %v2878
        %v2881 = vadd.f32 %v2872, %v2878
        %v2882 = vpack.c.bf16 %v2881, %v2880
        %v2883 = vld [vmem:[%s1319] sm:$0xf]
        %v2884 = vld [vmem:[%s1319 + $0x4] sm:$0xf]
        %v2885 = vld [vmem:[%s1319 + $0x8] sm:$0xf]
        %v2886 = vld [vmem:[%s1319 + $0xc] sm:$0xf]
        %v2887 = vld [vmem:[%s1327] sm:$0x1]
        %v2889 = vlaneseq
        %v2890 = vshrl.u32 %v2889, 7
        %v2891 = vsub.s32 0, %v2890
        %v2892 = vrot.slane %v2887, %v2891
        %v2898 = vunpack.c.l.b16 %v2883
        %v2899 = vunpack.c.l.b16 %v2884
        %v2900 = vunpack.c.l.b16 %v2885
        %v2901 = vunpack.c.l.b16 %v2886
        %v2902 = vpack.c.b16 %v2899, %v2898
        %v2903 = vpack.c.b16 %v2901, %v2900
        %v2907 = vsel %vm1649, %v2882, 0
        %2909 = vmatprep.subr.bf16.mxu0 0
        %2910 = vmatpush1.bf16.msra.mxu0 %v2902
        %2911 = vmatprep.subr.bf16.mxu0 0
        %2912 = vmatpush1.bf16.msra.mxu0 %v2903
        %2913 = vmatprep.subr.bf16.mxu0 0
        %2914 = vmatpush1.bf16.msra.mxu0 0
        %2915 = vmatprep.subr.bf16.mxu0 0
        %2916 = vmatpush1.bf16.msra.mxu0 0
        %2917 = vmatprep.subr.bf16.mxu0 0
        %2918 = vmatpush1.bf16.msra.mxu0 0
        %2919 = vmatprep.subr.bf16.mxu0 0
        %2920 = vmatpush1.bf16.msra.mxu0 0
        %2921 = vmatprep.subr.bf16.mxu0 0
        %2922 = vmatpush1.bf16.msra.mxu0 0
        %2923 = vmatprep.subr.bf16.mxu0 0
        %2924 = vmatpush1.bf16.msra.mxu0 0
        %2925 = vmatprep.subr.bf16.mxu0 0
        %2926 = vmatpush1.bf16.msra.mxu0 0
        %2927 = vmatprep.subr.bf16.mxu0 0
        %2928 = vmatpush1.bf16.msra.mxu0 0
        %2929 = vmatprep.subr.bf16.mxu0 0
        %2930 = vmatpush1.bf16.msra.mxu0 0
        %2931 = vmatprep.subr.bf16.mxu0 0
        %2932 = vmatpush1.bf16.msra.mxu0 0
        %2933 = vmatprep.subr.bf16.mxu0 0
        %2934 = vmatpush1.bf16.msra.mxu0 0
        %2935 = vmatprep.subr.bf16.mxu0 0
        %2936 = vmatpush1.bf16.msra.mxu0 0
        %2937 = vmatprep.subr.bf16.mxu0 0
        %2938 = vmatpush1.bf16.msra.mxu0 0
        %2939 = vmatprep.subr.bf16.mxu0 0
        %2940 = vmatpush1.bf16.msra.mxu0 0
        %2941 = vmatprep.mubr.bf16.mxu0 0
        %2942 = vmatmul.mubr.bf16.gmra.mrb[0].mxu0 %v2907
        %v2943 = vpop.f32.mrb[0].mxu0
        %v2944 = vadd.f32 %v2892, %v2943
        %v2945 = vpop.f32.mrb[0].mxu0
        %v2946 = vpop.f32.mrb[0].mxu0
        %v2947 = vadd.f32 %v2892, %v2946
        %v2948 = vpop.f32.mrb[0].mxu0
        %2949 = vdwg.mxu0
        %v2950 = vld [vmem:[%s1336] sm:$0xf]
        %v2951 = vld [vmem:[%s1336 + $0x4] sm:$0xf]
        %v2952 = vld [vmem:[%s1336 + $0x8] sm:$0xf]
        %v2953 = vld [vmem:[%s1336 + $0xc] sm:$0xf]
        %v2954 = vld [vmem:[%s1344] sm:$0x1]
        %v2956 = vlaneseq
        %v2957 = vshrl.u32 %v2956, 7
        %v2958 = vsub.s32 0, %v2957
        %v2959 = vrot.slane %v2954, %v2958
        %v2965 = vunpack.c.l.b16 %v1619
        %v2966 = vunpack.c.l.b16 %v1620
        %v2967 = vunpack.c.l.b16 %v1621
        %v2968 = vunpack.c.l.b16 %v1622
        %v2969 = vpack.c.b16 %v2966, %v2965
        %v2970 = vpack.c.b16 %v2968, %v2967
        %v2975 = vunpack.c.l.b16 %v2950
        %v2976 = vunpack.c.l.b16 %v2951
        %v2977 = vunpack.c.l.b16 %v2952
        %v2978 = vunpack.c.l.b16 %v2953
        %v2979 = vpack.c.b16 %v2976, %v2975
        %v2980 = vpack.c.b16 %v2978, %v2977
        %v2984 = vsel %vm1649, %v2969, 0
        %v2987 = vsel %vm1649, %v2970, 0
        %2989 = vmatprep.subr.bf16.mxu0 0
        %2990 = vmatpush1.bf16.msra.mxu0 %v2979
        %2991 = vmatprep.subr.bf16.mxu0 0
        %2992 = vmatpush1.bf16.msra.mxu0 %v2980
        %2993 = vmatprep.subr.bf16.mxu0 0
        %2994 = vmatpush1.bf16.msra.mxu0 0
        %2995 = vmatprep.subr.bf16.mxu0 0
        %2996 = vmatpush1.bf16.msra.mxu0 0
        %2997 = vmatprep.subr.bf16.mxu0 0
        %2998 = vmatpush1.bf16.msra.mxu0 0
        %2999 = vmatprep.subr.bf16.mxu0 0
        %3000 = vmatpush1.bf16.msra.mxu0 0
        %3001 = vmatprep.subr.bf16.mxu0 0
        %3002 = vmatpush1.bf16.msra.mxu0 0
        %3003 = vmatprep.subr.bf16.mxu0 0
        %3004 = vmatpush1.bf16.msra.mxu0 0
        %3005 = vmatprep.subr.bf16.mxu0 0
        %3006 = vmatpush1.bf16.msra.mxu0 0
        %3007 = vmatprep.subr.bf16.mxu0 0
        %3008 = vmatpush1.bf16.msra.mxu0 0
        %3009 = vmatprep.subr.bf16.mxu0 0
        %3010 = vmatpush1.bf16.msra.mxu0 0
        %3011 = vmatprep.subr.bf16.mxu0 0
        %3012 = vmatpush1.bf16.msra.mxu0 0
        %3013 = vmatprep.subr.bf16.mxu0 0
        %3014 = vmatpush1.bf16.msra.mxu0 0
        %3015 = vmatprep.subr.bf16.mxu0 0
        %3016 = vmatpush1.bf16.msra.mxu0 0
        %3017 = vmatprep.subr.bf16.mxu0 0
        %3018 = vmatpush1.bf16.msra.mxu0 0
        %3019 = vmatprep.subr.bf16.mxu0 0
        %3020 = vmatpush1.bf16.msra.mxu0 0
        %3021 = vmatprep.mubr.bf16.mxu0 0
        %3022 = vmatmul.mubr.bf16.gmra.mrb[0].mxu0 %v2984
        %v3023 = vpop.f32.mrb[0].mxu0
        %v3024 = vadd.f32 %v2959, %v3023
        %v3025 = vpop.f32.mrb[0].mxu0
        %v3026 = vpop.f32.mrb[0].mxu0
        %v3027 = vadd.f32 %v2959, %v3026
        %v3028 = vpop.f32.mrb[0].mxu0
        %3029 = vmatprep.mubr.bf16.mxu0 0
        %3030 = vmatmul.mubr.bf16.gmra.mrb[0].mxu0 %v2987
        %v3031 = vpop.f32.mrb[0].mxu0
        %v3032 = vadd.f32 %v2959, %v3031
        %v3033 = vpop.f32.mrb[0].mxu0
        %v3034 = vpop.f32.mrb[0].mxu0
        %v3035 = vadd.f32 %v2959, %v3034
        %v3036 = vpop.f32.mrb[0].mxu0
        %3037 = vdwg.mxu0
        %v3038 = vld [vmem:[%s1353] sm:$0xf]
        %v3039 = vld [vmem:[%s1353 + $0x4] sm:$0xf]
        %v3040 = vld [vmem:[%s1353 + $0x8] sm:$0xf]
        %v3041 = vld [vmem:[%s1353 + $0xc] sm:$0xf]
        %v3042 = vld [vmem:[%s1361] sm:$0x1]
        %v3044 = vlaneseq
        %v3045 = vshrl.u32 %v3044, 7
        %v3046 = vsub.s32 0, %v3045
        %v3047 = vrot.slane %v3042, %v3046
        %v3053 = vunpack.c.l.b16 %v3038
        %v3054 = vunpack.c.l.b16 %v3039
        %v3055 = vunpack.c.l.b16 %v3040
        %v3056 = vunpack.c.l.b16 %v3041
        %v3057 = vpack.c.b16 %v3054, %v3053
        %v3058 = vpack.c.b16 %v3056, %v3055
        %3061 = vmatprep.subr.bf16.mxu0 0
        %3062 = vmatpush1.bf16.msra.mxu0 %v3057
        %3063 = vmatprep.subr.bf16.mxu0 0
        %3064 = vmatpush1.bf16.msra.mxu0 %v3058
        %3065 = vmatprep.subr.bf16.mxu0 0
        %3066 = vmatpush1.bf16.msra.mxu0 0
        %3067 = vmatprep.subr.bf16.mxu0 0
        %3068 = vmatpush1.bf16.msra.mxu0 0
        %3069 = vmatprep.subr.bf16.mxu0 0
        %3070 = vmatpush1.bf16.msra.mxu0 0
        %3071 = vmatprep.subr.bf16.mxu0 0
        %3072 = vmatpush1.bf16.msra.mxu0 0
        %3073 = vmatprep.subr.bf16.mxu0 0
        %3074 = vmatpush1.bf16.msra.mxu0 0
        %3075 = vmatprep.subr.bf16.mxu0 0
        %3076 = vmatpush1.bf16.msra.mxu0 0
        %3077 = vmatprep.subr.bf16.mxu0 0
        %3078 = vmatpush1.bf16.msra.mxu0 0
        %3079 = vmatprep.subr.bf16.mxu0 0
        %3080 = vmatpush1.bf16.msra.mxu0 0
        %3081 = vmatprep.subr.bf16.mxu0 0
        %3082 = vmatpush1.bf16.msra.mxu0 0
        %3083 = vmatprep.subr.bf16.mxu0 0
        %3084 = vmatpush1.bf16.msra.mxu0 0
        %3085 = vmatprep.subr.bf16.mxu0 0
        %3086 = vmatpush1.bf16.msra.mxu0 0
        %3087 = vmatprep.subr.bf16.mxu0 0
        %3088 = vmatpush1.bf16.msra.mxu0 0
        %3089 = vmatprep.subr.bf16.mxu0 0
        %3090 = vmatpush1.bf16.msra.mxu0 0
        %3091 = vmatprep.subr.bf16.mxu0 0
        %3092 = vmatpush1.bf16.msra.mxu0 0
        %3093 = vmatprep.mubr.bf16.mxu0 0
        %3094 = vmatmul.mubr.bf16.gmra.mrb[0].mxu0 %v2984
        %v3095 = vpop.f32.mrb[0].mxu0
        %v3096 = vadd.f32 %v3047, %v3095
        %v3097 = vpop.f32.mrb[0].mxu0
        %v3098 = vpop.f32.mrb[0].mxu0
        %v3099 = vadd.f32 %v3047, %v3098
        %v3100 = vpop.f32.mrb[0].mxu0
        %3101 = vmatprep.mubr.bf16.mxu0 0
        %3102 = vmatmul.mubr.bf16.gmra.mrb[0].mxu0 %v2987
        %v3103 = vpop.f32.mrb[0].mxu0
        %v3104 = vadd.f32 %v3047, %v3103
        %v3105 = vpop.f32.mrb[0].mxu0
        %v3106 = vpop.f32.mrb[0].mxu0
        %v3107 = vadd.f32 %v3047, %v3106
        %v3108 = vpop.f32.mrb[0].mxu0
        %3109 = vdwg.mxu0
        %v3110 = vpack.c.bf16 %v2947, %v2944
        %v3112 = vunpack.c.l.b16 %v3110
        %v3113 = vunpack.c.h.b16 %v3110
        %v3114 = vpack.c.b16 %v3112, %v3112
        %v3115 = vpack.c.b16 %v3113, %v3113
        %3116 = vrot.lane.b32.xlu0 %v3114, 120
        %v3117 = vpop.permute.xlu0 %3116
        %3118 = vrot.lane.b32.xlu0 %v3115, 120
        %v3119 = vpop.permute.xlu0 %3118
        %3120 = vrot.lane.b32.xlu0 %v3114, 112
        %v3121 = vpop.permute.xlu0 %3120
        %3122 = vrot.lane.b32.xlu0 %v3115, 112
        %v3123 = vpop.permute.xlu0 %3122
        %3124 = vrot.lane.b32.xlu0 %v3114, 104
        %v3125 = vpop.permute.xlu0 %3124
        %3126 = vrot.lane.b32.xlu0 %v3115, 104
        %v3127 = vpop.permute.xlu0 %3126
        %v3128 = vpack.c.bf16 %v3027, %v3024
        %v3129 = vpack.c.bf16 %v3035, %v3032
        %3132 = vrot.lane.b32.xlu0 %v3128, 120
        %v3133 = vpop.permute.xlu0 %3132
        %3134 = vrot.lane.b32.xlu0 %v3129, 120
        %v3135 = vpop.permute.xlu0 %3134
        %3136 = vrot.lane.b32.xlu0 %v3128, 112
        %v3137 = vpop.permute.xlu0 %3136
        %3138 = vrot.lane.b32.xlu0 %v3129, 112
        %v3139 = vpop.permute.xlu0 %3138
        %3140 = vrot.lane.b32.xlu0 %v3128, 104
        %v3141 = vpop.permute.xlu0 %3140
        %3142 = vrot.lane.b32.xlu0 %v3129, 104
        %v3143 = vpop.permute.xlu0 %3142
        %v3144 = vpack.c.bf16 %v3099, %v3096
        %v3145 = vpack.c.bf16 %v3107, %v3104
        %3148 = vrot.lane.b32.xlu0 %v3144, 120
        %v3149 = vpop.permute.xlu0 %3148
        %3150 = vrot.lane.b32.xlu0 %v3145, 120
        %v3151 = vpop.permute.xlu0 %3150
        %3154 = vrot.lane.b32.xlu0 %v3144, 112
        %v3155 = vpop.permute.xlu0 %3154
        %3156 = vrot.lane.b32.xlu0 %v3145, 112
        %v3157 = vpop.permute.xlu0 %3156
        %3160 = vrot.lane.b32.xlu0 %v3144, 104
        %v3161 = vpop.permute.xlu0 %3160
        %3162 = vrot.lane.b32.xlu0 %v3145, 104
        %v3163 = vpop.permute.xlu0 %3162
        %v3167 = vsel %vm1888, %v3114, 0
        %v3170 = vsel %vm1888, %v3128, 0
        %3172 = vmatprep.subr.bf16.mxu0 0
        %3173 = vmatpush1.bf16.xpose.msra.mxu0 %v3170
        %3174 = vmatprep.subr.bf16.mxu0 0
        %3175 = vmatpush1.bf16.xpose.msra.mxu0 0
        %3176 = vmatprep.subr.bf16.mxu0 0
        %3177 = vmatpush1.bf16.xpose.msra.mxu0 0
        %3178 = vmatprep.subr.bf16.mxu0 0
        %3179 = vmatpush1.bf16.xpose.msra.mxu0 0
        %3180 = vmatprep.subr.bf16.mxu0 0
        %3181 = vmatpush1.bf16.xpose.msra.mxu0 0
        %3182 = vmatprep.subr.bf16.mxu0 0
        %3183 = vmatpush1.bf16.xpose.msra.mxu0 0
        %3184 = vmatprep.subr.bf16.mxu0 0
        %3185 = vmatpush1.bf16.xpose.msra.mxu0 0
        %3186 = vmatprep.subr.bf16.mxu0 0
        %3187 = vmatpush1.bf16.xpose.msra.mxu0 0
        %3188 = vmatprep.subr.bf16.mxu0 0
        %3189 = vmatpush1.bf16.xpose.msra.mxu0 0
        %3190 = vmatprep.subr.bf16.mxu0 0
        %3191 = vmatpush1.bf16.xpose.msra.mxu0 0
        %3192 = vmatprep.subr.bf16.mxu0 0
        %3193 = vmatpush1.bf16.xpose.msra.mxu0 0
        %3194 = vmatprep.subr.bf16.mxu0 0
        %3195 = vmatpush1.bf16.xpose.msra.mxu0 0
        %3196 = vmatprep.subr.bf16.mxu0 0
        %3197 = vmatpush1.bf16.xpose.msra.mxu0 0
        %3198 = vmatprep.subr.bf16.mxu0 0
        %3199 = vmatpush1.bf16.xpose.msra.mxu0 0
        %3200 = vmatprep.subr.bf16.mxu0 0
        %3201 = vmatpush1.bf16.xpose.msra.mxu0 0
        %3202 = vmatprep.subr.bf16.mxu0 0
        %3203 = vmatpush1.bf16.xpose.msra.mxu0 0
        %3204 = vmatprep.mubr.bf16.mxu0 0
        %3205 = vmatmul.mubr.bf16.gmra.mrb[0].mxu0 %v3167
        %v3206 = vpop.f32.mrb[0].mxu0
        %v3207 = vadd.f32 0.0, %v3206
        %v3208 = vpop.f32.mrb[0].mxu0
        %v3209 = vpop.f32.mrb[0].mxu0
        %v3210 = vpop.f32.mrb[0].mxu0
        %3211 = vdwg.mxu0
        %v3213 = vsel %vm1888, %v3115, 0
        %v3216 = vsel %vm1888, %v3129, 0
        %3218 = vmatprep.subr.bf16.mxu0 0
        %3219 = vmatpush1.bf16.xpose.msra.mxu0 %v3216
        %3220 = vmatprep.subr.bf16.mxu0 0
        %3221 = vmatpush1.bf16.xpose.msra.mxu0 0
        %3222 = vmatprep.subr.bf16.mxu0 0
        %3223 = vmatpush1.bf16.xpose.msra.mxu0 0
        %3224 = vmatprep.subr.bf16.mxu0 0
        %3225 = vmatpush1.bf16.xpose.msra.mxu0 0
        %3226 = vmatprep.subr.bf16.mxu0 0
        %3227 = vmatpush1.bf16.xpose.msra.mxu0 0
        %3228 = vmatprep.subr.bf16.mxu0 0
        %3229 = vmatpush1.bf16.xpose.msra.mxu0 0
        %3230 = vmatprep.subr.bf16.mxu0 0
        %3231 = vmatpush1.bf16.xpose.msra.mxu0 0
        %3232 = vmatprep.subr.bf16.mxu0 0
        %3233 = vmatpush1.bf16.xpose.msra.mxu0 0
        %3234 = vmatprep.subr.bf16.mxu0 0
        %3235 = vmatpush1.bf16.xpose.msra.mxu0 0
        %3236 = vmatprep.subr.bf16.mxu0 0
        %3237 = vmatpush1.bf16.xpose.msra.mxu0 0
        %3238 = vmatprep.subr.bf16.mxu0 0
        %3239 = vmatpush1.bf16.xpose.msra.mxu0 0
        %3240 = vmatprep.subr.bf16.mxu0 0
        %3241 = vmatpush1.bf16.xpose.msra.mxu0 0
        %3242 = vmatprep.subr.bf16.mxu0 0
        %3243 = vmatpush1.bf16.xpose.msra.mxu0 0
        %3244 = vmatprep.subr.bf16.mxu0 0
        %3245 = vmatpush1.bf16.xpose.msra.mxu0 0
        %3246 = vmatprep.subr.bf16.mxu0 0
        %3247 = vmatpush1.bf16.xpose.msra.mxu0 0
        %3248 = vmatprep.subr.bf16.mxu0 0
        %3249 = vmatpush1.bf16.xpose.msra.mxu0 0
        %3250 = vmatprep.mubr.bf16.mxu0 0
        %3251 = vmatmul.mubr.bf16.gmra.mrb[0].mxu0 %v3213
        %v3252 = vpop.f32.mrb[0].mxu0
        %v3253 = vadd.f32 0.0, %v3252
        %v3254 = vpop.f32.mrb[0].mxu0
        %v3255 = vpop.f32.mrb[0].mxu0
        %v3256 = vpop.f32.mrb[0].mxu0
        %3257 = vdwg.mxu0
        %v3259 = vsel %vm1888, %v3117, 0
        %v3262 = vsel %vm1888, %v3133, 0
        %3264 = vmatprep.subr.bf16.mxu0 0
        %3265 = vmatpush1.bf16.xpose.msra.mxu0 %v3262
        %3266 = vmatprep.subr.bf16.mxu0 0
        %3267 = vmatpush1.bf16.xpose.msra.mxu0 0
        %3268 = vmatprep.subr.bf16.mxu0 0
        %3269 = vmatpush1.bf16.xpose.msra.mxu0 0
        %3270 = vmatprep.subr.bf16.mxu0 0
        %3271 = vmatpush1.bf16.xpose.msra.mxu0 0
        %3272 = vmatprep.subr.bf16.mxu0 0
        %3273 = vmatpush1.bf16.xpose.msra.mxu0 0
        %3274 = vmatprep.subr.bf16.mxu0 0
        %3275 = vmatpush1.bf16.xpose.msra.mxu0 0
        %3276 = vmatprep.subr.bf16.mxu0 0
        %3277 = vmatpush1.bf16.xpose.msra.mxu0 0
        %3278 = vmatprep.subr.bf16.mxu0 0
        %3279 = vmatpush1.bf16.xpose.msra.mxu0 0
        %3280 = vmatprep.subr.bf16.mxu0 0
        %3281 = vmatpush1.bf16.xpose.msra.mxu0 0
        %3282 = vmatprep.subr.bf16.mxu0 0
        %3283 = vmatpush1.bf16.xpose.msra.mxu0 0
        %3284 = vmatprep.subr.bf16.mxu0 0
        %3285 = vmatpush1.bf16.xpose.msra.mxu0 0
        %3286 = vmatprep.subr.bf16.mxu0 0
        %3287 = vmatpush1.bf16.xpose.msra.mxu0 0
        %3288 = vmatprep.subr.bf16.mxu0 0
        %3289 = vmatpush1.bf16.xpose.msra.mxu0 0
        %3290 = vmatprep.subr.bf16.mxu0 0
        %3291 = vmatpush1.bf16.xpose.msra.mxu0 0
        %3292 = vmatprep.subr.bf16.mxu0 0
        %3293 = vmatpush1.bf16.xpose.msra.mxu0 0
        %3294 = vmatprep.subr.bf16.mxu0 0
        %3295 = vmatpush1.bf16.xpose.msra.mxu0 0
        %3296 = vmatprep.mubr.bf16.mxu0 0
        %3297 = vmatmul.mubr.bf16.gmra.mrb[0].mxu0 %v3259
        %v3298 = vpop.f32.mrb[0].mxu0
        %v3299 = vadd.f32 0.0, %v3298
        %v3300 = vpop.f32.mrb[0].mxu0
        %v3301 = vpop.f32.mrb[0].mxu0
        %v3302 = vpop.f32.mrb[0].mxu0
        %3303 = vdwg.mxu0
        %v3305 = vsel %vm1888, %v3119, 0
        %v3308 = vsel %vm1888, %v3135, 0
        %3310 = vmatprep.subr.bf16.mxu0 0
        %3311 = vmatpush1.bf16.xpose.msra.mxu0 %v3308
        %3312 = vmatprep.subr.bf16.mxu0 0
        %3313 = vmatpush1.bf16.xpose.msra.mxu0 0
        %3314 = vmatprep.subr.bf16.mxu0 0
        %3315 = vmatpush1.bf16.xpose.msra.mxu0 0
        %3316 = vmatprep.subr.bf16.mxu0 0
        %3317 = vmatpush1.bf16.xpose.msra.mxu0 0
        %3318 = vmatprep.subr.bf16.mxu0 0
        %3319 = vmatpush1.bf16.xpose.msra.mxu0 0
        %3320 = vmatprep.subr.bf16.mxu0 0
        %3321 = vmatpush1.bf16.xpose.msra.mxu0 0
        %3322 = vmatprep.subr.bf16.mxu0 0
        %3323 = vmatpush1.bf16.xpose.msra.mxu0 0
        %3324 = vmatprep.subr.bf16.mxu0 0
        %3325 = vmatpush1.bf16.xpose.msra.mxu0 0
        %3326 = vmatprep.subr.bf16.mxu0 0
        %3327 = vmatpush1.bf16.xpose.msra.mxu0 0
        %3328 = vmatprep.subr.bf16.mxu0 0
        %3329 = vmatpush1.bf16.xpose.msra.mxu0 0
        %3330 = vmatprep.subr.bf16.mxu0 0
        %3331 = vmatpush1.bf16.xpose.msra.mxu0 0
        %3332 = vmatprep.subr.bf16.mxu0 0
        %3333 = vmatpush1.bf16.xpose.msra.mxu0 0
        %3334 = vmatprep.subr.bf16.mxu0 0
        %3335 = vmatpush1.bf16.xpose.msra.mxu0 0
        %3336 = vmatprep.subr.bf16.mxu0 0
        %3337 = vmatpush1.bf16.xpose.msra.mxu0 0
        %3338 = vmatprep.subr.bf16.mxu0 0
        %3339 = vmatpush1.bf16.xpose.msra.mxu0 0
        %3340 = vmatprep.subr.bf16.mxu0 0
        %3341 = vmatpush1.bf16.xpose.msra.mxu0 0
        %3342 = vmatprep.mubr.bf16.mxu0 0
        %3343 = vmatmul.mubr.bf16.gmra.mrb[0].mxu0 %v3305
        %v3344 = vpop.f32.mrb[0].mxu0
        %v3345 = vadd.f32 0.0, %v3344
        %v3346 = vpop.f32.mrb[0].mxu0
        %v3347 = vpop.f32.mrb[0].mxu0
        %v3348 = vpop.f32.mrb[0].mxu0
        %3349 = vdwg.mxu0
        %v3351 = vsel %vm1888, %v3121, 0
        %v3354 = vsel %vm1888, %v3137, 0
        %3356 = vmatprep.subr.bf16.mxu0 0
        %3357 = vmatpush1.bf16.xpose.msra.mxu0 %v3354
        %3358 = vmatprep.subr.bf16.mxu0 0
        %3359 = vmatpush1.bf16.xpose.msra.mxu0 0
        %3360 = vmatprep.subr.bf16.mxu0 0
        %3361 = vmatpush1.bf16.xpose.msra.mxu0 0
        %3362 = vmatprep.subr.bf16.mxu0 0
        %3363 = vmatpush1.bf16.xpose.msra.mxu0 0
        %3364 = vmatprep.subr.bf16.mxu0 0
        %3365 = vmatpush1.bf16.xpose.msra.mxu0 0
        %3366 = vmatprep.subr.bf16.mxu0 0
        %3367 = vmatpush1.bf16.xpose.msra.mxu0 0
        %3368 = vmatprep.subr.bf16.mxu0 0
        %3369 = vmatpush1.bf16.xpose.msra.mxu0 0
        %3370 = vmatprep.subr.bf16.mxu0 0
        %3371 = vmatpush1.bf16.xpose.msra.mxu0 0
        %3372 = vmatprep.subr.bf16.mxu0 0
        %3373 = vmatpush1.bf16.xpose.msra.mxu0 0
        %3374 = vmatprep.subr.bf16.mxu0 0
        %3375 = vmatpush1.bf16.xpose.msra.mxu0 0
        %3376 = vmatprep.subr.bf16.mxu0 0
        %3377 = vmatpush1.bf16.xpose.msra.mxu0 0
        %3378 = vmatprep.subr.bf16.mxu0 0
        %3379 = vmatpush1.bf16.xpose.msra.mxu0 0
        %3380 = vmatprep.subr.bf16.mxu0 0
        %3381 = vmatpush1.bf16.xpose.msra.mxu0 0
        %3382 = vmatprep.subr.bf16.mxu0 0
        %3383 = vmatpush1.bf16.xpose.msra.mxu0 0
        %3384 = vmatprep.subr.bf16.mxu0 0
        %3385 = vmatpush1.bf16.xpose.msra.mxu0 0
        %3386 = vmatprep.subr.bf16.mxu0 0
        %3387 = vmatpush1.bf16.xpose.msra.mxu0 0
        %3388 = vmatprep.mubr.bf16.mxu0 0
        %3389 = vmatmul.mubr.bf16.gmra.mrb[0].mxu0 %v3351
        %v3390 = vpop.f32.mrb[0].mxu0
        %v3391 = vadd.f32 0.0, %v3390
        %v3392 = vpop.f32.mrb[0].mxu0
        %v3393 = vpop.f32.mrb[0].mxu0
        %v3394 = vpop.f32.mrb[0].mxu0
        %3395 = vdwg.mxu0
        %v3397 = vsel %vm1888, %v3123, 0
        %v3400 = vsel %vm1888, %v3139, 0
        %3402 = vmatprep.subr.bf16.mxu0 0
        %3403 = vmatpush1.bf16.xpose.msra.mxu0 %v3400
        %3404 = vmatprep.subr.bf16.mxu0 0
        %3405 = vmatpush1.bf16.xpose.msra.mxu0 0
        %3406 = vmatprep.subr.bf16.mxu0 0
        %3407 = vmatpush1.bf16.xpose.msra.mxu0 0
        %3408 = vmatprep.subr.bf16.mxu0 0
        %3409 = vmatpush1.bf16.xpose.msra.mxu0 0
        %3410 = vmatprep.subr.bf16.mxu0 0
        %3411 = vmatpush1.bf16.xpose.msra.mxu0 0
        %3412 = vmatprep.subr.bf16.mxu0 0
        %3413 = vmatpush1.bf16.xpose.msra.mxu0 0
        %3414 = vmatprep.subr.bf16.mxu0 0
        %3415 = vmatpush1.bf16.xpose.msra.mxu0 0
        %3416 = vmatprep.subr.bf16.mxu0 0
        %3417 = vmatpush1.bf16.xpose.msra.mxu0 0
        %3418 = vmatprep.subr.bf16.mxu0 0
        %3419 = vmatpush1.bf16.xpose.msra.mxu0 0
        %3420 = vmatprep.subr.bf16.mxu0 0
        %3421 = vmatpush1.bf16.xpose.msra.mxu0 0
        %3422 = vmatprep.subr.bf16.mxu0 0
        %3423 = vmatpush1.bf16.xpose.msra.mxu0 0
        %3424 = vmatprep.subr.bf16.mxu0 0
        %3425 = vmatpush1.bf16.xpose.msra.mxu0 0
        %3426 = vmatprep.subr.bf16.mxu0 0
        %3427 = vmatpush1.bf16.xpose.msra.mxu0 0
        %3428 = vmatprep.subr.bf16.mxu0 0
        %3429 = vmatpush1.bf16.xpose.msra.mxu0 0
        %3430 = vmatprep.subr.bf16.mxu0 0
        %3431 = vmatpush1.bf16.xpose.msra.mxu0 0
        %3432 = vmatprep.subr.bf16.mxu0 0
        %3433 = vmatpush1.bf16.xpose.msra.mxu0 0
        %3434 = vmatprep.mubr.bf16.mxu0 0
        %3435 = vmatmul.mubr.bf16.gmra.mrb[0].mxu0 %v3397
        %v3436 = vpop.f32.mrb[0].mxu0
        %v3437 = vadd.f32 0.0, %v3436
        %v3438 = vpop.f32.mrb[0].mxu0
        %v3439 = vpop.f32.mrb[0].mxu0
        %v3440 = vpop.f32.mrb[0].mxu0
        %3441 = vdwg.mxu0
        %v3443 = vsel %vm1888, %v3125, 0
        %v3446 = vsel %vm1888, %v3141, 0
        %3448 = vmatprep.subr.bf16.mxu0 0
        %3449 = vmatpush1.bf16.xpose.msra.mxu0 %v3446
        %3450 = vmatprep.subr.bf16.mxu0 0
        %3451 = vmatpush1.bf16.xpose.msra.mxu0 0
        %3452 = vmatprep.subr.bf16.mxu0 0
        %3453 = vmatpush1.bf16.xpose.msra.mxu0 0
        %3454 = vmatprep.subr.bf16.mxu0 0
        %3455 = vmatpush1.bf16.xpose.msra.mxu0 0
        %3456 = vmatprep.subr.bf16.mxu0 0
        %3457 = vmatpush1.bf16.xpose.msra.mxu0 0
        %3458 = vmatprep.subr.bf16.mxu0 0
        %3459 = vmatpush1.bf16.xpose.msra.mxu0 0
        %3460 = vmatprep.subr.bf16.mxu0 0
        %3461 = vmatpush1.bf16.xpose.msra.mxu0 0
        %3462 = vmatprep.subr.bf16.mxu0 0
        %3463 = vmatpush1.bf16.xpose.msra.mxu0 0
        %3464 = vmatprep.subr.bf16.mxu0 0
        %3465 = vmatpush1.bf16.xpose.msra.mxu0 0
        %3466 = vmatprep.subr.bf16.mxu0 0
        %3467 = vmatpush1.bf16.xpose.msra.mxu0 0
        %3468 = vmatprep.subr.bf16.mxu0 0
        %3469 = vmatpush1.bf16.xpose.msra.mxu0 0
        %3470 = vmatprep.subr.bf16.mxu0 0
        %3471 = vmatpush1.bf16.xpose.msra.mxu0 0
        %3472 = vmatprep.subr.bf16.mxu0 0
        %3473 = vmatpush1.bf16.xpose.msra.mxu0 0
        %3474 = vmatprep.subr.bf16.mxu0 0
        %3475 = vmatpush1.bf16.xpose.msra.mxu0 0
        %3476 = vmatprep.subr.bf16.mxu0 0
        %3477 = vmatpush1.bf16.xpose.msra.mxu0 0
        %3478 = vmatprep.subr.bf16.mxu0 0
        %3479 = vmatpush1.bf16.xpose.msra.mxu0 0
        %3480 = vmatprep.mubr.bf16.mxu0 0
        %3481 = vmatmul.mubr.bf16.gmra.mrb[0].mxu0 %v3443
        %v3482 = vpop.f32.mrb[0].mxu0
        %v3483 = vadd.f32 0.0, %v3482
        %v3484 = vpop.f32.mrb[0].mxu0
        %v3485 = vpop.f32.mrb[0].mxu0
        %v3486 = vpop.f32.mrb[0].mxu0
        %3487 = vdwg.mxu0
        %v3489 = vsel %vm1888, %v3127, 0
        %v3492 = vsel %vm1888, %v3143, 0
        %3494 = vmatprep.subr.bf16.mxu0 0
        %3495 = vmatpush1.bf16.xpose.msra.mxu0 %v3492
        %3496 = vmatprep.subr.bf16.mxu0 0
        %3497 = vmatpush1.bf16.xpose.msra.mxu0 0
        %3498 = vmatprep.subr.bf16.mxu0 0
        %3499 = vmatpush1.bf16.xpose.msra.mxu0 0
        %3500 = vmatprep.subr.bf16.mxu0 0
        %3501 = vmatpush1.bf16.xpose.msra.mxu0 0
        %3502 = vmatprep.subr.bf16.mxu0 0
        %3503 = vmatpush1.bf16.xpose.msra.mxu0 0
        %3504 = vmatprep.subr.bf16.mxu0 0
        %3505 = vmatpush1.bf16.xpose.msra.mxu0 0
        %3506 = vmatprep.subr.bf16.mxu0 0
        %3507 = vmatpush1.bf16.xpose.msra.mxu0 0
        %3508 = vmatprep.subr.bf16.mxu0 0
        %3509 = vmatpush1.bf16.xpose.msra.mxu0 0
        %3510 = vmatprep.subr.bf16.mxu0 0
        %3511 = vmatpush1.bf16.xpose.msra.mxu0 0
        %3512 = vmatprep.subr.bf16.mxu0 0
        %3513 = vmatpush1.bf16.xpose.msra.mxu0 0
        %3514 = vmatprep.subr.bf16.mxu0 0
        %3515 = vmatpush1.bf16.xpose.msra.mxu0 0
        %3516 = vmatprep.subr.bf16.mxu0 0
        %3517 = vmatpush1.bf16.xpose.msra.mxu0 0
        %3518 = vmatprep.subr.bf16.mxu0 0
        %3519 = vmatpush1.bf16.xpose.msra.mxu0 0
        %3520 = vmatprep.subr.bf16.mxu0 0
        %3521 = vmatpush1.bf16.xpose.msra.mxu0 0
        %3522 = vmatprep.subr.bf16.mxu0 0
        %3523 = vmatpush1.bf16.xpose.msra.mxu0 0
        %3524 = vmatprep.subr.bf16.mxu0 0
        %3525 = vmatpush1.bf16.xpose.msra.mxu0 0
        %3526 = vmatprep.mubr.bf16.mxu0 0
        %3527 = vmatmul.mubr.bf16.gmra.mrb[0].mxu0 %v3489
        %v3528 = vpop.f32.mrb[0].mxu0
        %v3529 = vadd.f32 0.0, %v3528
        %v3530 = vpop.f32.mrb[0].mxu0
        %v3531 = vpop.f32.mrb[0].mxu0
        %v3532 = vpop.f32.mrb[0].mxu0
        %3533 = vdwg.mxu0
        %v3534 = vsel %vm2759, %v3207, -inf
        %3535 = vmax.xlane.f32.xlu0 %v3534
        %v3536 = vpop.xlane.xlu0 %3535
        %v3537 = vsel %vm2759, %v3253, -inf
        %3538 = vmax.xlane.f32.xlu0 %v3537
        %v3539 = vpop.xlane.xlu0 %3538
        %v3540 = vsel %vm2759, %v3299, -inf
        %3541 = vmax.xlane.f32.xlu0 %v3540
        %v3542 = vpop.xlane.xlu0 %3541
        %v3543 = vsel %vm2759, %v3345, -inf
        %3544 = vmax.xlane.f32.xlu0 %v3543
        %v3545 = vpop.xlane.xlu0 %3544
        %v3546 = vsel %vm2759, %v3391, -inf
        %3547 = vmax.xlane.f32.xlu0 %v3546
        %v3548 = vpop.xlane.xlu0 %3547
        %v3549 = vsel %vm2759, %v3437, -inf
        %3550 = vmax.xlane.f32.xlu0 %v3549
        %v3551 = vpop.xlane.xlu0 %3550
        %v3552 = vsel %vm2759, %v3483, -inf
        %3553 = vmax.xlane.f32.xlu0 %v3552
        %v3554 = vpop.xlane.xlu0 %3553
        %v3555 = vsel %vm2759, %v3529, -inf
        %3556 = vmax.xlane.f32.xlu0 %v3555
        %v3557 = vpop.xlane.xlu0 %3556
        %v3558 = vsub.f32 %v3207, %v3536
        %v3559 = vsub.f32 %v3253, %v3539
        %v3560 = vsub.f32 %v3299, %v3542
        %v3561 = vsub.f32 %v3345, %v3545
        %v3562 = vsub.f32 %v3391, %v3548
        %v3563 = vsub.f32 %v3437, %v3551
        %v3564 = vsub.f32 %v3483, %v3554
        %v3565 = vsub.f32 %v3529, %v3557
        %v3566 = vmul.f32 %v3558, 1.442695
        %v3567 = vpow.pop %v3566
        %v3568 = vmul.f32 %v3559, 1.442695
        %v3569 = vpow.pop %v3568
        %v3570 = vmul.f32 %v3560, 1.442695
        %v3571 = vpow.pop %v3570
        %v3572 = vmul.f32 %v3561, 1.442695
        %v3573 = vpow.pop %v3572
        %v3574 = vmul.f32 %v3562, 1.442695
        %v3575 = vpow.pop %v3574
        %v3576 = vmul.f32 %v3563, 1.442695
        %v3577 = vpow.pop %v3576
        %v3578 = vmul.f32 %v3564, 1.442695
        %v3579 = vpow.pop %v3578
        %v3580 = vmul.f32 %v3565, 1.442695
        %v3581 = vpow.pop %v3580
        %v3582 = vsel %vm2759, %v3567, 0.0
        %3583 = vadd.xlane.f32.xlu0 %v3582
        %v3584 = vpop.xlane.xlu0 %3583
        %v3585 = vsel %vm2759, %v3569, 0.0
        %3586 = vadd.xlane.f32.xlu0 %v3585
        %v3587 = vpop.xlane.xlu0 %3586
        %v3588 = vsel %vm2759, %v3571, 0.0
        %3589 = vadd.xlane.f32.xlu0 %v3588
        %v3590 = vpop.xlane.xlu0 %3589
        %v3591 = vsel %vm2759, %v3573, 0.0
        %3592 = vadd.xlane.f32.xlu0 %v3591
        %v3593 = vpop.xlane.xlu0 %3592
        %v3594 = vsel %vm2759, %v3575, 0.0
        %3595 = vadd.xlane.f32.xlu0 %v3594
        %v3596 = vpop.xlane.xlu0 %3595
        %v3597 = vsel %vm2759, %v3577, 0.0
        %3598 = vadd.xlane.f32.xlu0 %v3597
        %v3599 = vpop.xlane.xlu0 %3598
        %v3600 = vsel %vm2759, %v3579, 0.0
        %3601 = vadd.xlane.f32.xlu0 %v3600
        %v3602 = vpop.xlane.xlu0 %3601
        %v3603 = vsel %vm2759, %v3581, 0.0
        %3604 = vadd.xlane.f32.xlu0 %v3603
        %v3605 = vpop.xlane.xlu0 %3604
        %v3606 = vrcp.pop %v3584
        %v3607 = vrcp.pop %v3587
        %v3608 = vrcp.pop %v3590
        %v3609 = vrcp.pop %v3593
        %v3610 = vrcp.pop %v3596
        %v3611 = vrcp.pop %v3599
        %v3612 = vrcp.pop %v3602
        %v3613 = vrcp.pop %v3605
        %v3614 = vmul.f32 %v3567, %v3606
        %v3615 = vmul.f32 %v3569, %v3607
        %v3616 = vmul.f32 %v3571, %v3608
        %v3617 = vmul.f32 %v3573, %v3609
        %v3618 = vmul.f32 %v3575, %v3610
        %v3619 = vmul.f32 %v3577, %v3611
        %v3620 = vmul.f32 %v3579, %v3612
        %v3621 = vmul.f32 %v3581, %v3613
        %v3622 = vpack.c.bf16 %v3614, %v3614
        %v3623 = vpack.c.bf16 %v3615, %v3615
        %v3624 = vpack.c.bf16 %v3616, %v3616
        %v3625 = vpack.c.bf16 %v3617, %v3617
        %v3626 = vpack.c.bf16 %v3618, %v3618
        %v3627 = vpack.c.bf16 %v3619, %v3619
        %v3628 = vpack.c.bf16 %v3620, %v3620
        %v3629 = vpack.c.bf16 %v3621, %v3621
        %v3631 = vsel %vm2759, %v3622, 0
        %3633 = vmatprep.subr.bf16.mxu0 0
        %3634 = vmatpush1.bf16.msra.mxu0 %v3144
        %3635 = vmatprep.subr.bf16.mxu0 0
        %3636 = vmatpush1.bf16.msra.mxu0 0
        %3637 = vmatprep.subr.bf16.mxu0 0
        %3638 = vmatpush1.bf16.msra.mxu0 0
        %3639 = vmatprep.subr.bf16.mxu0 0
        %3640 = vmatpush1.bf16.msra.mxu0 0
        %3641 = vmatprep.subr.bf16.mxu0 0
        %3642 = vmatpush1.bf16.msra.mxu0 0
        %3643 = vmatprep.subr.bf16.mxu0 0
        %3644 = vmatpush1.bf16.msra.mxu0 0
        %3645 = vmatprep.subr.bf16.mxu0 0
        %3646 = vmatpush1.bf16.msra.mxu0 0
        %3647 = vmatprep.subr.bf16.mxu0 0
        %3648 = vmatpush1.bf16.msra.mxu0 0
        %3649 = vmatprep.subr.bf16.mxu0 0
        %3650 = vmatpush1.bf16.msra.mxu0 0
        %3651 = vmatprep.subr.bf16.mxu0 0
        %3652 = vmatpush1.bf16.msra.mxu0 0
        %3653 = vmatprep.subr.bf16.mxu0 0
        %3654 = vmatpush1.bf16.msra.mxu0 0
        %3655 = vmatprep.subr.bf16.mxu0 0
        %3656 = vmatpush1.bf16.msra.mxu0 0
        %3657 = vmatprep.subr.bf16.mxu0 0
        %3658 = vmatpush1.bf16.msra.mxu0 0
        %3659 = vmatprep.subr.bf16.mxu0 0
        %3660 = vmatpush1.bf16.msra.mxu0 0
        %3661 = vmatprep.subr.bf16.mxu0 0
        %3662 = vmatpush1.bf16.msra.mxu0 0
        %3663 = vmatprep.subr.bf16.mxu0 0
        %3664 = vmatpush1.bf16.msra.mxu0 0
        %3665 = vmatprep.mubr.bf16.mxu0 0
        %3666 = vmatmul.mubr.bf16.gmra.mrb[0].mxu0 %v3631
        %v3667 = vpop.f32.mrb[0].mxu0
        %v3668 = vadd.f32 0.0, %v3667
        %v3669 = vpop.f32.mrb[0].mxu0
        %v3670 = vpop.f32.mrb[0].mxu0
        %v3671 = vpop.f32.mrb[0].mxu0
        %3672 = vdwg.mxu0
        %v3674 = vsel %vm2759, %v3623, 0
        %3676 = vmatprep.subr.bf16.mxu0 0
        %3677 = vmatpush1.bf16.msra.mxu0 %v3145
        %3678 = vmatprep.subr.bf16.mxu0 0
        %3679 = vmatpush1.bf16.msra.mxu0 0
        %3680 = vmatprep.subr.bf16.mxu0 0
        %3681 = vmatpush1.bf16.msra.mxu0 0
        %3682 = vmatprep.subr.bf16.mxu0 0
        %3683 = vmatpush1.bf16.msra.mxu0 0
        %3684 = vmatprep.subr.bf16.mxu0 0
        %3685 = vmatpush1.bf16.msra.mxu0 0
        %3686 = vmatprep.subr.bf16.mxu0 0
        %3687 = vmatpush1.bf16.msra.mxu0 0
        %3688 = vmatprep.subr.bf16.mxu0 0
        %3689 = vmatpush1.bf16.msra.mxu0 0
        %3690 = vmatprep.subr.bf16.mxu0 0
        %3691 = vmatpush1.bf16.msra.mxu0 0
        %3692 = vmatprep.subr.bf16.mxu0 0
        %3693 = vmatpush1.bf16.msra.mxu0 0
        %3694 = vmatprep.subr.bf16.mxu0 0
        %3695 = vmatpush1.bf16.msra.mxu0 0
        %3696 = vmatprep.subr.bf16.mxu0 0
        %3697 = vmatpush1.bf16.msra.mxu0 0
        %3698 = vmatprep.subr.bf16.mxu0 0
        %3699 = vmatpush1.bf16.msra.mxu0 0
        %3700 = vmatprep.subr.bf16.mxu0 0
        %3701 = vmatpush1.bf16.msra.mxu0 0
        %3702 = vmatprep.subr.bf16.mxu0 0
        %3703 = vmatpush1.bf16.msra.mxu0 0
        %3704 = vmatprep.subr.bf16.mxu0 0
        %3705 = vmatpush1.bf16.msra.mxu0 0
        %3706 = vmatprep.subr.bf16.mxu0 0
        %3707 = vmatpush1.bf16.msra.mxu0 0
        %3708 = vmatprep.mubr.bf16.mxu0 0
        %3709 = vmatmul.mubr.bf16.gmra.mrb[0].mxu0 %v3674
        %v3710 = vpop.f32.mrb[0].mxu0
        %v3711 = vadd.f32 0.0, %v3710
        %v3712 = vpop.f32.mrb[0].mxu0
        %v3713 = vpop.f32.mrb[0].mxu0
        %v3714 = vpop.f32.mrb[0].mxu0
        %3715 = vdwg.mxu0
        %v3717 = vsel %vm2759, %v3624, 0
        %3719 = vmatprep.subr.bf16.mxu0 0
        %3720 = vmatpush1.bf16.msra.mxu0 %v3149
        %3721 = vmatprep.subr.bf16.mxu0 0
        %3722 = vmatpush1.bf16.msra.mxu0 0
        %3723 = vmatprep.subr.bf16.mxu0 0
        %3724 = vmatpush1.bf16.msra.mxu0 0
        %3725 = vmatprep.subr.bf16.mxu0 0
        %3726 = vmatpush1.bf16.msra.mxu0 0
        %3727 = vmatprep.subr.bf16.mxu0 0
        %3728 = vmatpush1.bf16.msra.mxu0 0
        %3729 = vmatprep.subr.bf16.mxu0 0
        %3730 = vmatpush1.bf16.msra.mxu0 0
        %3731 = vmatprep.subr.bf16.mxu0 0
        %3732 = vmatpush1.bf16.msra.mxu0 0
        %3733 = vmatprep.subr.bf16.mxu0 0
        %3734 = vmatpush1.bf16.msra.mxu0 0
        %3735 = vmatprep.subr.bf16.mxu0 0
        %3736 = vmatpush1.bf16.msra.mxu0 0
        %3737 = vmatprep.subr.bf16.mxu0 0
        %3738 = vmatpush1.bf16.msra.mxu0 0
        %3739 = vmatprep.subr.bf16.mxu0 0
        %3740 = vmatpush1.bf16.msra.mxu0 0
        %3741 = vmatprep.subr.bf16.mxu0 0
        %3742 = vmatpush1.bf16.msra.mxu0 0
        %3743 = vmatprep.subr.bf16.mxu0 0
        %3744 = vmatpush1.bf16.msra.mxu0 0
        %3745 = vmatprep.subr.bf16.mxu0 0
        %3746 = vmatpush1.bf16.msra.mxu0 0
        %3747 = vmatprep.subr.bf16.mxu0 0
        %3748 = vmatpush1.bf16.msra.mxu0 0
        %3749 = vmatprep.subr.bf16.mxu0 0
        %3750 = vmatpush1.bf16.msra.mxu0 0
        %3751 = vmatprep.mubr.bf16.mxu0 0
        %3752 = vmatmul.mubr.bf16.gmra.mrb[0].mxu0 %v3717
        %v3753 = vpop.f32.mrb[0].mxu0
        %v3754 = vadd.f32 0.0, %v3753
        %v3755 = vpop.f32.mrb[0].mxu0
        %v3756 = vpop.f32.mrb[0].mxu0
        %v3757 = vpop.f32.mrb[0].mxu0
        %3758 = vdwg.mxu0
        %v3760 = vsel %vm2759, %v3625, 0
        %3762 = vmatprep.subr.bf16.mxu0 0
        %3763 = vmatpush1.bf16.msra.mxu0 %v3151
        %3764 = vmatprep.subr.bf16.mxu0 0
        %3765 = vmatpush1.bf16.msra.mxu0 0
        %3766 = vmatprep.subr.bf16.mxu0 0
        %3767 = vmatpush1.bf16.msra.mxu0 0
        %3768 = vmatprep.subr.bf16.mxu0 0
        %3769 = vmatpush1.bf16.msra.mxu0 0
        %3770 = vmatprep.subr.bf16.mxu0 0
        %3771 = vmatpush1.bf16.msra.mxu0 0
        %3772 = vmatprep.subr.bf16.mxu0 0
        %3773 = vmatpush1.bf16.msra.mxu0 0
        %3774 = vmatprep.subr.bf16.mxu0 0
        %3775 = vmatpush1.bf16.msra.mxu0 0
        %3776 = vmatprep.subr.bf16.mxu0 0
        %3777 = vmatpush1.bf16.msra.mxu0 0
        %3778 = vmatprep.subr.bf16.mxu0 0
        %3779 = vmatpush1.bf16.msra.mxu0 0
        %3780 = vmatprep.subr.bf16.mxu0 0
        %3781 = vmatpush1.bf16.msra.mxu0 0
        %3782 = vmatprep.subr.bf16.mxu0 0
        %3783 = vmatpush1.bf16.msra.mxu0 0
        %3784 = vmatprep.subr.bf16.mxu0 0
        %3785 = vmatpush1.bf16.msra.mxu0 0
        %3786 = vmatprep.subr.bf16.mxu0 0
        %3787 = vmatpush1.bf16.msra.mxu0 0
        %3788 = vmatprep.subr.bf16.mxu0 0
        %3789 = vmatpush1.bf16.msra.mxu0 0
        %3790 = vmatprep.subr.bf16.mxu0 0
        %3791 = vmatpush1.bf16.msra.mxu0 0
        %3792 = vmatprep.subr.bf16.mxu0 0
        %3793 = vmatpush1.bf16.msra.mxu0 0
        %3794 = vmatprep.mubr.bf16.mxu0 0
        %3795 = vmatmul.mubr.bf16.gmra.mrb[0].mxu0 %v3760
        %v3796 = vpop.f32.mrb[0].mxu0
        %v3797 = vadd.f32 0.0, %v3796
        %v3798 = vpop.f32.mrb[0].mxu0
        %v3799 = vpop.f32.mrb[0].mxu0
        %v3800 = vpop.f32.mrb[0].mxu0
        %3801 = vdwg.mxu0
        %v3803 = vsel %vm2759, %v3626, 0
        %3805 = vmatprep.subr.bf16.mxu0 0
        %3806 = vmatpush1.bf16.msra.mxu0 %v3155
        %3807 = vmatprep.subr.bf16.mxu0 0
        %3808 = vmatpush1.bf16.msra.mxu0 0
        %3809 = vmatprep.subr.bf16.mxu0 0
        %3810 = vmatpush1.bf16.msra.mxu0 0
        %3811 = vmatprep.subr.bf16.mxu0 0
        %3812 = vmatpush1.bf16.msra.mxu0 0
        %3813 = vmatprep.subr.bf16.mxu0 0
        %3814 = vmatpush1.bf16.msra.mxu0 0
        %3815 = vmatprep.subr.bf16.mxu0 0
        %3816 = vmatpush1.bf16.msra.mxu0 0
        %3817 = vmatprep.subr.bf16.mxu0 0
        %3818 = vmatpush1.bf16.msra.mxu0 0
        %3819 = vmatprep.subr.bf16.mxu0 0
        %3820 = vmatpush1.bf16.msra.mxu0 0
        %3821 = vmatprep.subr.bf16.mxu0 0
        %3822 = vmatpush1.bf16.msra.mxu0 0
        %3823 = vmatprep.subr.bf16.mxu0 0
        %3824 = vmatpush1.bf16.msra.mxu0 0
        %3825 = vmatprep.subr.bf16.mxu0 0
        %3826 = vmatpush1.bf16.msra.mxu0 0
        %3827 = vmatprep.subr.bf16.mxu0 0
        %3828 = vmatpush1.bf16.msra.mxu0 0
        %3829 = vmatprep.subr.bf16.mxu0 0
        %3830 = vmatpush1.bf16.msra.mxu0 0
        %3831 = vmatprep.subr.bf16.mxu0 0
        %3832 = vmatpush1.bf16.msra.mxu0 0
        %3833 = vmatprep.subr.bf16.mxu0 0
        %3834 = vmatpush1.bf16.msra.mxu0 0
        %3835 = vmatprep.subr.bf16.mxu0 0
        %3836 = vmatpush1.bf16.msra.mxu0 0
        %3837 = vmatprep.mubr.bf16.mxu0 0
        %3838 = vmatmul.mubr.bf16.gmra.mrb[0].mxu0 %v3803
        %v3839 = vpop.f32.mrb[0].mxu0
        %v3840 = vadd.f32 0.0, %v3839
        %v3841 = vpop.f32.mrb[0].mxu0
        %v3842 = vpop.f32.mrb[0].mxu0
        %v3843 = vpop.f32.mrb[0].mxu0
        %3844 = vdwg.mxu0
        %v3846 = vsel %vm2759, %v3627, 0
        %3848 = vmatprep.subr.bf16.mxu0 0
        %3849 = vmatpush1.bf16.msra.mxu0 %v3157
        %3850 = vmatprep.subr.bf16.mxu0 0
        %3851 = vmatpush1.bf16.msra.mxu0 0
        %3852 = vmatprep.subr.bf16.mxu0 0
        %3853 = vmatpush1.bf16.msra.mxu0 0
        %3854 = vmatprep.subr.bf16.mxu0 0
        %3855 = vmatpush1.bf16.msra.mxu0 0
        %3856 = vmatprep.subr.bf16.mxu0 0
        %3857 = vmatpush1.bf16.msra.mxu0 0
        %3858 = vmatprep.subr.bf16.mxu0 0
        %3859 = vmatpush1.bf16.msra.mxu0 0
        %3860 = vmatprep.subr.bf16.mxu0 0
        %3861 = vmatpush1.bf16.msra.mxu0 0
        %3862 = vmatprep.subr.bf16.mxu0 0
        %3863 = vmatpush1.bf16.msra.mxu0 0
        %3864 = vmatprep.subr.bf16.mxu0 0
        %3865 = vmatpush1.bf16.msra.mxu0 0
        %3866 = vmatprep.subr.bf16.mxu0 0
        %3867 = vmatpush1.bf16.msra.mxu0 0
        %3868 = vmatprep.subr.bf16.mxu0 0
        %3869 = vmatpush1.bf16.msra.mxu0 0
        %3870 = vmatprep.subr.bf16.mxu0 0
        %3871 = vmatpush1.bf16.msra.mxu0 0
        %3872 = vmatprep.subr.bf16.mxu0 0
        %3873 = vmatpush1.bf16.msra.mxu0 0
        %3874 = vmatprep.subr.bf16.mxu0 0
        %3875 = vmatpush1.bf16.msra.mxu0 0
        %3876 = vmatprep.subr.bf16.mxu0 0
        %3877 = vmatpush1.bf16.msra.mxu0 0
        %3878 = vmatprep.subr.bf16.mxu0 0
        %3879 = vmatpush1.bf16.msra.mxu0 0
        %3880 = vmatprep.mubr.bf16.mxu0 0
        %3881 = vmatmul.mubr.bf16.gmra.mrb[0].mxu0 %v3846
        %v3882 = vpop.f32.mrb[0].mxu0
        %v3883 = vadd.f32 0.0, %v3882
        %v3884 = vpop.f32.mrb[0].mxu0
        %v3885 = vpop.f32.mrb[0].mxu0
        %v3886 = vpop.f32.mrb[0].mxu0
        %3887 = vdwg.mxu0
        %v3889 = vsel %vm2759, %v3628, 0
        %3891 = vmatprep.subr.bf16.mxu0 0
        %3892 = vmatpush1.bf16.msra.mxu0 %v3161
        %3893 = vmatprep.subr.bf16.mxu0 0
        %3894 = vmatpush1.bf16.msra.mxu0 0
        %3895 = vmatprep.subr.bf16.mxu0 0
        %3896 = vmatpush1.bf16.msra.mxu0 0
        %3897 = vmatprep.subr.bf16.mxu0 0
        %3898 = vmatpush1.bf16.msra.mxu0 0
        %3899 = vmatprep.subr.bf16.mxu0 0
        %3900 = vmatpush1.bf16.msra.mxu0 0
        %3901 = vmatprep.subr.bf16.mxu0 0
        %3902 = vmatpush1.bf16.msra.mxu0 0
        %3903 = vmatprep.subr.bf16.mxu0 0
        %3904 = vmatpush1.bf16.msra.mxu0 0
        %3905 = vmatprep.subr.bf16.mxu0 0
        %3906 = vmatpush1.bf16.msra.mxu0 0
        %3907 = vmatprep.subr.bf16.mxu0 0
        %3908 = vmatpush1.bf16.msra.mxu0 0
        %3909 = vmatprep.subr.bf16.mxu0 0
        %3910 = vmatpush1.bf16.msra.mxu0 0
        %3911 = vmatprep.subr.bf16.mxu0 0
        %3912 = vmatpush1.bf16.msra.mxu0 0
        %3913 = vmatprep.subr.bf16.mxu0 0
        %3914 = vmatpush1.bf16.msra.mxu0 0
        %3915 = vmatprep.subr.bf16.mxu0 0
        %3916 = vmatpush1.bf16.msra.mxu0 0
        %3917 = vmatprep.subr.bf16.mxu0 0
        %3918 = vmatpush1.bf16.msra.mxu0 0
        %3919 = vmatprep.subr.bf16.mxu0 0
        %3920 = vmatpush1.bf16.msra.mxu0 0
        %3921 = vmatprep.subr.bf16.mxu0 0
        %3922 = vmatpush1.bf16.msra.mxu0 0
        %3923 = vmatprep.mubr.bf16.mxu0 0
        %3924 = vmatmul.mubr.bf16.gmra.mrb[0].mxu0 %v3889
        %v3925 = vpop.f32.mrb[0].mxu0
        %v3926 = vadd.f32 0.0, %v3925
        %v3927 = vpop.f32.mrb[0].mxu0
        %v3928 = vpop.f32.mrb[0].mxu0
        %v3929 = vpop.f32.mrb[0].mxu0
        %3930 = vdwg.mxu0
        %v3932 = vsel %vm2759, %v3629, 0
        %3934 = vmatprep.subr.bf16.mxu0 0
        %3935 = vmatpush1.bf16.msra.mxu0 %v3163
        %3936 = vmatprep.subr.bf16.mxu0 0
        %3937 = vmatpush1.bf16.msra.mxu0 0
        %3938 = vmatprep.subr.bf16.mxu0 0
        %3939 = vmatpush1.bf16.msra.mxu0 0
        %3940 = vmatprep.subr.bf16.mxu0 0
        %3941 = vmatpush1.bf16.msra.mxu0 0
        %3942 = vmatprep.subr.bf16.mxu0 0
        %3943 = vmatpush1.bf16.msra.mxu0 0
        %3944 = vmatprep.subr.bf16.mxu0 0
        %3945 = vmatpush1.bf16.msra.mxu0 0
        %3946 = vmatprep.subr.bf16.mxu0 0
        %3947 = vmatpush1.bf16.msra.mxu0 0
        %3948 = vmatprep.subr.bf16.mxu0 0
        %3949 = vmatpush1.bf16.msra.mxu0 0
        %3950 = vmatprep.subr.bf16.mxu0 0
        %3951 = vmatpush1.bf16.msra.mxu0 0
        %3952 = vmatprep.subr.bf16.mxu0 0
        %3953 = vmatpush1.bf16.msra.mxu0 0
        %3954 = vmatprep.subr.bf16.mxu0 0
        %3955 = vmatpush1.bf16.msra.mxu0 0
        %3956 = vmatprep.subr.bf16.mxu0 0
        %3957 = vmatpush1.bf16.msra.mxu0 0
        %3958 = vmatprep.subr.bf16.mxu0 0
        %3959 = vmatpush1.bf16.msra.mxu0 0
        %3960 = vmatprep.subr.bf16.mxu0 0
        %3961 = vmatpush1.bf16.msra.mxu0 0
        %3962 = vmatprep.subr.bf16.mxu0 0
        %3963 = vmatpush1.bf16.msra.mxu0 0
        %3964 = vmatprep.subr.bf16.mxu0 0
        %3965 = vmatpush1.bf16.msra.mxu0 0
        %3966 = vmatprep.mubr.bf16.mxu0 0
        %3967 = vmatmul.mubr.bf16.gmra.mrb[0].mxu0 %v3932
        %v3968 = vpop.f32.mrb[0].mxu0
        %v3969 = vadd.f32 0.0, %v3968
        %v3970 = vpop.f32.mrb[0].mxu0
        %v3971 = vpop.f32.mrb[0].mxu0
        %v3972 = vpop.f32.mrb[0].mxu0
        %3973 = vdwg.mxu0
        %v3974 = vpack.c.bf16 %v3668, %v3668
        %v3975 = vpack.c.bf16 %v3711, %v3711
        %v3976 = vpack.c.bf16 %v3754, %v3754
        %v3977 = vpack.c.bf16 %v3797, %v3797
        %v3978 = vpack.c.bf16 %v3840, %v3840
        %v3979 = vpack.c.bf16 %v3883, %v3883
        %v3980 = vpack.c.bf16 %v3926, %v3926
        %v3981 = vpack.c.bf16 %v3969, %v3969
        %v3984 = vunpack.c.l.b16 %v3974
        %v3985 = vunpack.c.l.b16 %v3975
        %v3986 = vpack.c.b16 %v3985, %v3984
        %v3989 = vunpack.c.l.b16 %v3976
        %v3990 = vunpack.c.l.b16 %v3977
        %v3991 = vpack.c.b16 %v3990, %v3989
        %3992 = vrot.lane.b32.xlu0 %v3991, 8
        %v3993 = vpop.permute.xlu0 %3992
        %v3996 = vunpack.c.l.b16 %v3978
        %v3997 = vunpack.c.l.b16 %v3979
        %v3998 = vpack.c.b16 %v3997, %v3996
        %3999 = vrot.lane.b32.xlu0 %v3998, 16
        %v4000 = vpop.permute.xlu0 %3999
        %v4003 = vunpack.c.l.b16 %v3980
        %v4004 = vunpack.c.l.b16 %v3981
        %v4005 = vpack.c.b16 %v4004, %v4003
        %4006 = vrot.lane.b32.xlu0 %v4005, 24
        %v4007 = vpop.permute.xlu0 %4006
        %v4010 = vsel %vm1888, %v3986, %v3993
        %v4012 = vsel %vm2759, %v4010, %v4000
        %v4014 = vsel %vm2762, %v4012, %v4007
        %v4015 = vld [vmem:[%s1370] sm:$0xf]
        %v4016 = vld [vmem:[%s1370 + $0x4] sm:$0xf]
        %v4017 = vld [vmem:[%s1370 + $0x8] sm:$0xf]
        %v4018 = vld [vmem:[%s1370 + $0xc] sm:$0xf]
        %v4019 = vld [vmem:[%s1574] sm:$0x1]
        %v4021 = vlaneseq
        %v4022 = vshrl.u32 %v4021, 7
        %v4023 = vsub.s32 0, %v4022
        %v4024 = vrot.slane %v4019, %v4023
        %v4030 = vunpack.c.l.b16 %v4015
        %v4031 = vunpack.c.l.b16 %v4016
        %v4032 = vunpack.c.l.b16 %v4017
        %v4033 = vunpack.c.l.b16 %v4018
        %v4034 = vpack.c.b16 %v4031, %v4030
        %v4035 = vpack.c.b16 %v4033, %v4032
        %v4038 = vsel %vm1649, %v4014, 0
        %4040 = vmatprep.subr.bf16.mxu0 0
        %4041 = vmatpush1.bf16.msra.mxu0 %v4034
        %4042 = vmatprep.subr.bf16.mxu0 0
        %4043 = vmatpush1.bf16.msra.mxu0 %v4035
        %4044 = vmatprep.subr.bf16.mxu0 0
        %4045 = vmatpush1.bf16.msra.mxu0 0
        %4046 = vmatprep.subr.bf16.mxu0 0
        %4047 = vmatpush1.bf16.msra.mxu0 0
        %4048 = vmatprep.subr.bf16.mxu0 0
        %4049 = vmatpush1.bf16.msra.mxu0 0
        %4050 = vmatprep.subr.bf16.mxu0 0
        %4051 = vmatpush1.bf16.msra.mxu0 0
        %4052 = vmatprep.subr.bf16.mxu0 0
        %4053 = vmatpush1.bf16.msra.mxu0 0
        %4054 = vmatprep.subr.bf16.mxu0 0
        %4055 = vmatpush1.bf16.msra.mxu0 0
        %4056 = vmatprep.subr.bf16.mxu0 0
        %4057 = vmatpush1.bf16.msra.mxu0 0
        %4058 = vmatprep.subr.bf16.mxu0 0
        %4059 = vmatpush1.bf16.msra.mxu0 0
        %4060 = vmatprep.subr.bf16.mxu0 0
        %4061 = vmatpush1.bf16.msra.mxu0 0
        %4062 = vmatprep.subr.bf16.mxu0 0
        %4063 = vmatpush1.bf16.msra.mxu0 0
        %4064 = vmatprep.subr.bf16.mxu0 0
        %4065 = vmatpush1.bf16.msra.mxu0 0
        %4066 = vmatprep.subr.bf16.mxu0 0
        %4067 = vmatpush1.bf16.msra.mxu0 0
        %4068 = vmatprep.subr.bf16.mxu0 0
        %4069 = vmatpush1.bf16.msra.mxu0 0
        %4070 = vmatprep.subr.bf16.mxu0 0
        %4071 = vmatpush1.bf16.msra.mxu0 0
        %4072 = vmatprep.mubr.bf16.mxu0 0
        %4073 = vmatmul.mubr.bf16.gmra.mrb[0].mxu0 %v4038
        %v4074 = vpop.f32.mrb[0].mxu0
        %v4075 = vadd.f32 %v4024, %v4074
        %v4076 = vpop.f32.mrb[0].mxu0
        %v4077 = vpop.f32.mrb[0].mxu0
        %v4078 = vadd.f32 %v4024, %v4077
        %v4079 = vpop.f32.mrb[0].mxu0
        %4080 = vdwg.mxu0
        %v4081 = vadd.f32 %v2880, %v4075
        %v4082 = vadd.f32 %v2881, %v4078
        %v4083 = vsel %vm1649, %v4081, 0.0
        %4084 = vadd.xlane.f32.xlu0 %v4083
        %v4085 = vpop.xlane.xlu0 %4084
        %v4086 = vsel %vm1649, %v4082, 0.0
        %4087 = vadd.xlane.f32.xlu0 %v4086
        %v4088 = vpop.xlane.xlu0 %4087
        %v4089 = vmul.f32 %v4085, %v2839
        %v4090 = vmul.f32 %v4088, %v2839
        %v4091 = vmul.f32 %v4081, %v4081
        %v4092 = vmul.f32 %v4082, %v4082
        %v4093 = vsel %vm1649, %v4091, 0.0
        %4094 = vadd.xlane.f32.xlu0 %v4093
        %v4095 = vpop.xlane.xlu0 %4094
        %v4096 = vsel %vm1649, %v4092, 0.0
        %4097 = vadd.xlane.f32.xlu0 %v4096
        %v4098 = vpop.xlane.xlu0 %4097
        %v4099 = vmul.f32 %v4095, %v2839
        %v4100 = vmul.f32 %v4098, %v2839
        %v4101 = vsub.f32 %v4081, %v4089
        %v4102 = vsub.f32 %v4082, %v4090
        %v4103 = vmul.f32 %v4089, %v4089
        %v4104 = vmul.f32 %v4090, %v4090
        %v4105 = vsub.f32 %v4099, %v4103
        %v4106 = vsub.f32 %v4100, %v4104
        %v4107 = vadd.f32 %v4105, 1e-05
        %v4108 = vadd.f32 %v4106, 1e-05
        %v4109 = vrsqrt.pop %v4107
        %v4110 = vrsqrt.pop %v4108
        %v4111 = vmul.f32 %v4101, %v4109
        %v4112 = vmul.f32 %v4102, %v4110
        %v4113 = vld [vmem:[%s1594] sm:$0x1]
        %v4115 = vlaneseq
        %v4116 = vshrl.u32 %v4115, 7
        %v4117 = vsub.s32 0, %v4116
        %v4118 = vrot.slane %v4113, %v4117
        %v4120 = vmul.f32 %v4111, %v4118
        %v4121 = vmul.f32 %v4112, %v4118
        %v4122 = vld [vmem:[%s1597] sm:$0x1]
        %v4124 = vlaneseq
        %v4125 = vshrl.u32 %v4124, 7
        %v4126 = vsub.s32 0, %v4125
        %v4127 = vrot.slane %v4122, %v4126
        %v4129 = vadd.f32 %v4120, %v4127
        %v4130 = vadd.f32 %v4121, %v4127
        %v4131 = vpack.c.bf16 %v4130, %v4129
        %v4132 = vld [vmem:[%s1379] sm:$0xf]
        %v4133 = vld [vmem:[%s1379 + $0x4] sm:$0xf]
        %v4134 = vld [vmem:[%s1379 + $0x8] sm:$0xf]
        %v4135 = vld [vmem:[%s1379 + $0xc] sm:$0xf]
        %v4136 = vld [vmem:[%s1577] sm:$0x1]
        %v4138 = vlaneseq
        %v4139 = vshrl.u32 %v4138, 7
        %v4140 = vsub.s32 0, %v4139
        %v4141 = vrot.slane %v4136, %v4140
        %v4147 = vunpack.c.l.b16 %v4132
        %v4148 = vunpack.c.l.b16 %v4133
        %v4149 = vunpack.c.l.b16 %v4134
        %v4150 = vunpack.c.l.b16 %v4135
        %v4151 = vpack.c.b16 %v4148, %v4147
        %v4152 = vpack.c.b16 %v4150, %v4149
        %v4156 = vsel %vm1649, %v4131, 0
        %4158 = vmatprep.subr.bf16.mxu0 0
        %4159 = vmatpush1.bf16.msra.mxu0 %v4151
        %4160 = vmatprep.subr.bf16.mxu0 0
        %4161 = vmatpush1.bf16.msra.mxu0 %v4152
        %4162 = vmatprep.subr.bf16.mxu0 0
        %4163 = vmatpush1.bf16.msra.mxu0 0
        %4164 = vmatprep.subr.bf16.mxu0 0
        %4165 = vmatpush1.bf16.msra.mxu0 0
        %4166 = vmatprep.subr.bf16.mxu0 0
        %4167 = vmatpush1.bf16.msra.mxu0 0
        %4168 = vmatprep.subr.bf16.mxu0 0
        %4169 = vmatpush1.bf16.msra.mxu0 0
        %4170 = vmatprep.subr.bf16.mxu0 0
        %4171 = vmatpush1.bf16.msra.mxu0 0
        %4172 = vmatprep.subr.bf16.mxu0 0
        %4173 = vmatpush1.bf16.msra.mxu0 0
        %4174 = vmatprep.subr.bf16.mxu0 0
        %4175 = vmatpush1.bf16.msra.mxu0 0
        %4176 = vmatprep.subr.bf16.mxu0 0
        %4177 = vmatpush1.bf16.msra.mxu0 0
        %4178 = vmatprep.subr.bf16.mxu0 0
        %4179 = vmatpush1.bf16.msra.mxu0 0
        %4180 = vmatprep.subr.bf16.mxu0 0
        %4181 = vmatpush1.bf16.msra.mxu0 0
        %4182 = vmatprep.subr.bf16.mxu0 0
        %4183 = vmatpush1.bf16.msra.mxu0 0
        %4184 = vmatprep.subr.bf16.mxu0 0
        %4185 = vmatpush1.bf16.msra.mxu0 0
        %4186 = vmatprep.subr.bf16.mxu0 0
        %4187 = vmatpush1.bf16.msra.mxu0 0
        %4188 = vmatprep.subr.bf16.mxu0 0
        %4189 = vmatpush1.bf16.msra.mxu0 0
        %4190 = vmatprep.mubr.bf16.mxu0 0
        %4191 = vmatmul.mubr.bf16.gmra.mrb[0].mxu0 %v4156
        %v4192 = vpop.f32.mrb[0].mxu0
        %v4193 = vadd.f32 %v4141, %v4192
        %v4194 = vpop.f32.mrb[0].mxu0
        %v4195 = vpop.f32.mrb[0].mxu0
        %v4196 = vadd.f32 %v4141, %v4195
        %v4197 = vpop.f32.mrb[0].mxu0
        %4198 = vdwg.mxu0
        %v4199 = vmax.f32 %v4193, 0.0
        %v4200 = vmax.f32 %v4196, 0.0
        %v4201 = vpack.c.bf16 %v4200, %v4199
        %v4202 = vld [vmem:[%s1582] sm:$0xf]
        %v4203 = vld [vmem:[%s1582 + $0x4] sm:$0xf]
        %v4204 = vld [vmem:[%s1582 + $0x8] sm:$0xf]
        %v4205 = vld [vmem:[%s1582 + $0xc] sm:$0xf]
        %v4206 = vld [vmem:[%s1582 + $0x10] sm:$0xf]
        %v4207 = vld [vmem:[%s1582 + $0x14] sm:$0xf]
        %v4208 = vld [vmem:[%s1582 + $0x18] sm:$0xf]
        %v4209 = vld [vmem:[%s1582 + $0x1c] sm:$0xf]
        %v4210 = vld [vmem:[%s1585] sm:$0x1]
        %v4212 = vlaneseq
        %v4213 = vshrl.u32 %v4212, 7
        %v4214 = vsub.s32 0, %v4213
        %v4215 = vrot.slane %v4210, %v4214
        %v4225 = vunpack.c.l.b16 %v4202
        %v4226 = vunpack.c.l.b16 %v4203
        %v4227 = vunpack.c.l.b16 %v4204
        %v4228 = vunpack.c.l.b16 %v4205
        %v4229 = vunpack.c.l.b16 %v4206
        %v4230 = vunpack.c.l.b16 %v4207
        %v4231 = vunpack.c.l.b16 %v4208
        %v4232 = vunpack.c.l.b16 %v4209
        %v4233 = vpack.c.b16 %v4226, %v4225
        %v4234 = vpack.c.b16 %v4228, %v4227
        %v4235 = vpack.c.b16 %v4230, %v4229
        %v4236 = vpack.c.b16 %v4232, %v4231
        %vm4241 = vcmask 523264
        %v4243 = vsel %vm4241, %v4201, 0
        %4245 = vmatprep.subr.bf16.mxu0 0
        %4246 = vmatpush1.bf16.msra.mxu0 %v4233
        %4247 = vmatprep.subr.bf16.mxu0 0
        %4248 = vmatpush1.bf16.msra.mxu0 %v4234
        %4249 = vmatprep.subr.bf16.mxu0 0
        %4250 = vmatpush1.bf16.msra.mxu0 %v4235
        %4251 = vmatprep.subr.bf16.mxu0 0
        %4252 = vmatpush1.bf16.msra.mxu0 %v4236
        %4253 = vmatprep.subr.bf16.mxu0 0
        %4254 = vmatpush1.bf16.msra.mxu0 0
        %4255 = vmatprep.subr.bf16.mxu0 0
        %4256 = vmatpush1.bf16.msra.mxu0 0
        %4257 = vmatprep.subr.bf16.mxu0 0
        %4258 = vmatpush1.bf16.msra.mxu0 0
        %4259 = vmatprep.subr.bf16.mxu0 0
        %4260 = vmatpush1.bf16.msra.mxu0 0
        %4261 = vmatprep.subr.bf16.mxu0 0
        %4262 = vmatpush1.bf16.msra.mxu0 0
        %4263 = vmatprep.subr.bf16.mxu0 0
        %4264 = vmatpush1.bf16.msra.mxu0 0
        %4265 = vmatprep.subr.bf16.mxu0 0
        %4266 = vmatpush1.bf16.msra.mxu0 0
        %4267 = vmatprep.subr.bf16.mxu0 0
        %4268 = vmatpush1.bf16.msra.mxu0 0
        %4269 = vmatprep.subr.bf16.mxu0 0
        %4270 = vmatpush1.bf16.msra.mxu0 0
        %4271 = vmatprep.subr.bf16.mxu0 0
        %4272 = vmatpush1.bf16.msra.mxu0 0
        %4273 = vmatprep.subr.bf16.mxu0 0
        %4274 = vmatpush1.bf16.msra.mxu0 0
        %4275 = vmatprep.subr.bf16.mxu0 0
        %4276 = vmatpush1.bf16.msra.mxu0 0
        %4277 = vmatprep.mubr.bf16.mxu0 0
        %4278 = vmatmul.mubr.bf16.gmra.mrb[0].mxu0 %v4243
        %v4279 = vpop.f32.mrb[0].mxu0
        %v4280 = vadd.f32 %v4215, %v4279
        %v4281 = vpop.f32.mrb[0].mxu0
        %v4282 = vpop.f32.mrb[0].mxu0
        %v4283 = vadd.f32 %v4215, %v4282
        %v4284 = vpop.f32.mrb[0].mxu0
        %4285 = vdwg.mxu0
        %v4286 = vadd.f32 %v4129, %v4280
        %v4287 = vadd.f32 %v4130, %v4283
        %v4288 = vsel %vm1649, %v4286, 0.0
        %4289 = vadd.xlane.f32.xlu0 %v4288
        %v4290 = vpop.xlane.xlu0 %4289
        %v4291 = vsel %vm1649, %v4287, 0.0
        %4292 = vadd.xlane.f32.xlu0 %v4291
        %v4293 = vpop.xlane.xlu0 %4292
        %v4294 = vmul.f32 %v4290, %v2839
        %v4295 = vmul.f32 %v4293, %v2839
        %v4296 = vmul.f32 %v4286, %v4286
        %v4297 = vmul.f32 %v4287, %v4287
        %v4298 = vsel %vm1649, %v4296, 0.0
        %4299 = vadd.xlane.f32.xlu0 %v4298
        %v4300 = vpop.xlane.xlu0 %4299
        %v4301 = vsel %vm1649, %v4297, 0.0
        %4302 = vadd.xlane.f32.xlu0 %v4301
        %v4303 = vpop.xlane.xlu0 %4302
        %v4304 = vmul.f32 %v4300, %v2839
        %v4305 = vmul.f32 %v4303, %v2839
        %v4306 = vsub.f32 %v4286, %v4294
        %v4307 = vsub.f32 %v4287, %v4295
        %v4308 = vmul.f32 %v4294, %v4294
        %v4309 = vmul.f32 %v4295, %v4295
        %v4310 = vsub.f32 %v4304, %v4308
        %v4311 = vsub.f32 %v4305, %v4309
        %v4312 = vadd.f32 %v4310, 1e-05
        %v4313 = vadd.f32 %v4311, 1e-05
        %v4314 = vrsqrt.pop %v4312
        %v4315 = vrsqrt.pop %v4313
        %v4316 = vmul.f32 %v4306, %v4314
        %v4317 = vmul.f32 %v4307, %v4315
        %v4318 = vld [vmem:[%s1600] sm:$0x1]
        %v4320 = vlaneseq
        %v4321 = vshrl.u32 %v4320, 7
        %v4322 = vsub.s32 0, %v4321
        %v4323 = vrot.slane %v4318, %v4322
        %v4325 = vmul.f32 %v4316, %v4323
        %v4326 = vmul.f32 %v4317, %v4323
        %v4327 = vld [vmem:[%s1603] sm:$0x1]
        %v4329 = vlaneseq
        %v4330 = vshrl.u32 %v4329, 7
        %v4331 = vsub.s32 0, %v4330
        %v4332 = vrot.slane %v4327, %v4331
        %v4334 = vadd.f32 %v4325, %v4332
        %v4335 = vadd.f32 %v4326, %v4332
        %4336 = vst.msk [vmem:[#allocation2] sm:$0xff] %vm1649, %v4334
        %4337 = vst.msk [vmem:[#allocation2 + $0x8] sm:$0xff] %vm1649, %v4335
        %p4338 = scmp.eq.s32.totalorder %s96, 1
        // Predicated region
        $region201: #{tpu_custom_call.1} parent=135 // pred_check
          %p4339 = pneg %p4338
        $region202: #{tpu_custom_call.1} parent=135 // pred_check_branch
          %4341 = sbr.rel (%p4339) target = $region204
        $region203: #{tpu_custom_call.1} parent=135 // pred_region
          %4342 = vst.msk [vmem:[#allocation27] sm:$0xff] %vm1649, %v4334
          %4343 = vst.msk [vmem:[#allocation27 + $0x8] sm:$0xff] %vm1649, %v4335
        $region204: #{tpu_custom_call.1} parent=135 // pred_fallthru
          _
        // Predicated region
        $region205: #{tpu_custom_call.1} parent=135 // pred_check
          %p4344 = pneg %p875
        $region206: #{tpu_custom_call.1} parent=135 // pred_check_branch
          %4346 = sbr.rel (%p4344) target = $region208
        $region207: #{tpu_custom_call.1} parent=135 // pred_region
          %s4347 = smul.u32 2, %s95
          %s4349 = ssub.s32 256, 256
          %4350 = vsyncadd [#allocation5], %s4349
          %s4351 = smul.addr %s4347, 128
          %s4352 = scalar_lea.hbm %s59, %s4351
          %s4353 = sshll.u32 [#allocation27], 4
          %s4354 = int_to_ptr.vmem [resolvable:$true] %s4353
          %4359 = dma.vmem_to_hbm [thread:$0]  %s4354, 256, %s4352, [#allocation5], 128, 128, 8
        $region208: #{tpu_custom_call.1} parent=135 // pred_fallthru
          _
        // Predicated region
        $region209: #{tpu_custom_call.1} parent=135 // pred_check
          %p4360 = pneg %p875
        $region210: #{tpu_custom_call.1} parent=135 // pred_check_branch
          %4362 = sbr.rel (%p4360) target = $region212
        $region211: #{tpu_custom_call.1} parent=135 // pred_region
          %4363 = dma.done [#allocation5], 256
        $region212: #{tpu_custom_call.1} parent=135 // pred_fallthru
          _
      $region136: #{tpu_custom_call.1} parent=5 // pred_fallthru
        _
      %p4364 = scmp.le.s32.totalorder 2, %s86
      // Predicated region
      $region213: #{tpu_custom_call.1} parent=5 // pred_check
        %p4365 = pneg %p4364
      $region214: #{tpu_custom_call.1} parent=5 // pred_check_branch
        %4367 = sbr.rel (%p4365) target = $region216
      $region215: #{tpu_custom_call.1} parent=5 // pred_region
        %s4368 = ssub.s32 %s86, 2
      $region216: #{tpu_custom_call.1} parent=5 // pred_fallthru
        _
    $region6: #{tpu_custom_call.1} parent=1 // loop_footer
      %s90 = sadd.s32 1, %s86
    $region7: #{tpu_custom_call.1} parent=1 // loop_footer_branch
      %85 = sbr.rel target = $region3
    $region8: #{tpu_custom_call.1} parent=1 // loop_exit
      _
    %4369 = vsyncpa [#allocation4], 1
    %s4370 = scalar_lea.sflag [#allocation4], 1
    %4371 = vsyncpa %s4370, 1
    %4372 = vsyncpa [#allocation7], 1
    %4373 = vsyncpa [#allocation10], 1
    %s4374 = scalar_lea.sflag [#allocation10], 1
    %4375 = vsyncpa %s4374, 1
    %4376 = vsyncpa [#allocation13], 1
    %s4377 = scalar_lea.sflag [#allocation13], 1
    %4378 = vsyncpa %s4377, 1
    %4379 = vsyncpa [#allocation16], 1
    %s4380 = scalar_lea.sflag [#allocation16], 1
    %4381 = vsyncpa %s4380, 1
    %4382 = vsyncpa [#allocation19], 1
    %s4383 = scalar_lea.sflag [#allocation19], 1
    %4384 = vsyncpa %s4383, 1
    %4385 = vsyncpa [#allocation22], 1
    %s4386 = scalar_lea.sflag [#allocation22], 1
    %4387 = vsyncpa %s4386, 1
    %4388 = vsyncpa [#allocation25], 1
    %s4389 = scalar_lea.sflag [#allocation25], 1
    %4390 = vsyncpa %s4389, 1
    %4391 = vsyncpa [#allocation5], 1
    %s4392 = scalar_lea.sflag [#allocation5], 1
    %4393 = vsyncpa %s4392, 1

</llo_original>
